<compile_context>
chip_gen: v6e
topology: v6e:2x2x1
jax: 0.10.0
libtpu: 0.0.40
codegen_flags: <defaults>
</compile_context>

<pallas_src>
import functools

import jax
import jax.numpy as jnp
from jax import lax
from jax.experimental import pallas as pl
from jax.experimental.pallas import tpu as pltpu


# --------------------------------------------------------------------------
# 3x3 "same" conv + bias + ReLU, stored directly into `dst`.
#   src   : (out_rows + 2, W + 2, cin) f32 value, zero-halo already in place
#   w_ref : (3, 3*cin, Cout) ref; leading dim is dy, rows within a group are
#           ordered (dx, cin)
#   b_ref : (1, Cout) ref
#   dst   : ref view of shape (out_rows, W, Cout)
# --------------------------------------------------------------------------
def _conv3x3_relu_store(src, w_ref, b_ref, dst, *, out_rows, W, cin,
                        compute_dtype, out_dtype):
    f32 = jnp.float32
    acc = None
    if cin >= 128:
        # Lane-aligned channels: 9 accumulated MXU matmuls (K = cin), no
        # lane-axis concat / cross-lane shuffles.
        for dy in range(3):
            w_dy = w_ref[dy]
            for dx in range(3):
                tap = src[dy:dy + out_rows, dx:dx + W, :].astype(compute_dtype)
                w_tap = w_dy[dx * cin:(dx + 1) * cin, :].astype(compute_dtype)
                part = lax.dot_general(
                    tap, w_tap,
                    dimension_numbers=(((2,), (0,)), ((), ())),
                    preferred_element_type=f32)
                acc = part if acc is None else acc + part
    else:
        # Small channels: concat only the 3 dx-shifted slabs per dy group
        # (K = 3*cin) and accumulate 3 matmuls -- 3x smaller temporaries than
        # a full 9*cin im2col while keeping the contraction deep enough.
        for dy in range(3):
            slab = src[dy:dy + out_rows]
            cols = jnp.concatenate(
                [slab[:, dx:dx + W, :] for dx in range(3)],
                axis=-1).astype(compute_dtype)
            w_dy = w_ref[dy].astype(compute_dtype)
            part = lax.dot_general(
                cols, w_dy,
                dimension_numbers=(((2,), (0,)), ((), ())),
                preferred_element_type=f32)
            acc = part if acc is None else acc + part
    acc = acc + b_ref[0].astype(f32)
    dst[...] = jnp.maximum(acc, 0.0).astype(out_dtype)


# --------------------------------------------------------------------------
# Fused kernel: (conv3x3 + bias + ReLU) x 2 on one H-strip of one batch image.
#   x_main_ref : (1, P, W, Cin)   strip rows
#   x_top_ref  : (1, 2, W, Cin)   2 rows above the strip (garbage when s == 0)
#   x_bot_ref  : (1, 2, W, Cin)   2 rows below the strip (garbage when s == last)
#   w*_ref     : (3, 3*C, Cout), b*_ref : (1, Cout)
#   o_ref      : (1, P, W, Cout)
#   xpad_ref   : (P + 4, W + 2, Cin)   VMEM scratch: strip + 2-row/1-col halo
#   h1pad_ref  : (P + 2, W + 2, Cout)  VMEM scratch: conv1 out + 1-row/1-col halo
# --------------------------------------------------------------------------
def _conv_block_kernel(x_main_ref, x_top_ref, x_bot_ref,
                       w1_ref, b1_ref, w2_ref, b2_ref,
                       o_ref, xpad_ref, h1pad_ref,
                       *, P, W, Cin, Cout, ns, compute_dtype):
    s = pl.program_id(1)
    f32 = jnp.float32

    # Zero only the 1-wide left/right halo columns (NOT the full scratch).
    # Re-done every step (2 thin columns, negligible) so results stay correct
    # when the 'parallel' grid is split across TensorCores (per-core scratch).
    xpad_ref[:, 0:1, :] = jnp.zeros((P + 4, 1, Cin), f32)
    xpad_ref[:, W + 1:W + 2, :] = jnp.zeros((P + 4, 1, Cin), f32)
    h1pad_ref[:, 0:1, :] = jnp.zeros((P + 2, 1, Cout), f32)
    h1pad_ref[:, W + 1:W + 2, :] = jnp.zeros((P + 2, 1, Cout), f32)

    # Input strip interior.
    xpad_ref[2:P + 2, 1:W + 1, :] = x_main_ref[0].astype(f32)

    # 2-row top halo: zeros at the image top, neighbor rows otherwise.
    @pl.when(s == 0)
    def _():
        xpad_ref[0:2, 1:W + 1, :] = jnp.zeros((2, W, Cin), f32)

    @pl.when(s > 0)
    def _():
        xpad_ref[0:2, 1:W + 1, :] = x_top_ref[0].astype(f32)

    # 2-row bottom halo: zeros at the image bottom, neighbor rows otherwise.
    @pl.when(s == ns - 1)
    def _():
        xpad_ref[P + 2:P + 4, 1:W + 1, :] = jnp.zeros((2, W, Cin), f32)

    @pl.when(s < ns - 1)
    def _():
        xpad_ref[P + 2:P + 4, 1:W + 1, :] = x_bot_ref[0].astype(f32)

    # conv1 + ReLU: (P+2) rows (strip + 1-row halo each side) written straight
    # into h1pad's interior columns; the intermediate never touches HBM.
    _conv3x3_relu_store(xpad_ref[...], w1_ref, b1_ref,
                        h1pad_ref.at[0:P + 2, 1:W + 1, :],
                        out_rows=P + 2, W=W, cin=Cin,
                        compute_dtype=compute_dtype, out_dtype=f32)

    # conv1 rows outside the image are zero padding for conv2.
    @pl.when(s == 0)
    def _():
        h1pad_ref[0:1, 1:W + 1, :] = jnp.zeros((1, W, Cout), f32)

    @pl.when(s == ns - 1)
    def _():
        h1pad_ref[P + 1:P + 2, 1:W + 1, :] = jnp.zeros((1, W, Cout), f32)

    # conv2 + ReLU straight into the output block.
    _conv3x3_relu_store(h1pad_ref[...], w2_ref, b2_ref, o_ref.at[0],
                        out_rows=P, W=W, cin=Cout,
                        compute_dtype=compute_dtype, out_dtype=o_ref.dtype)


# --------------------------------------------------------------------------
# Per-generation VMEM budgeting & strip selection.
# --------------------------------------------------------------------------
def _vmem_capacity_bytes():
    try:
        info = pltpu.get_tpu_info()
        cap = int(getattr(info, "vmem_capacity_bytes", 0))
        if cap > 0:
            return cap
    except Exception:
        pass
    return 64 * 1024 * 1024  # conservative fallback (v7x-sized VMEM)


def _vmem_estimate_bytes(P, W, Cin, Cout):
    """Rough per-step VMEM footprint (f32) for strip height P."""
    blocks = 2 * P * W * (Cin + Cout) * 4                 # in/out strips, double-buffered
    halos = 2 * 2 * (2 * W * Cin) * 4                     # x_top + x_bot, double-buffered
    scratch = ((P + 4) * (W + 2) * Cin + (P + 2) * (W + 2) * Cout) * 4
    t1 = (P + 2) * W * (3 * Cin + Cout) * 4               # conv1 dy-group slab + acc
    t2 = P * W * (3 * Cout + Cout) * 4                    # conv2 dy-group slab + acc
    temps = 2 * max(t1, t2)                               # 2x slack for compiler temps
    weights = 2 * (9 * Cin * Cout + 9 * Cout * Cout + 2 * Cout) * 4
    return blocks + halos + scratch + temps + weights


def _choose_strip_h(N, H, W, Cin, Cout, budget_bytes):
    # Candidates: the whole image, or even divisors of H (the halo BlockSpecs
    # index the input at 2-row granularity, so strips must be even).
    cands = [d for d in range(H, 0, -1) if H % d == 0 and (d == H or d % 2 == 0)]
    fit = [d for d in cands if _vmem_estimate_bytes(d, W, Cin, Cout) <= budget_bytes]
    pool = fit if fit else cands[-1:]
    strip_h = pool[0]
    # Guarantee >= 2 grid steps so both v7x TensorCores get work at N == 1.
    if N < 2 and strip_h == H and len(pool) > 1:
        strip_h = pool[1]
    return strip_h


# --------------------------------------------------------------------------
# NHWC entry point: no layout transposes, no HBM-side padding, one kernel.
# --------------------------------------------------------------------------
def conv_block_forward_nhwc(x_nhwc, params, *, strip_h=None, use_bf16=False):
    """params['w1']/['w2'] must be (3, 3, Cin, Cout) HWIO weights.

    Use `params_from_torch` to convert PyTorch Conv2d (Cout, Cin, 3, 3) weights.
    NOTE: for best MXU/lane utilization, Cin/Cout should be multiples of 128 on
    real workloads (the smoke test below uses tiny, layout-hostile channels).
    """
    N, H, W, Cin = x_nhwc.shape
    w1, b1, w2, b2 = params["w1"], params["b1"], params["w2"], params["b2"]
    assert w1.shape[:3] == (3, 3, Cin), "w1 must be (3, 3, Cin, Cout) HWIO"
    Cout = w1.shape[-1]
    assert w2.shape == (3, 3, Cout, Cout), "w2 must be (3, 3, Cout, Cout) HWIO"

    # Per-generation VMEM budget (~48 MiB on v7x, ~96 MiB on v5e/v6e).
    vmem_limit = min(int(_vmem_capacity_bytes() * 0.75), 110 * 1024 * 1024)
    budget = int(vmem_limit * 0.85)

    if strip_h is None:
        strip_h = _choose_strip_h(N, H, W, Cin, Cout, budget)
    assert H % strip_h == 0 and (strip_h == H or strip_h % 2 == 0), \
        "strip_h must divide H and be even (unless it equals H)"
    P = strip_h
    ns = H // P

    # (3,3,Cin,Cout) -> (3, 3*Cin, Cout): leading dim is dy; rows within a dy
    # group ordered (dx, cin), matching the in-kernel dx-concat / tap order.
    w_dtype = jnp.bfloat16 if use_bf16 else jnp.float32
    w1_g = w1.reshape(3, 3 * Cin, Cout).astype(w_dtype)
    w2_g = w2.reshape(3, 3 * Cout, Cout).astype(w_dtype)
    b1_2 = b1.reshape(1, Cout).astype(jnp.float32)
    b2_2 = b2.reshape(1, Cout).astype(jnp.float32)
    compute_dtype = jnp.bfloat16 if use_bf16 else jnp.float32

    kernel = functools.partial(_conv_block_kernel, P=P, W=W, Cin=Cin,
                               Cout=Cout, ns=ns, compute_dtype=compute_dtype)

    half_p = P // 2
    max_h_blk2 = max(H // 2 - 1, 0)

    def _main_map(n, s):
        return (n, s, 0, 0)

    def _top_map(n, s):   # rows [s*P - 2, s*P) in 2-row blocks, clamped at 0
        return (n, jnp.maximum(s * half_p - 1, 0), 0, 0)

    def _bot_map(n, s):   # rows [s*P + P, s*P + P + 2) in 2-row blocks, clamped
        return (n, jnp.minimum((s + 1) * half_p, max_h_blk2), 0, 0)

    itemsize = x_nhwc.dtype.itemsize
    flops = 2 * N * H * W * 9 * (Cin * Cout + Cout * Cout)
    bytes_accessed = (N * H * W * (Cin + Cout)) * itemsize \
        + (w1_g.size + w2_g.size + b1.size + b2.size) * 4

    return pl.pallas_call(
        kernel,
        out_shape=jax.ShapeDtypeStruct((N, H, W, Cout), x_nhwc.dtype),
        grid_spec=pltpu.PrefetchScalarGridSpec(
            num_scalar_prefetch=0,
            grid=(N, ns),
            in_specs=[
                pl.BlockSpec((1, P, W, Cin), _main_map),
                pl.BlockSpec((1, 2, W, Cin), _top_map),
                pl.BlockSpec((1, 2, W, Cin), _bot_map),
                pl.BlockSpec((3, 3 * Cin, Cout), lambda n, s: (0, 0, 0)),
                pl.BlockSpec((1, Cout), lambda n, s: (0, 0)),
                pl.BlockSpec((3, 3 * Cout, Cout), lambda n, s: (0, 0, 0)),
                pl.BlockSpec((1, Cout), lambda n, s: (0, 0)),
            ],
            out_specs=pl.BlockSpec((1, P, W, Cout), _main_map),
            scratch_shapes=[
                pltpu.VMEM((P + 4, W + 2, Cin), jnp.float32),
                pltpu.VMEM((P + 2, W + 2, Cout), jnp.float32),
            ],
        ),
        compiler_params=pltpu.CompilerParams(
            dimension_semantics=("parallel", "parallel"),
            vmem_limit_bytes=vmem_limit),
        cost_estimate=pl.CostEstimate(
            flops=flops, transcendentals=0, bytes_accessed=bytes_accessed),
    )(x_nhwc, x_nhwc, x_nhwc, w1_g, b1_2, w2_g, b2_2)


# --------------------------------------------------------------------------
# NCHW entry point — matches the PyTorch module interface.
# (Prefer conv_block_forward_nhwc to avoid the two HBM-round-trip transposes.)
# --------------------------------------------------------------------------
def conv_block_forward(x_nchw, params, *, strip_h=None, use_bf16=False):
    x = jnp.transpose(x_nchw, (0, 2, 3, 1))                  # NCHW -> NHWC
    y = conv_block_forward_nhwc(x, params, strip_h=strip_h, use_bf16=use_bf16)
    return jnp.transpose(y, (0, 3, 1, 2))                    # NHWC -> NCHW


def params_from_torch(w1_oihw, b1, w2_oihw, b2):
    """Convert PyTorch Conv2d weights (Cout, Cin, kH, kW) -> (kH, kW, Cin, Cout)."""
    return {"w1": jnp.transpose(jnp.asarray(w1_oihw), (2, 3, 1, 0)),
            "b1": jnp.asarray(b1),
            "w2": jnp.transpose(jnp.asarray(w2_oihw), (2, 3, 1, 0)),
            "b2": jnp.asarray(b2)}


def init_params(key, in_c, out_c, dtype=jnp.float32):
    """Deterministic init mimicking PyTorch Conv2d defaults (+/- 1/sqrt(fan_in))."""
    k1, k2, k3, k4 = jax.random.split(key, 4)
    bnd1 = 1.0 / jnp.sqrt(in_c * 9)
    bnd2 = 1.0 / jnp.sqrt(out_c * 9)
    w1 = jax.random.uniform(k1, (3, 3, in_c, out_c), dtype, -bnd1, bnd1)
    b1 = jax.random.uniform(k2, (out_c,), dtype, -bnd1, bnd1)
    w2 = jax.random.uniform(k3, (3, 3, out_c, out_c), dtype, -bnd2, bnd2)
    b2 = jax.random.uniform(k4, (out_c,), dtype, -bnd2, bnd2)
    return {"w1": w1, "b1": b1, "w2": w2, "b2": b2}


# --------------------------------------------------------------------------
# Pure-JAX reference for validation.
# --------------------------------------------------------------------------
def _ref_forward(x_nchw, params):
    def conv(x, w, b):  # x NCHW, w (3,3,Cin,Cout)
        w_oihw = jnp.transpose(w, (3, 2, 0, 1))
        y = lax.conv_general_dilated(
            x, w_oihw, window_strides=(1, 1), padding="SAME",
            dimension_numbers=("NCHW", "OIHW", "NCHW"))
        return jnp.maximum(y + b[None, :, None, None], 0.0)

    x = conv(x_nchw, params["w1"], params["b1"])
    x = conv(x, params["w2"], params["b2"])
    return x


if __name__ == "__main__":
    key = jax.random.PRNGKey(0)
    k_x, k_p = jax.random.split(key)

    N, C_in, H, W = 2, 4, 16, 16
    C_out = 8

    x = jax.random.normal(k_x, (N, C_in, H, W), jnp.float32)
    params = init_params(k_p, C_in, C_out)
    ref = _ref_forward(x, params)

    # Auto strip selection (whole image per step at this tiny size).
    out = jax.block_until_ready(conv_block_forward(x, params))
    assert out.shape == (N, C_out, H, W)
    assert jnp.allclose(out, ref, atol=1e-5, rtol=1e-5)

    # Explicit H-strip path with 2-row halos (exercises the strip/halo logic).
    out_s = jax.block_until_ready(conv_block_forward(x, params, strip_h=8))
    assert jnp.allclose(out_s, ref, atol=1e-5, rtol=1e-5)

    print("KERNEL_OK")
</pallas_src>

<mosaic_0001>
module attributes {stable_mosaic.version = 11 : i64} {
  func.func @_conv_block_kernel(%arg0: i32, %arg1: i32, %arg2: memref<1x16x16x4xf32, #tpu.memory_space<vmem>>, %arg3: memref<1x2x16x4xf32, #tpu.memory_space<vmem>>, %arg4: memref<1x2x16x4xf32, #tpu.memory_space<vmem>>, %arg5: memref<3x12x8xf32, #tpu.memory_space<vmem>>, %arg6: memref<1x8xf32, #tpu.memory_space<vmem>>, %arg7: memref<3x24x8xf32, #tpu.memory_space<vmem>>, %arg8: memref<1x8xf32, #tpu.memory_space<vmem>>, %arg9: memref<1x16x16x8xf32, #tpu.memory_space<vmem>>, %arg10: memref<20x18x4xf32, #tpu.memory_space<vmem>>, %arg11: memref<18x18x8xf32, #tpu.memory_space<vmem>>) attributes {dimension_semantics = [#tpu.dimension_semantics<parallel>, #tpu.dimension_semantics<parallel>], iteration_bounds = array<i64: 2, 1>, scalar_prefetch = 0 : i64, scratch_operands = 2 : i64, tpu.core_type = #tpu.core_type<tc>, window_params = [{transform_indices = @transform_0, window_bounds = array<i64: 1, 16, 16, 4>}, {transform_indices = @transform_1, window_bounds = array<i64: 1, 2, 16, 4>}, {transform_indices = @transform_2, window_bounds = array<i64: 1, 2, 16, 4>}, {pipeline_mode = #tpu.pipeline_mode<synchronous>, transform_indices = @transform_3, window_bounds = array<i64: 3, 12, 8>}, {pipeline_mode = #tpu.pipeline_mode<synchronous>, transform_indices = @transform_4, window_bounds = array<i64: 1, 8>}, {pipeline_mode = #tpu.pipeline_mode<synchronous>, transform_indices = @transform_5, window_bounds = array<i64: 3, 24, 8>}, {pipeline_mode = #tpu.pipeline_mode<synchronous>, transform_indices = @transform_6, window_bounds = array<i64: 1, 8>}, {transform_indices = @transform_7, window_bounds = array<i64: 1, 16, 16, 8>}]} {
    %cst = arith.constant 0.000000e+00 : f32
    %0 = vector.broadcast %cst : f32 to vector<20x1x4xf32>
    %c0 = arith.constant 0 : index
    %c0_0 = arith.constant 0 : index
    %c0_1 = arith.constant 0 : index
    %1 = vector.load %arg10[%c0, %c0_0, %c0_1] : memref<20x18x4xf32, #tpu.memory_space<vmem>>, vector<20x1x4xf32>
    tpu.vector_store %arg10[%c0, %c0_0, %c0_1], %0 {strides = array<i32>} : memref<20x18x4xf32, #tpu.memory_space<vmem>>, vector<20x1x4xf32>,
    %cst_2 = arith.constant 0.000000e+00 : f32
    %2 = vector.broadcast %cst_2 : f32 to vector<20x1x4xf32>
    %c0_3 = arith.constant 0 : index
    %c17 = arith.constant 17 : index
    %c0_4 = arith.constant 0 : index
    %3 = vector.load %arg10[%c0_3, %c17, %c0_4] : memref<20x18x4xf32, #tpu.memory_space<vmem>>, vector<20x1x4xf32>
    tpu.vector_store %arg10[%c0_3, %c17, %c0_4], %2 {strides = array<i32>} : memref<20x18x4xf32, #tpu.memory_space<vmem>>, vector<20x1x4xf32>,
    %cst_5 = arith.constant 0.000000e+00 : f32
    %4 = vector.broadcast %cst_5 : f32 to vector<18x1x8xf32>
    %c0_6 = arith.constant 0 : index
    %c0_7 = arith.constant 0 : index
    %c0_8 = arith.constant 0 : index
    %5 = vector.load %arg11[%c0_6, %c0_7, %c0_8] : memref<18x18x8xf32, #tpu.memory_space<vmem>>, vector<18x1x8xf32>
    tpu.vector_store %arg11[%c0_6, %c0_7, %c0_8], %4 {strides = array<i32>} : memref<18x18x8xf32, #tpu.memory_space<vmem>>, vector<18x1x8xf32>,
    %cst_9 = arith.constant 0.000000e+00 : f32
    %6 = vector.broadcast %cst_9 : f32 to vector<18x1x8xf32>
    %c0_10 = arith.constant 0 : index
    %c17_11 = arith.constant 17 : index
    %c0_12 = arith.constant 0 : index
    %7 = vector.load %arg11[%c0_10, %c17_11, %c0_12] : memref<18x18x8xf32, #tpu.memory_space<vmem>>, vector<18x1x8xf32>
    tpu.vector_store %arg11[%c0_10, %c17_11, %c0_12], %6 {strides = array<i32>} : memref<18x18x8xf32, #tpu.memory_space<vmem>>, vector<18x1x8xf32>,
    %c0_13 = arith.constant 0 : index
    %c0_14 = arith.constant 0 : index
    %c0_15 = arith.constant 0 : index
    %c0_16 = arith.constant 0 : index
    %8 = vector.load %arg2[%c0_13, %c0_14, %c0_15, %c0_16] : memref<1x16x16x4xf32, #tpu.memory_space<vmem>>, vector<1x16x16x4xf32>
    %9 = vector.shape_cast %8 : vector<1x16x16x4xf32> to vector<16x16x4xf32>
    %c2 = arith.constant 2 : index
    %c1 = arith.constant 1 : index
    %c0_17 = arith.constant 0 : index
    %10 = vector.load %arg10[%c2, %c1, %c0_17] : memref<20x18x4xf32, #tpu.memory_space<vmem>>, vector<16x16x4xf32>
    tpu.vector_store %arg10[%c2, %c1, %c0_17], %9 {strides = array<i32>} : memref<20x18x4xf32, #tpu.memory_space<vmem>>, vector<16x16x4xf32>,
    %c0_i32 = arith.constant 0 : i32
    %11 = arith.cmpi eq, %arg1, %c0_i32 : i32
    %12 = arith.extui %11 : i1 to i32
    %c0_i32_18 = arith.constant 0 : i32
    %13 = arith.cmpi ne, %12, %c0_i32_18 : i32
    scf.if %13 {
      %cst_72 = arith.constant 0.000000e+00 : f32
      %101 = vector.broadcast %cst_72 : f32 to vector<2x16x4xf32>
      %c0_73 = arith.constant 0 : index
      %c1_74 = arith.constant 1 : index
      %c0_75 = arith.constant 0 : index
      %102 = vector.load %arg10[%c0_73, %c1_74, %c0_75] : memref<20x18x4xf32, #tpu.memory_space<vmem>>, vector<2x16x4xf32>
      tpu.vector_store %arg10[%c0_73, %c1_74, %c0_75], %101 {strides = array<i32>} : memref<20x18x4xf32, #tpu.memory_space<vmem>>, vector<2x16x4xf32>,
    } else {
    }
    %c0_i32_19 = arith.constant 0 : i32
    %14 = arith.cmpi sgt, %arg1, %c0_i32_19 : i32
    %15 = arith.extui %14 : i1 to i32
    %c0_i32_20 = arith.constant 0 : i32
    %16 = arith.cmpi ne, %15, %c0_i32_20 : i32
    scf.if %16 {
      %c0_72 = arith.constant 0 : index
      %c0_73 = arith.constant 0 : index
      %c0_74 = arith.constant 0 : index
      %c0_75 = arith.constant 0 : index
      %101 = vector.load %arg3[%c0_72, %c0_73, %c0_74, %c0_75] : memref<1x2x16x4xf32, #tpu.memory_space<vmem>>, vector<1x2x16x4xf32>
      %102 = vector.shape_cast %101 : vector<1x2x16x4xf32> to vector<2x16x4xf32>
      %c0_76 = arith.constant 0 : index
      %c1_77 = arith.constant 1 : index
      %c0_78 = arith.constant 0 : index
      %103 = vector.load %arg10[%c0_76, %c1_77, %c0_78] : memref<20x18x4xf32, #tpu.memory_space<vmem>>, vector<2x16x4xf32>
      tpu.vector_store %arg10[%c0_76, %c1_77, %c0_78], %102 {strides = array<i32>} : memref<20x18x4xf32, #tpu.memory_space<vmem>>, vector<2x16x4xf32>,
    } else {
    }
    %c0_i32_21 = arith.constant 0 : i32
    %17 = arith.cmpi eq, %arg1, %c0_i32_21 : i32
    %18 = arith.extui %17 : i1 to i32
    %c0_i32_22 = arith.constant 0 : i32
    %19 = arith.cmpi ne, %18, %c0_i32_22 : i32
    scf.if %19 {
      %cst_72 = arith.constant 0.000000e+00 : f32
      %101 = vector.broadcast %cst_72 : f32 to vector<2x16x4xf32>
      %c18 = arith.constant 18 : index
      %c1_73 = arith.constant 1 : index
      %c0_74 = arith.constant 0 : index
      %102 = vector.load %arg10[%c18, %c1_73, %c0_74] : memref<20x18x4xf32, #tpu.memory_space<vmem>>, vector<2x16x4xf32>
      tpu.vector_store %arg10[%c18, %c1_73, %c0_74], %101 {strides = array<i32>} : memref<20x18x4xf32, #tpu.memory_space<vmem>>, vector<2x16x4xf32>,
    } else {
    }
    %c0_i32_23 = arith.constant 0 : i32
    %20 = arith.cmpi slt, %arg1, %c0_i32_23 : i32
    %21 = arith.extui %20 : i1 to i32
    %c0_i32_24 = arith.constant 0 : i32
    %22 = arith.cmpi ne, %21, %c0_i32_24 : i32
    scf.if %22 {
      %c0_72 = arith.constant 0 : index
      %c0_73 = arith.constant 0 : index
      %c0_74 = arith.constant 0 : index
      %c0_75 = arith.constant 0 : index
      %101 = vector.load %arg4[%c0_72, %c0_73, %c0_74, %c0_75] : memref<1x2x16x4xf32, #tpu.memory_space<vmem>>, vector<1x2x16x4xf32>
      %102 = vector.shape_cast %101 : vector<1x2x16x4xf32> to vector<2x16x4xf32>
      %c18 = arith.constant 18 : index
      %c1_76 = arith.constant 1 : index
      %c0_77 = arith.constant 0 : index
      %103 = vector.load %arg10[%c18, %c1_76, %c0_77] : memref<20x18x4xf32, #tpu.memory_space<vmem>>, vector<2x16x4xf32>
      tpu.vector_store %arg10[%c18, %c1_76, %c0_77], %102 {strides = array<i32>} : memref<20x18x4xf32, #tpu.memory_space<vmem>>, vector<2x16x4xf32>,
    } else {
    }
    %c0_25 = arith.constant 0 : index
    %c0_26 = arith.constant 0 : index
    %c0_27 = arith.constant 0 : index
    %23 = vector.load %arg10[%c0_25, %c0_26, %c0_27] : memref<20x18x4xf32, #tpu.memory_space<vmem>>, vector<20x18x4xf32>
    %24 = vector.extract_strided_slice %23 {offsets = [0, 0, 0], sizes = [18, 18, 4], strides = [1, 1, 1]} : vector<20x18x4xf32> to vector<18x18x4xf32>
    %25 = vector.extract_strided_slice %24 {offsets = [0, 0, 0], sizes = [18, 16, 4], strides = [1, 1, 1]} : vector<18x18x4xf32> to vector<18x16x4xf32>
    %26 = vector.extract_strided_slice %24 {offsets = [0, 1, 0], sizes = [18, 16, 4], strides = [1, 1, 1]} : vector<18x18x4xf32> to vector<18x16x4xf32>
    %27 = vector.extract_strided_slice %24 {offsets = [0, 2, 0], sizes = [18, 16, 4], strides = [1, 1, 1]} : vector<18x18x4xf32> to vector<18x16x4xf32>
    %28 = tpu.concatenate %25, %26, %27 in 2 : vector<18x16x4xf32>, vector<18x16x4xf32>, vector<18x16x4xf32> -> vector<18x16x12xf32>
    %c0_28 = arith.constant 0 : index
    %c0_29 = arith.constant 0 : index
    %c0_30 = arith.constant 0 : index
    %29 = vector.load %arg5[%c0_28, %c0_29, %c0_30] : memref<3x12x8xf32, #tpu.memory_space<vmem>>, vector<1x12x8xf32>
    %30 = vector.shape_cast %29 : vector<1x12x8xf32> to vector<12x8xf32>
    %cst_31 = arith.constant dense<0.000000e+00> : vector<18x16x8xf32>
    %31 = tpu.matmul %28, %30, %cst_31 {dimension_numbers = #tpu.dot_dimension_numbers<[2], [0], [0, 1], [1], [0, 0, 0, 1, 1, 1], [], []>} : vector<18x16x12xf32>, vector<12x8xf32>, vector<18x16x8xf32> -> vector<18x16x8xf32>
    %32 = vector.extract_strided_slice %23 {offsets = [1, 0, 0], sizes = [18, 18, 4], strides = [1, 1, 1]} : vector<20x18x4xf32> to vector<18x18x4xf32>
    %33 = vector.extract_strided_slice %32 {offsets = [0, 0, 0], sizes = [18, 16, 4], strides = [1, 1, 1]} : vector<18x18x4xf32> to vector<18x16x4xf32>
    %34 = vector.extract_strided_slice %32 {offsets = [0, 1, 0], sizes = [18, 16, 4], strides = [1, 1, 1]} : vector<18x18x4xf32> to vector<18x16x4xf32>
    %35 = vector.extract_strided_slice %32 {offsets = [0, 2, 0], sizes = [18, 16, 4], strides = [1, 1, 1]} : vector<18x18x4xf32> to vector<18x16x4xf32>
    %36 = tpu.concatenate %33, %34, %35 in 2 : vector<18x16x4xf32>, vector<18x16x4xf32>, vector<18x16x4xf32> -> vector<18x16x12xf32>
    %c1_32 = arith.constant 1 : index
    %c0_33 = arith.constant 0 : index
    %c0_34 = arith.constant 0 : index
    %37 = vector.load %arg5[%c1_32, %c0_33, %c0_34] : memref<3x12x8xf32, #tpu.memory_space<vmem>>, vector<1x12x8xf32>
    %38 = vector.shape_cast %37 : vector<1x12x8xf32> to vector<12x8xf32>
    %cst_35 = arith.constant dense<0.000000e+00> : vector<18x16x8xf32>
    %39 = tpu.matmul %36, %38, %cst_35 {dimension_numbers = #tpu.dot_dimension_numbers<[2], [0], [0, 1], [1], [0, 0, 0, 1, 1, 1], [], []>} : vector<18x16x12xf32>, vector<12x8xf32>, vector<18x16x8xf32> -> vector<18x16x8xf32>
    %40 = arith.addf %31, %39 : vector<18x16x8xf32>
    %41 = vector.extract_strided_slice %23 {offsets = [2, 0, 0], sizes = [18, 18, 4], strides = [1, 1, 1]} : vector<20x18x4xf32> to vector<18x18x4xf32>
    %42 = vector.extract_strided_slice %41 {offsets = [0, 0, 0], sizes = [18, 16, 4], strides = [1, 1, 1]} : vector<18x18x4xf32> to vector<18x16x4xf32>
    %43 = vector.extract_strided_slice %41 {offsets = [0, 1, 0], sizes = [18, 16, 4], strides = [1, 1, 1]} : vector<18x18x4xf32> to vector<18x16x4xf32>
    %44 = vector.extract_strided_slice %41 {offsets = [0, 2, 0], sizes = [18, 16, 4], strides = [1, 1, 1]} : vector<18x18x4xf32> to vector<18x16x4xf32>
    %45 = tpu.concatenate %42, %43, %44 in 2 : vector<18x16x4xf32>, vector<18x16x4xf32>, vector<18x16x4xf32> -> vector<18x16x12xf32>
    %c2_36 = arith.constant 2 : index
    %c0_37 = arith.constant 0 : index
    %c0_38 = arith.constant 0 : index
    %46 = vector.load %arg5[%c2_36, %c0_37, %c0_38] : memref<3x12x8xf32, #tpu.memory_space<vmem>>, vector<1x12x8xf32>
    %47 = vector.shape_cast %46 : vector<1x12x8xf32> to vector<12x8xf32>
    %cst_39 = arith.constant dense<0.000000e+00> : vector<18x16x8xf32>
    %48 = tpu.matmul %45, %47, %cst_39 {dimension_numbers = #tpu.dot_dimension_numbers<[2], [0], [0, 1], [1], [0, 0, 0, 1, 1, 1], [], []>} : vector<18x16x12xf32>, vector<12x8xf32>, vector<18x16x8xf32> -> vector<18x16x8xf32>
    %49 = arith.addf %40, %48 : vector<18x16x8xf32>
    %c0_40 = arith.constant 0 : index
    %c0_41 = arith.constant 0 : index
    %50 = vector.load %arg6[%c0_40, %c0_41] : memref<1x8xf32, #tpu.memory_space<vmem>>, vector<1x8xf32>
    %51 = vector.shape_cast %50 : vector<1x8xf32> to vector<8xf32>
    %52 = vector.shape_cast %51 : vector<8xf32> to vector<1x1x8xf32>
    %53 = vector.broadcast %52 : vector<1x1x8xf32> to vector<18x16x8xf32>
    %54 = arith.addf %49, %53 : vector<18x16x8xf32>
    %cst_42 = arith.constant 0.000000e+00 : f32
    %55 = vector.broadcast %cst_42 : f32 to vector<18x16x8xf32>
    %56 = arith.maximumf %54, %55 : vector<18x16x8xf32>
    %c0_43 = arith.constant 0 : index
    %c1_44 = arith.constant 1 : index
    %c0_45 = arith.constant 0 : index
    %57 = vector.load %arg11[%c0_43, %c1_44, %c0_45] : memref<18x18x8xf32, #tpu.memory_space<vmem>>, vector<18x16x8xf32>
    tpu.vector_store %arg11[%c0_43, %c1_44, %c0_45], %56 {strides = array<i32>} : memref<18x18x8xf32, #tpu.memory_space<vmem>>, vector<18x16x8xf32>,
    %c0_i32_46 = arith.constant 0 : i32
    %58 = arith.cmpi eq, %arg1, %c0_i32_46 : i32
    %59 = arith.extui %58 : i1 to i32
    %c0_i32_47 = arith.constant 0 : i32
    %60 = arith.cmpi ne, %59, %c0_i32_47 : i32
    scf.if %60 {
      %cst_72 = arith.constant 0.000000e+00 : f32
      %101 = vector.broadcast %cst_72 : f32 to vector<1x16x8xf32>
      %c0_73 = arith.constant 0 : index
      %c1_74 = arith.constant 1 : index
      %c0_75 = arith.constant 0 : index
      %102 = vector.load %arg11[%c0_73, %c1_74, %c0_75] : memref<18x18x8xf32, #tpu.memory_space<vmem>>, vector<1x16x8xf32>
      tpu.vector_store %arg11[%c0_73, %c1_74, %c0_75], %101 {strides = array<i32>} : memref<18x18x8xf32, #tpu.memory_space<vmem>>, vector<1x16x8xf32>,
    } else {
    }
    %c0_i32_48 = arith.constant 0 : i32
    %61 = arith.cmpi eq, %arg1, %c0_i32_48 : i32
    %62 = arith.extui %61 : i1 to i32
    %c0_i32_49 = arith.constant 0 : i32
    %63 = arith.cmpi ne, %62, %c0_i32_49 : i32
    scf.if %63 {
      %cst_72 = arith.constant 0.000000e+00 : f32
      %101 = vector.broadcast %cst_72 : f32 to vector<1x16x8xf32>
      %c17_73 = arith.constant 17 : index
      %c1_74 = arith.constant 1 : index
      %c0_75 = arith.constant 0 : index
      %102 = vector.load %arg11[%c17_73, %c1_74, %c0_75] : memref<18x18x8xf32, #tpu.memory_space<vmem>>, vector<1x16x8xf32>
      tpu.vector_store %arg11[%c17_73, %c1_74, %c0_75], %101 {strides = array<i32>} : memref<18x18x8xf32, #tpu.memory_space<vmem>>, vector<1x16x8xf32>,
    } else {
    }
    %c0_50 = arith.constant 0 : index
    %c0_51 = arith.constant 0 : index
    %c0_52 = arith.constant 0 : index
    %64 = vector.load %arg11[%c0_50, %c0_51, %c0_52] : memref<18x18x8xf32, #tpu.memory_space<vmem>>, vector<18x18x8xf32>
    %65 = vector.extract_strided_slice %64 {offsets = [0, 0, 0], sizes = [16, 18, 8], strides = [1, 1, 1]} : vector<18x18x8xf32> to vector<16x18x8xf32>
    %66 = vector.extract_strided_slice %65 {offsets = [0, 0, 0], sizes = [16, 16, 8], strides = [1, 1, 1]} : vector<16x18x8xf32> to vector<16x16x8xf32>
    %67 = vector.extract_strided_slice %65 {offsets = [0, 1, 0], sizes = [16, 16, 8], strides = [1, 1, 1]} : vector<16x18x8xf32> to vector<16x16x8xf32>
    %68 = vector.extract_strided_slice %65 {offsets = [0, 2, 0], sizes = [16, 16, 8], strides = [1, 1, 1]} : vector<16x18x8xf32> to vector<16x16x8xf32>
    %69 = tpu.concatenate %66, %67, %68 in 2 : vector<16x16x8xf32>, vector<16x16x8xf32>, vector<16x16x8xf32> -> vector<16x16x24xf32>
    %c0_53 = arith.constant 0 : index
    %c0_54 = arith.constant 0 : index
    %c0_55 = arith.constant 0 : index
    %70 = vector.load %arg7[%c0_53, %c0_54, %c0_55] : memref<3x24x8xf32, #tpu.memory_space<vmem>>, vector<1x24x8xf32>
    %71 = vector.shape_cast %70 : vector<1x24x8xf32> to vector<24x8xf32>
    %cst_56 = arith.constant dense<0.000000e+00> : vector<16x16x8xf32>
    %72 = tpu.matmul %69, %71, %cst_56 {dimension_numbers = #tpu.dot_dimension_numbers<[2], [0], [0, 1], [1], [0, 0, 0, 1, 1, 1], [], []>} : vector<16x16x24xf32>, vector<24x8xf32>, vector<16x16x8xf32> -> vector<16x16x8xf32>
    %73 = vector.extract_strided_slice %64 {offsets = [1, 0, 0], sizes = [16, 18, 8], strides = [1, 1, 1]} : vector<18x18x8xf32> to vector<16x18x8xf32>
    %74 = vector.extract_strided_slice %73 {offsets = [0, 0, 0], sizes = [16, 16, 8], strides = [1, 1, 1]} : vector<16x18x8xf32> to vector<16x16x8xf32>
    %75 = vector.extract_strided_slice %73 {offsets = [0, 1, 0], sizes = [16, 16, 8], strides = [1, 1, 1]} : vector<16x18x8xf32> to vector<16x16x8xf32>
    %76 = vector.extract_strided_slice %73 {offsets = [0, 2, 0], sizes = [16, 16, 8], strides = [1, 1, 1]} : vector<16x18x8xf32> to vector<16x16x8xf32>
    %77 = tpu.concatenate %74, %75, %76 in 2 : vector<16x16x8xf32>, vector<16x16x8xf32>, vector<16x16x8xf32> -> vector<16x16x24xf32>
    %c1_57 = arith.constant 1 : index
    %c0_58 = arith.constant 0 : index
    %c0_59 = arith.constant 0 : index
    %78 = vector.load %arg7[%c1_57, %c0_58, %c0_59] : memref<3x24x8xf32, #tpu.memory_space<vmem>>, vector<1x24x8xf32>
    %79 = vector.shape_cast %78 : vector<1x24x8xf32> to vector<24x8xf32>
    %cst_60 = arith.constant dense<0.000000e+00> : vector<16x16x8xf32>
    %80 = tpu.matmul %77, %79, %cst_60 {dimension_numbers = #tpu.dot_dimension_numbers<[2], [0], [0, 1], [1], [0, 0, 0, 1, 1, 1], [], []>} : vector<16x16x24xf32>, vector<24x8xf32>, vector<16x16x8xf32> -> vector<16x16x8xf32>
    %81 = arith.addf %72, %80 : vector<16x16x8xf32>
    %82 = vector.extract_strided_slice %64 {offsets = [2, 0, 0], sizes = [16, 18, 8], strides = [1, 1, 1]} : vector<18x18x8xf32> to vector<16x18x8xf32>
    %83 = vector.extract_strided_slice %82 {offsets = [0, 0, 0], sizes = [16, 16, 8], strides = [1, 1, 1]} : vector<16x18x8xf32> to vector<16x16x8xf32>
    %84 = vector.extract_strided_slice %82 {offsets = [0, 1, 0], sizes = [16, 16, 8], strides = [1, 1, 1]} : vector<16x18x8xf32> to vector<16x16x8xf32>
    %85 = vector.extract_strided_slice %82 {offsets = [0, 2, 0], sizes = [16, 16, 8], strides = [1, 1, 1]} : vector<16x18x8xf32> to vector<16x16x8xf32>
    %86 = tpu.concatenate %83, %84, %85 in 2 : vector<16x16x8xf32>, vector<16x16x8xf32>, vector<16x16x8xf32> -> vector<16x16x24xf32>
    %c2_61 = arith.constant 2 : index
    %c0_62 = arith.constant 0 : index
    %c0_63 = arith.constant 0 : index
    %87 = vector.load %arg7[%c2_61, %c0_62, %c0_63] : memref<3x24x8xf32, #tpu.memory_space<vmem>>, vector<1x24x8xf32>
    %88 = vector.shape_cast %87 : vector<1x24x8xf32> to vector<24x8xf32>
    %cst_64 = arith.constant dense<0.000000e+00> : vector<16x16x8xf32>
    %89 = tpu.matmul %86, %88, %cst_64 {dimension_numbers = #tpu.dot_dimension_numbers<[2], [0], [0, 1], [1], [0, 0, 0, 1, 1, 1], [], []>} : vector<16x16x24xf32>, vector<24x8xf32>, vector<16x16x8xf32> -> vector<16x16x8xf32>
    %90 = arith.addf %81, %89 : vector<16x16x8xf32>
    %c0_65 = arith.constant 0 : index
    %c0_66 = arith.constant 0 : index
    %91 = vector.load %arg8[%c0_65, %c0_66] : memref<1x8xf32, #tpu.memory_space<vmem>>, vector<1x8xf32>
    %92 = vector.shape_cast %91 : vector<1x8xf32> to vector<8xf32>
    %93 = vector.shape_cast %92 : vector<8xf32> to vector<1x1x8xf32>
    %94 = vector.broadcast %93 : vector<1x1x8xf32> to vector<16x16x8xf32>
    %95 = arith.addf %90, %94 : vector<16x16x8xf32>
    %cst_67 = arith.constant 0.000000e+00 : f32
    %96 = vector.broadcast %cst_67 : f32 to vector<16x16x8xf32>
    %97 = arith.maximumf %95, %96 : vector<16x16x8xf32>
    %c0_68 = arith.constant 0 : index
    %c0_69 = arith.constant 0 : index
    %c0_70 = arith.constant 0 : index
    %c0_71 = arith.constant 0 : index
    %98 = vector.load %arg9[%c0_68, %c0_69, %c0_70, %c0_71] : memref<1x16x16x8xf32, #tpu.memory_space<vmem>>, vector<1x16x16x8xf32>
    %99 = vector.shape_cast %98 : vector<1x16x16x8xf32> to vector<16x16x8xf32>
    %100 = vector.shape_cast %97 : vector<16x16x8xf32> to vector<1x16x16x8xf32>
    tpu.vector_store %arg9[%c0_68, %c0_69, %c0_70, %c0_71], %100 {strides = array<i32>} : memref<1x16x16x8xf32, #tpu.memory_space<vmem>>, vector<1x16x16x8xf32>,
    return
  }
  func.func @transform_0(%arg0: i32, %arg1: i32) -> (i32, i32, i32, i32) {
    %c0_i32 = arith.constant 0 : i32
    %c0_i32_0 = arith.constant 0 : i32
    %c0_i32_1 = arith.constant 0 : i32
    return %arg0, %arg1, %c0_i32, %c0_i32_0 : i32, i32, i32, i32
  }
  func.func @transform_1(%arg0: i32, %arg1: i32) -> (i32, i32, i32, i32) {
    %c8_i32 = arith.constant 8 : i32
    %0 = arith.muli %arg1, %c8_i32 : i32
    %c1_i32 = arith.constant 1 : i32
    %1 = arith.subi %0, %c1_i32 : i32
    %c0_i32 = arith.constant 0 : i32
    %2 = arith.maxsi %1, %c0_i32 : i32
    %c0_i32_0 = arith.constant 0 : i32
    %c0_i32_1 = arith.constant 0 : i32
    %c0_i32_2 = arith.constant 0 : i32
    return %arg0, %2, %c0_i32_0, %c0_i32_1 : i32, i32, i32, i32
  }
  func.func @transform_2(%arg0: i32, %arg1: i32) -> (i32, i32, i32, i32) {
    %c1_i32 = arith.constant 1 : i32
    %0 = arith.addi %arg1, %c1_i32 : i32
    %c8_i32 = arith.constant 8 : i32
    %1 = arith.muli %0, %c8_i32 : i32
    %c7_i32 = arith.constant 7 : i32
    %2 = arith.minsi %1, %c7_i32 : i32
    %c0_i32 = arith.constant 0 : i32
    %c0_i32_0 = arith.constant 0 : i32
    %c0_i32_1 = arith.constant 0 : i32
    return %arg0, %2, %c0_i32, %c0_i32_0 : i32, i32, i32, i32
  }
  func.func @transform_3(%arg0: i32, %arg1: i32) -> (i32, i32, i32) {
    %c0_i32 = arith.constant 0 : i32
    %c0_i32_0 = arith.constant 0 : i32
    %c0_i32_1 = arith.constant 0 : i32
    %c0_i32_2 = arith.constant 0 : i32
    return %c0_i32, %c0_i32_0, %c0_i32_1 : i32, i32, i32
  }
  func.func @transform_4(%arg0: i32, %arg1: i32) -> (i32, i32) {
    %c0_i32 = arith.constant 0 : i32
    %c0_i32_0 = arith.constant 0 : i32
    %c0_i32_1 = arith.constant 0 : i32
    return %c0_i32, %c0_i32_0 : i32, i32
  }
  func.func @transform_5(%arg0: i32, %arg1: i32) -> (i32, i32, i32) {
    %c0_i32 = arith.constant 0 : i32
    %c0_i32_0 = arith.constant 0 : i32
    %c0_i32_1 = arith.constant 0 : i32
    %c0_i32_2 = arith.constant 0 : i32
    return %c0_i32, %c0_i32_0, %c0_i32_1 : i32, i32, i32
  }
  func.func @transform_6(%arg0: i32, %arg1: i32) -> (i32, i32) {
    %c0_i32 = arith.constant 0 : i32
    %c0_i32_0 = arith.constant 0 : i32
    %c0_i32_1 = arith.constant 0 : i32
    return %c0_i32, %c0_i32_0 : i32, i32
  }
  func.func @transform_7(%arg0: i32, %arg1: i32) -> (i32, i32, i32, i32) {
    %c0_i32 = arith.constant 0 : i32
    %c0_i32_0 = arith.constant 0 : i32
    %c0_i32_1 = arith.constant 0 : i32
    return %arg0, %arg1, %c0_i32, %c0_i32_0 : i32, i32, i32, i32
  }
}

</mosaic_0001>

<llo_original>
// kernel: tpu_custom_call.1
$region0: #{tpu_custom_call.1}
  #allocation0 [shape = 'u32[]', space=smem, size = 0x4, offset = 0x4, fixed_abs, tag = 'smem constant byte address 0x4 - core index']
  #allocation1 [shape = 'u32[144,128]{1,0:T(1,128)}', space=vmem, size = 0x12000, scoped, tag = 'internal scratch']
  #allocation2 [shape = 'f32[20,18,4]{2,1,0:T(8,128)}', space=vmem, size = 0x3c000, scoped, tag = 'scratch operand']
  #allocation3 [shape = 'f32[18,18,8]{2,1,0:T(8,128)}', space=vmem, size = 0x36000, scoped, tag = 'scratch operand']
  %s0 = inlined_call_operand.vmem [shape: f32[2,16,16,4], index: 0, kind: input, shape index: {}]
  %s1 = inlined_call_operand.vmem [shape: f32[2,16,16,4], index: 1, kind: input, shape index: {}]
  %s2 = inlined_call_operand.vmem [shape: f32[2,16,16,4], index: 2, kind: input, shape index: {}]
  %s3 = inlined_call_operand.vmem [shape: f32[3,12,8], index: 3, kind: input, shape index: {}]
  %s4 = inlined_call_operand.vmem [shape: f32[1,8], index: 4, kind: input, shape index: {}]
  %s5 = inlined_call_operand.vmem [shape: f32[3,24,8], index: 5, kind: input, shape index: {}]
  %s6 = inlined_call_operand.vmem [shape: f32[1,8], index: 6, kind: input, shape index: {}]
  %s7 = inlined_call_operand.vmem [shape: f32[2,16,16,8], index: 7, kind: output, shape index: {}]
  %s8 = sld [smem:[#allocation0]]
  $region81: #{tpu_custom_call.1} parent=0
    _
  %s10 = ssub.s32 1, %s8
  %s11 = scalar_select 0, %s10, %s8
  loop: start=0, step=1, limit=4
  $region2: #{tpu_custom_call.1} parent=0 // loop_pre_header
    _
  $region3: #{tpu_custom_call.1} parent=0 // loop_header
    %s13 = sphi 0, %s17
    %p14 = scmp.ge.s32.totalorder %s13, 4
    %s20 = sphi 0, %s32
    %s21 = sphi 0, %s28
    %s22 = sphi 0, %s20
    %s23 = sphi 0, %s21
    %s24 = sphi 0, %s22
    %s25 = sphi 0, %s23
    %s37 = sphi 0, %s39
    %s40 = sphi 0, %s37
    %s41 = sphi 0, %s40
    %s57 = sphi 0, %s41
    %s73 = sphi 0, %s75
    %s76 = sphi 0, %s73
    %s77 = sphi 0, %s76
    %s93 = sphi 0, %s77
    %s109 = sphi 0, %s111
    %s112 = sphi 0, %s109
    %s113 = sphi 0, %s112
    %s129 = sphi 0, %s113
    %s133 = sphi 0, %s133
    %s135 = sphi 0, %s133
    %s136 = sphi 0, %s135
    %s150 = sphi 0, %s136
    %s154 = sphi 0, %s154
    %s156 = sphi 0, %s154
    %s157 = sphi 0, %s156
    %s171 = sphi 0, %s157
    %s175 = sphi 0, %s175
    %s177 = sphi 0, %s175
    %s178 = sphi 0, %s177
    %s192 = sphi 0, %s178
    %s196 = sphi 0, %s196
    %s198 = sphi 0, %s196
    %s199 = sphi 0, %s198
    %s213 = sphi 0, %s199
    %s221 = sphi 0, %s223
    %s224 = sphi 0, %s221
    %s225 = sphi 0, %s224
    %s241 = sphi 0, %s225
  $region4: #{tpu_custom_call.1} parent=0 // loop_header_branch
    %16 = sbr.rel (%p14) target = $region8
  $region5: #{tpu_custom_call.1} parent=0 // loop_body
    %s18 = ssub.s32 %s13, 1
    %s19 = ssub.s32 %s13, 2
    %s26 = sadd.s32 1, %s21
    %p27 = scmp.ge.s32.totalorder %s26, 1
    %s28 = scalar_select %p27, 0, %s26
    %s29 = sadd.s32 1, %s20
    %s30 = scalar_select %p27, %s29, %s20
    %p31 = scmp.ge.s32.totalorder %s30, 2
    %s32 = scalar_select %p31, 0, %s30
    %s33 = ssub.s32 %s20, %s32
    %s34 = ssub.s32 %s21, %s28
    %s35 = sor.u32 %s33, %s34
    %p36 = scmp.eq.s32.totalorder %s35, 0
    %s38 = sadd.s32 %s37, 1
    %s39 = scalar_select %p36, %s37, %s38
    %p42 = pneg %p36
    %p43 = scmp.eq.s32.totalorder %s13, 1
    %p44 = por %p42, %p43
    %p45 = scmp.ne.s32.totalorder %s37, %s40
    %p46 = scmp.eq.s32.totalorder %s13, 0
    %p47 = por %p45, %p46
    %p48 = scmp.ne.s32.totalorder %s37, %s40
    %p49 = scmp.eq.s32.totalorder %s18, 1
    %p50 = por %p48, %p49
    %p51 = scmp.ne.s32.totalorder %s40, %s41
    %p52 = scmp.eq.s32.totalorder %s18, 0
    %p53 = por %p51, %p52
    %p54 = scmp.ne.s32.totalorder %s40, %s41
    %p55 = scmp.eq.s32.totalorder %s19, 1
    %p56 = por %p54, %p55
    %p58 = scmp.ne.s32.totalorder %s41, %s57
    %p59 = scmp.eq.s32.totalorder %s19, 0
    %p60 = por %p58, %p59
    %s61 = smul.u32 %s21, 8
    %s62 = ssub.s32 %s61, 1
    %p63 = scmp.gt.s32.totalorder %s62, 0
    %s64 = scalar_select %p63, %s62, 0
    %s65 = smul.u32 %s28, 8
    %s66 = ssub.s32 %s65, 1
    %p67 = scmp.gt.s32.totalorder %s66, 0
    %s68 = scalar_select %p67, %s66, 0
    %s69 = ssub.s32 %s20, %s32
    %s70 = ssub.s32 %s64, %s68
    %s71 = sor.u32 %s69, %s70
    %p72 = scmp.eq.s32.totalorder %s71, 0
    %s74 = sadd.s32 %s73, 1
    %s75 = scalar_select %p72, %s73, %s74
    %p78 = pneg %p72
    %p79 = scmp.eq.s32.totalorder %s13, 1
    %p80 = por %p78, %p79
    %p81 = scmp.ne.s32.totalorder %s73, %s76
    %p82 = scmp.eq.s32.totalorder %s13, 0
    %p83 = por %p81, %p82
    %p84 = scmp.ne.s32.totalorder %s73, %s76
    %p85 = scmp.eq.s32.totalorder %s18, 1
    %p86 = por %p84, %p85
    %p87 = scmp.ne.s32.totalorder %s76, %s77
    %p88 = scmp.eq.s32.totalorder %s18, 0
    %p89 = por %p87, %p88
    %p90 = scmp.ne.s32.totalorder %s76, %s77
    %p91 = scmp.eq.s32.totalorder %s19, 1
    %p92 = por %p90, %p91
    %p94 = scmp.ne.s32.totalorder %s77, %s93
    %p95 = scmp.eq.s32.totalorder %s19, 0
    %p96 = por %p94, %p95
    %s97 = sadd.s32 %s21, 1
    %s98 = smul.u32 %s97, 8
    %p99 = scmp.lt.s32.totalorder %s98, 7
    %s100 = scalar_select %p99, %s98, 7
    %s101 = sadd.s32 %s28, 1
    %s102 = smul.u32 %s101, 8
    %p103 = scmp.lt.s32.totalorder %s102, 7
    %s104 = scalar_select %p103, %s102, 7
    %s105 = ssub.s32 %s20, %s32
    %s106 = ssub.s32 %s100, %s104
    %s107 = sor.u32 %s105, %s106
    %p108 = scmp.eq.s32.totalorder %s107, 0
    %s110 = sadd.s32 %s109, 1
    %s111 = scalar_select %p108, %s109, %s110
    %p114 = pneg %p108
    %p115 = scmp.eq.s32.totalorder %s13, 1
    %p116 = por %p114, %p115
    %p117 = scmp.ne.s32.totalorder %s109, %s112
    %p118 = scmp.eq.s32.totalorder %s13, 0
    %p119 = por %p117, %p118
    %p120 = scmp.ne.s32.totalorder %s109, %s112
    %p121 = scmp.eq.s32.totalorder %s18, 1
    %p122 = por %p120, %p121
    %p123 = scmp.ne.s32.totalorder %s112, %s113
    %p124 = scmp.eq.s32.totalorder %s18, 0
    %p125 = por %p123, %p124
    %p126 = scmp.ne.s32.totalorder %s112, %s113
    %p127 = scmp.eq.s32.totalorder %s19, 1
    %p128 = por %p126, %p127
    %p130 = scmp.ne.s32.totalorder %s113, %s129
    %p131 = scmp.eq.s32.totalorder %s19, 0
    %p132 = por %p130, %p131
    %s134 = sadd.s32 %s133, 1
    %p137 = scmp.eq.s32.totalorder %s13, 1
    %p138 = scmp.ne.s32.totalorder %s133, %s135
    %p139 = scmp.eq.s32.totalorder %s13, 0
    %p140 = por %p138, %p139
    %p141 = scmp.ne.s32.totalorder %s133, %s135
    %p142 = scmp.eq.s32.totalorder %s18, 1
    %p143 = por %p141, %p142
    %p144 = scmp.ne.s32.totalorder %s135, %s136
    %p145 = scmp.eq.s32.totalorder %s18, 0
    %p146 = por %p144, %p145
    %p147 = scmp.ne.s32.totalorder %s135, %s136
    %p148 = scmp.eq.s32.totalorder %s19, 1
    %p149 = por %p147, %p148
    %p151 = scmp.ne.s32.totalorder %s136, %s150
    %p152 = scmp.eq.s32.totalorder %s19, 0
    %p153 = por %p151, %p152
    %s155 = sadd.s32 %s154, 1
    %p158 = scmp.eq.s32.totalorder %s13, 1
    %p159 = scmp.ne.s32.totalorder %s154, %s156
    %p160 = scmp.eq.s32.totalorder %s13, 0
    %p161 = por %p159, %p160
    %p162 = scmp.ne.s32.totalorder %s154, %s156
    %p163 = scmp.eq.s32.totalorder %s18, 1
    %p164 = por %p162, %p163
    %p165 = scmp.ne.s32.totalorder %s156, %s157
    %p166 = scmp.eq.s32.totalorder %s18, 0
    %p167 = por %p165, %p166
    %p168 = scmp.ne.s32.totalorder %s156, %s157
    %p169 = scmp.eq.s32.totalorder %s19, 1
    %p170 = por %p168, %p169
    %p172 = scmp.ne.s32.totalorder %s157, %s171
    %p173 = scmp.eq.s32.totalorder %s19, 0
    %p174 = por %p172, %p173
    %s176 = sadd.s32 %s175, 1
    %p179 = scmp.eq.s32.totalorder %s13, 1
    %p180 = scmp.ne.s32.totalorder %s175, %s177
    %p181 = scmp.eq.s32.totalorder %s13, 0
    %p182 = por %p180, %p181
    %p183 = scmp.ne.s32.totalorder %s175, %s177
    %p184 = scmp.eq.s32.totalorder %s18, 1
    %p185 = por %p183, %p184
    %p186 = scmp.ne.s32.totalorder %s177, %s178
    %p187 = scmp.eq.s32.totalorder %s18, 0
    %p188 = por %p186, %p187
    %p189 = scmp.ne.s32.totalorder %s177, %s178
    %p190 = scmp.eq.s32.totalorder %s19, 1
    %p191 = por %p189, %p190
    %p193 = scmp.ne.s32.totalorder %s178, %s192
    %p194 = scmp.eq.s32.totalorder %s19, 0
    %p195 = por %p193, %p194
    %s197 = sadd.s32 %s196, 1
    %p200 = scmp.eq.s32.totalorder %s13, 1
    %p201 = scmp.ne.s32.totalorder %s196, %s198
    %p202 = scmp.eq.s32.totalorder %s13, 0
    %p203 = por %p201, %p202
    %p204 = scmp.ne.s32.totalorder %s196, %s198
    %p205 = scmp.eq.s32.totalorder %s18, 1
    %p206 = por %p204, %p205
    %p207 = scmp.ne.s32.totalorder %s198, %s199
    %p208 = scmp.eq.s32.totalorder %s18, 0
    %p209 = por %p207, %p208
    %p210 = scmp.ne.s32.totalorder %s198, %s199
    %p211 = scmp.eq.s32.totalorder %s19, 1
    %p212 = por %p210, %p211
    %p214 = scmp.ne.s32.totalorder %s199, %s213
    %p215 = scmp.eq.s32.totalorder %s19, 0
    %p216 = por %p214, %p215
    %s217 = ssub.s32 %s20, %s32
    %s218 = ssub.s32 %s21, %s28
    %s219 = sor.u32 %s217, %s218
    %p220 = scmp.eq.s32.totalorder %s219, 0
    %s222 = sadd.s32 %s221, 1
    %s223 = scalar_select %p220, %s221, %s222
    %p226 = pneg %p220
    %p227 = scmp.eq.s32.totalorder %s13, 1
    %p228 = por %p226, %p227
    %p229 = scmp.ne.s32.totalorder %s221, %s224
    %p230 = scmp.eq.s32.totalorder %s13, 0
    %p231 = por %p229, %p230
    %p232 = scmp.ne.s32.totalorder %s221, %s224
    %p233 = scmp.eq.s32.totalorder %s18, 1
    %p234 = por %p232, %p233
    %p235 = scmp.ne.s32.totalorder %s224, %s225
    %p236 = scmp.eq.s32.totalorder %s18, 0
    %p237 = por %p235, %p236
    %p238 = scmp.ne.s32.totalorder %s224, %s225
    %p239 = scmp.eq.s32.totalorder %s19, 1
    %p240 = por %p238, %p239
    %p242 = scmp.ne.s32.totalorder %s225, %s241
    %p243 = scmp.eq.s32.totalorder %s19, 0
    %p244 = por %p242, %p243
    %p245 = scmp.le.s32.totalorder 1, %s13
    %p246 = scmp.lt.s32.totalorder %s13, 3
    %p247 = pnand %p245, %p246
    %p248 = pneg %p247
    // Predicated region
    $region9: #{tpu_custom_call.1} parent=5 // pred_check
      _
    $region10: #{tpu_custom_call.1} parent=5 // pred_check_branch
      %250 = sbr.rel (%p247) target = $region12
    $region11: #{tpu_custom_call.1} parent=5 // pred_region
      %s251 = ssub.s32 %s13, 1
      // Predicated region
      $region13: #{tpu_custom_call.1} parent=11 // pred_check
        %p252 = pneg %p146
      $region14: #{tpu_custom_call.1} parent=11 // pred_check_branch
        %254 = sbr.rel (%p252) target = $region16
      $region15: #{tpu_custom_call.1} parent=11 // pred_region
        _
      $region16: #{tpu_custom_call.1} parent=11 // pred_fallthru
        _
      // Predicated region
      $region17: #{tpu_custom_call.1} parent=11 // pred_check
        %p255 = pneg %p167
      $region18: #{tpu_custom_call.1} parent=11 // pred_check_branch
        %257 = sbr.rel (%p255) target = $region20
      $region19: #{tpu_custom_call.1} parent=11 // pred_region
        _
      $region20: #{tpu_custom_call.1} parent=11 // pred_fallthru
        _
      // Predicated region
      $region21: #{tpu_custom_call.1} parent=11 // pred_check
        %p258 = pneg %p188
      $region22: #{tpu_custom_call.1} parent=11 // pred_check_branch
        %260 = sbr.rel (%p258) target = $region24
      $region23: #{tpu_custom_call.1} parent=11 // pred_region
        _
      $region24: #{tpu_custom_call.1} parent=11 // pred_fallthru
        _
      // Predicated region
      $region25: #{tpu_custom_call.1} parent=11 // pred_check
        %p261 = pneg %p209
      $region26: #{tpu_custom_call.1} parent=11 // pred_check_branch
        %263 = sbr.rel (%p261) target = $region28
      $region27: #{tpu_custom_call.1} parent=11 // pred_region
        _
      $region28: #{tpu_custom_call.1} parent=11 // pred_fallthru
        _
    $region12: #{tpu_custom_call.1} parent=5 // pred_fallthru
      _
    %p264 = scmp.lt.s32.totalorder %s13, 2
    // Predicated region
    $region29: #{tpu_custom_call.1} parent=5 // pred_check
      %p265 = pneg %p264
    $region30: #{tpu_custom_call.1} parent=5 // pred_check_branch
      %267 = sbr.rel (%p265) target = $region32
    $region31: #{tpu_custom_call.1} parent=5 // pred_region
      // Predicated region
      $region33: #{tpu_custom_call.1} parent=31 // pred_check
        %p268 = pneg %p47
      $region34: #{tpu_custom_call.1} parent=31 // pred_check_branch
        %270 = sbr.rel (%p268) target = $region36
      $region35: #{tpu_custom_call.1} parent=31 // pred_region
        %s271 = smul.u32 16, %s21
        %p272 = scmp.lt.s32.totalorder %s20, 1
        %s273 = scalar_select %p272, %s20, 1
        %p274 = scmp.lt.s32.totalorder %s271, 15
        %s275 = scalar_select %p274, %s271, 15
        %s276 = smul.addr %s275, 2
        %s277 = smul.addr %s273, 32
        %s278 = sadd.s32 %s276, %s277
        %s279 = smul.addr %s278, 8
        %s280 = scalar_lea.vmem %s0, %s279
        %s281 = smul.u32 16, %s21
      $region36: #{tpu_custom_call.1} parent=31 // pred_fallthru
        _
      // Predicated region
      $region37: #{tpu_custom_call.1} parent=31 // pred_check
        %p282 = pneg %p83
      $region38: #{tpu_custom_call.1} parent=31 // pred_check_branch
        %284 = sbr.rel (%p282) target = $region40
      $region39: #{tpu_custom_call.1} parent=31 // pred_region
        %s285 = smul.u32 %s21, 8
        %s286 = ssub.s32 %s285, 1
        %p287 = scmp.gt.s32.totalorder %s286, 0
        %s288 = scalar_select %p287, %s286, 0
        %s289 = smul.u32 2, %s288
        %p290 = scmp.lt.s32.totalorder %s20, 1
        %s291 = scalar_select %p290, %s20, 1
        %p292 = scmp.lt.s32.totalorder %s289, 15
        %s293 = scalar_select %p292, %s289, 15
        %s294 = smul.addr %s293, 2
        %s295 = smul.addr %s291, 32
        %s296 = sadd.s32 %s294, %s295
        %s297 = smul.addr %s296, 8
        %s298 = scalar_lea.vmem %s1, %s297
        %s299 = smul.u32 %s21, 8
        %s300 = ssub.s32 %s299, 1
        %p301 = scmp.gt.s32.totalorder %s300, 0
        %s302 = scalar_select %p301, %s300, 0
        %s303 = smul.u32 2, %s302
      $region40: #{tpu_custom_call.1} parent=31 // pred_fallthru
        _
      // Predicated region
      $region41: #{tpu_custom_call.1} parent=31 // pred_check
        %p304 = pneg %p119
      $region42: #{tpu_custom_call.1} parent=31 // pred_check_branch
        %306 = sbr.rel (%p304) target = $region44
      $region43: #{tpu_custom_call.1} parent=31 // pred_region
        %s307 = sadd.s32 %s21, 1
        %s308 = smul.u32 %s307, 8
        %p309 = scmp.lt.s32.totalorder %s308, 7
        %s310 = scalar_select %p309, %s308, 7
        %s311 = smul.u32 2, %s310
        %p312 = scmp.lt.s32.totalorder %s20, 1
        %s313 = scalar_select %p312, %s20, 1
        %p314 = scmp.lt.s32.totalorder %s311, 15
        %s315 = scalar_select %p314, %s311, 15
        %s316 = smul.addr %s315, 2
        %s317 = smul.addr %s313, 32
        %s318 = sadd.s32 %s316, %s317
        %s319 = smul.addr %s318, 8
        %s320 = scalar_lea.vmem %s2, %s319
        %s321 = sadd.s32 %s21, 1
        %s322 = smul.u32 %s321, 8
        %p323 = scmp.lt.s32.totalorder %s322, 7
        %s324 = scalar_select %p323, %s322, 7
        %s325 = smul.u32 2, %s324
      $region44: #{tpu_custom_call.1} parent=31 // pred_fallthru
        _
    $region32: #{tpu_custom_call.1} parent=5 // pred_fallthru
      _
    %p326 = scmp.le.s32.totalorder 1, %s13
    %p327 = scmp.lt.s32.totalorder %s13, 3
    %p328 = pnand %p326, %p327
    %p329 = pneg %p328
    // Predicated region
    $region45: #{tpu_custom_call.1} parent=5 // pred_check
      _
    $region46: #{tpu_custom_call.1} parent=5 // pred_check_branch
      %331 = sbr.rel (%p328) target = $region48
    $region47: #{tpu_custom_call.1} parent=5 // pred_region
      %s332 = ssub.s32 %s13, 1
      %s333 = smul.u32 16, %s23
      %p334 = scmp.lt.s32.totalorder %s22, 1
      %s335 = scalar_select %p334, %s22, 1
      %p336 = scmp.lt.s32.totalorder %s333, 15
      %s337 = scalar_select %p336, %s333, 15
      %s338 = smul.addr %s337, 2
      %s339 = smul.addr %s335, 32
      %s340 = sadd.s32 %s338, %s339
      %s341 = smul.addr %s340, 8
      %s342 = scalar_lea.vmem %s0, %s341
      %p343 = pneg %p53
      %p344 = pneg %p50
      %s345 = smul.u32 %s23, 8
      %s346 = ssub.s32 %s345, 1
      %p347 = scmp.gt.s32.totalorder %s346, 0
      %s348 = scalar_select %p347, %s346, 0
      %s349 = smul.u32 2, %s348
      %p350 = scmp.lt.s32.totalorder %s22, 1
      %s351 = scalar_select %p350, %s22, 1
      %p352 = scmp.lt.s32.totalorder %s349, 15
      %s353 = scalar_select %p352, %s349, 15
      %s354 = smul.addr %s353, 2
      %s355 = smul.addr %s351, 32
      %s356 = sadd.s32 %s354, %s355
      %s357 = smul.addr %s356, 8
      %s358 = scalar_lea.vmem %s1, %s357
      %p359 = pneg %p89
      %p360 = pneg %p86
      %s361 = sadd.s32 %s23, 1
      %s362 = smul.u32 %s361, 8
      %p363 = scmp.lt.s32.totalorder %s362, 7
      %s364 = scalar_select %p363, %s362, 7
      %s365 = smul.u32 2, %s364
      %p366 = scmp.lt.s32.totalorder %s22, 1
      %s367 = scalar_select %p366, %s22, 1
      %p368 = scmp.lt.s32.totalorder %s365, 15
      %s369 = scalar_select %p368, %s365, 15
      %s370 = smul.addr %s369, 2
      %s371 = smul.addr %s367, 32
      %s372 = sadd.s32 %s370, %s371
      %s373 = smul.addr %s372, 8
      %s374 = scalar_lea.vmem %s2, %s373
      %p375 = pneg %p125
      %p376 = pneg %p122
      %p377 = pneg %p146
      %p378 = pneg %p143
      %p379 = pneg %p167
      %p380 = pneg %p164
      %p381 = pneg %p188
      %p382 = pneg %p185
      %p383 = pneg %p209
      %p384 = pneg %p206
      %p385 = pneg %p237
      %p386 = pneg %p234
      %s387 = smul.u32 16, %s23
      %p388 = scmp.lt.s32.totalorder %s22, 1
      %s389 = scalar_select %p388, %s22, 1
      %p390 = scmp.lt.s32.totalorder %s387, 15
      %s391 = scalar_select %p390, %s387, 15
      %s392 = smul.addr %s391, 2
      %s393 = smul.addr %s389, 32
      %s394 = sadd.s32 %s392, %s393
      %s395 = smul.addr %s394, 8
      %s396 = scalar_lea.vmem %s7, %s395
      %s397 = smul.u32 16, %s23
      %p398 = scmp.lt.s32.totalorder %s22, 1
      %s399 = scalar_select %p398, %s22, 1
      %p400 = scmp.lt.s32.totalorder %s397, 15
      %s401 = scalar_select %p400, %s397, 15
      %s402 = smul.addr %s401, 2
      %s403 = smul.addr %s399, 32
      %s404 = sadd.s32 %s402, %s403
      %s405 = smul.addr %s404, 8
      %s406 = scalar_lea.vmem %s0, %s405
      %s407 = smul.u32 16, %s23
      %s408 = smul.u32 %s23, 8
      %s409 = ssub.s32 %s408, 1
      %p410 = scmp.gt.s32.totalorder %s409, 0
      %s411 = scalar_select %p410, %s409, 0
      %s412 = smul.u32 2, %s411
      %p413 = scmp.lt.s32.totalorder %s22, 1
      %s414 = scalar_select %p413, %s22, 1
      %p415 = scmp.lt.s32.totalorder %s412, 15
      %s416 = scalar_select %p415, %s412, 15
      %s417 = smul.addr %s416, 2
      %s418 = smul.addr %s414, 32
      %s419 = sadd.s32 %s417, %s418
      %s420 = smul.addr %s419, 8
      %s421 = scalar_lea.vmem %s1, %s420
      %s422 = smul.u32 %s23, 8
      %s423 = ssub.s32 %s422, 1
      %p424 = scmp.gt.s32.totalorder %s423, 0
      %s425 = scalar_select %p424, %s423, 0
      %s426 = smul.u32 2, %s425
      %s427 = sadd.s32 %s23, 1
      %s428 = smul.u32 %s427, 8
      %p429 = scmp.lt.s32.totalorder %s428, 7
      %s430 = scalar_select %p429, %s428, 7
      %s431 = smul.u32 2, %s430
      %p432 = scmp.lt.s32.totalorder %s22, 1
      %s433 = scalar_select %p432, %s22, 1
      %p434 = scmp.lt.s32.totalorder %s431, 15
      %s435 = scalar_select %p434, %s431, 15
      %s436 = smul.addr %s435, 2
      %s437 = smul.addr %s433, 32
      %s438 = sadd.s32 %s436, %s437
      %s439 = smul.addr %s438, 8
      %s440 = scalar_lea.vmem %s2, %s439
      %s441 = sadd.s32 %s23, 1
      %s442 = smul.u32 %s441, 8
      %p443 = scmp.lt.s32.totalorder %s442, 7
      %s444 = scalar_select %p443, %s442, 7
      %s445 = smul.u32 2, %s444
      %s446 = smul.u32 16, %s23
      %p447 = scmp.lt.s32.totalorder %s22, 1
      %s448 = scalar_select %p447, %s22, 1
      %p449 = scmp.lt.s32.totalorder %s446, 15
      %s450 = scalar_select %p449, %s446, 15
      %s451 = smul.addr %s450, 2
      %s452 = smul.addr %s448, 32
      %s453 = sadd.s32 %s451, %s452
      %s454 = smul.addr %s453, 8
      %s455 = scalar_lea.vmem %s7, %s454
      %s456 = smul.u32 16, %s23
      %vm457 = vcmask 24576
      %458 = vst.msk [vmem:[#allocation2] sm:$0x1] %vm457, 0.0
      %459 = vst.msk [vmem:[#allocation2 + $0x18] sm:$0x1] %vm457, 0.0
      %460 = vst.msk [vmem:[#allocation2 + $0x30] sm:$0x1] %vm457, 0.0
      %461 = vst.msk [vmem:[#allocation2 + $0x48] sm:$0x1] %vm457, 0.0
      %462 = vst.msk [vmem:[#allocation2 + $0x60] sm:$0x1] %vm457, 0.0
      %463 = vst.msk [vmem:[#allocation2 + $0x78] sm:$0x1] %vm457, 0.0
      %464 = vst.msk [vmem:[#allocation2 + $0x90] sm:$0x1] %vm457, 0.0
      %465 = vst.msk [vmem:[#allocation2 + $0xa8] sm:$0x1] %vm457, 0.0
      %466 = vst.msk [vmem:[#allocation2 + $0xc0] sm:$0x1] %vm457, 0.0
      %467 = vst.msk [vmem:[#allocation2 + $0xd8] sm:$0x1] %vm457, 0.0
      %468 = vst.msk [vmem:[#allocation2 + $0xf0] sm:$0x1] %vm457, 0.0
      %469 = vst.msk [vmem:[#allocation2 + $0x108] sm:$0x1] %vm457, 0.0
      %470 = vst.msk [vmem:[#allocation2 + $0x120] sm:$0x1] %vm457, 0.0
      %471 = vst.msk [vmem:[#allocation2 + $0x138] sm:$0x1] %vm457, 0.0
      %472 = vst.msk [vmem:[#allocation2 + $0x150] sm:$0x1] %vm457, 0.0
      %473 = vst.msk [vmem:[#allocation2 + $0x168] sm:$0x1] %vm457, 0.0
      %474 = vst.msk [vmem:[#allocation2 + $0x180] sm:$0x1] %vm457, 0.0
      %475 = vst.msk [vmem:[#allocation2 + $0x198] sm:$0x1] %vm457, 0.0
      %476 = vst.msk [vmem:[#allocation2 + $0x1b0] sm:$0x1] %vm457, 0.0
      %477 = vst.msk [vmem:[#allocation2 + $0x1c8] sm:$0x1] %vm457, 0.0
      %478 = vst.msk [vmem:[#allocation2 + $0x11] sm:$0x1] %vm457, 0.0
      %479 = vst.msk [vmem:[#allocation2 + $0x29] sm:$0x1] %vm457, 0.0
      %480 = vst.msk [vmem:[#allocation2 + $0x41] sm:$0x1] %vm457, 0.0
      %481 = vst.msk [vmem:[#allocation2 + $0x59] sm:$0x1] %vm457, 0.0
      %482 = vst.msk [vmem:[#allocation2 + $0x71] sm:$0x1] %vm457, 0.0
      %483 = vst.msk [vmem:[#allocation2 + $0x89] sm:$0x1] %vm457, 0.0
      %484 = vst.msk [vmem:[#allocation2 + $0xa1] sm:$0x1] %vm457, 0.0
      %485 = vst.msk [vmem:[#allocation2 + $0xb9] sm:$0x1] %vm457, 0.0
      %486 = vst.msk [vmem:[#allocation2 + $0xd1] sm:$0x1] %vm457, 0.0
      %487 = vst.msk [vmem:[#allocation2 + $0xe9] sm:$0x1] %vm457, 0.0
      %488 = vst.msk [vmem:[#allocation2 + $0x101] sm:$0x1] %vm457, 0.0
      %489 = vst.msk [vmem:[#allocation2 + $0x119] sm:$0x1] %vm457, 0.0
      %490 = vst.msk [vmem:[#allocation2 + $0x131] sm:$0x1] %vm457, 0.0
      %491 = vst.msk [vmem:[#allocation2 + $0x149] sm:$0x1] %vm457, 0.0
      %492 = vst.msk [vmem:[#allocation2 + $0x161] sm:$0x1] %vm457, 0.0
      %493 = vst.msk [vmem:[#allocation2 + $0x179] sm:$0x1] %vm457, 0.0
      %494 = vst.msk [vmem:[#allocation2 + $0x191] sm:$0x1] %vm457, 0.0
      %495 = vst.msk [vmem:[#allocation2 + $0x1a9] sm:$0x1] %vm457, 0.0
      %496 = vst.msk [vmem:[#allocation2 + $0x1c1] sm:$0x1] %vm457, 0.0
      %497 = vst.msk [vmem:[#allocation2 + $0x1d9] sm:$0x1] %vm457, 0.0
      %vm498 = vcmask 57344
      %499 = vst.msk [vmem:[#allocation3] sm:$0x1] %vm498, 0.0
      %500 = vst.msk [vmem:[#allocation3 + $0x18] sm:$0x1] %vm498, 0.0
      %501 = vst.msk [vmem:[#allocation3 + $0x30] sm:$0x1] %vm498, 0.0
      %502 = vst.msk [vmem:[#allocation3 + $0x48] sm:$0x1] %vm498, 0.0
      %503 = vst.msk [vmem:[#allocation3 + $0x60] sm:$0x1] %vm498, 0.0
      %504 = vst.msk [vmem:[#allocation3 + $0x78] sm:$0x1] %vm498, 0.0
      %505 = vst.msk [vmem:[#allocation3 + $0x90] sm:$0x1] %vm498, 0.0
      %506 = vst.msk [vmem:[#allocation3 + $0xa8] sm:$0x1] %vm498, 0.0
      %507 = vst.msk [vmem:[#allocation3 + $0xc0] sm:$0x1] %vm498, 0.0
      %508 = vst.msk [vmem:[#allocation3 + $0xd8] sm:$0x1] %vm498, 0.0
      %509 = vst.msk [vmem:[#allocation3 + $0xf0] sm:$0x1] %vm498, 0.0
      %510 = vst.msk [vmem:[#allocation3 + $0x108] sm:$0x1] %vm498, 0.0
      %511 = vst.msk [vmem:[#allocation3 + $0x120] sm:$0x1] %vm498, 0.0
      %512 = vst.msk [vmem:[#allocation3 + $0x138] sm:$0x1] %vm498, 0.0
      %513 = vst.msk [vmem:[#allocation3 + $0x150] sm:$0x1] %vm498, 0.0
      %514 = vst.msk [vmem:[#allocation3 + $0x168] sm:$0x1] %vm498, 0.0
      %515 = vst.msk [vmem:[#allocation3 + $0x180] sm:$0x1] %vm498, 0.0
      %516 = vst.msk [vmem:[#allocation3 + $0x198] sm:$0x1] %vm498, 0.0
      %517 = vst.msk [vmem:[#allocation3 + $0x11] sm:$0x1] %vm498, 0.0
      %518 = vst.msk [vmem:[#allocation3 + $0x29] sm:$0x1] %vm498, 0.0
      %519 = vst.msk [vmem:[#allocation3 + $0x41] sm:$0x1] %vm498, 0.0
      %520 = vst.msk [vmem:[#allocation3 + $0x59] sm:$0x1] %vm498, 0.0
      %521 = vst.msk [vmem:[#allocation3 + $0x71] sm:$0x1] %vm498, 0.0
      %522 = vst.msk [vmem:[#allocation3 + $0x89] sm:$0x1] %vm498, 0.0
      %523 = vst.msk [vmem:[#allocation3 + $0xa1] sm:$0x1] %vm498, 0.0
      %524 = vst.msk [vmem:[#allocation3 + $0xb9] sm:$0x1] %vm498, 0.0
      %525 = vst.msk [vmem:[#allocation3 + $0xd1] sm:$0x1] %vm498, 0.0
      %526 = vst.msk [vmem:[#allocation3 + $0xe9] sm:$0x1] %vm498, 0.0
      %527 = vst.msk [vmem:[#allocation3 + $0x101] sm:$0x1] %vm498, 0.0
      %528 = vst.msk [vmem:[#allocation3 + $0x119] sm:$0x1] %vm498, 0.0
      %529 = vst.msk [vmem:[#allocation3 + $0x131] sm:$0x1] %vm498, 0.0
      %530 = vst.msk [vmem:[#allocation3 + $0x149] sm:$0x1] %vm498, 0.0
      %531 = vst.msk [vmem:[#allocation3 + $0x161] sm:$0x1] %vm498, 0.0
      %532 = vst.msk [vmem:[#allocation3 + $0x179] sm:$0x1] %vm498, 0.0
      %533 = vst.msk [vmem:[#allocation3 + $0x191] sm:$0x1] %vm498, 0.0
      %534 = vst.msk [vmem:[#allocation3 + $0x1a9] sm:$0x1] %vm498, 0.0
      %v535 = vld [vmem:[%s406] sm:$0xff]
      %v536 = vld [vmem:[%s406 + $0x8] sm:$0xff]
      %v537 = vld [vmem:[%s406 + $0x10] sm:$0xff]
      %v538 = vld [vmem:[%s406 + $0x18] sm:$0xff]
      %v539 = vld [vmem:[%s406 + $0x20] sm:$0xff]
      %v540 = vld [vmem:[%s406 + $0x28] sm:$0xff]
      %v541 = vld [vmem:[%s406 + $0x30] sm:$0xff]
      %v542 = vld [vmem:[%s406 + $0x38] sm:$0xff]
      %v543 = vld [vmem:[%s406 + $0x40] sm:$0xff]
      %v544 = vld [vmem:[%s406 + $0x48] sm:$0xff]
      %v545 = vld [vmem:[%s406 + $0x50] sm:$0xff]
      %v546 = vld [vmem:[%s406 + $0x58] sm:$0xff]
      %v547 = vld [vmem:[%s406 + $0x60] sm:$0xff]
      %v548 = vld [vmem:[%s406 + $0x68] sm:$0xff]
      %v549 = vld [vmem:[%s406 + $0x70] sm:$0xff]
      %v550 = vld [vmem:[%s406 + $0x78] sm:$0xff]
      %v551 = vld [vmem:[%s406 + $0x80] sm:$0xff]
      %v552 = vld [vmem:[%s406 + $0x88] sm:$0xff]
      %v553 = vld [vmem:[%s406 + $0x90] sm:$0xff]
      %v554 = vld [vmem:[%s406 + $0x98] sm:$0xff]
      %v555 = vld [vmem:[%s406 + $0xa0] sm:$0xff]
      %v556 = vld [vmem:[%s406 + $0xa8] sm:$0xff]
      %v557 = vld [vmem:[%s406 + $0xb0] sm:$0xff]
      %v558 = vld [vmem:[%s406 + $0xb8] sm:$0xff]
      %v559 = vld [vmem:[%s406 + $0xc0] sm:$0xff]
      %v560 = vld [vmem:[%s406 + $0xc8] sm:$0xff]
      %v561 = vld [vmem:[%s406 + $0xd0] sm:$0xff]
      %v562 = vld [vmem:[%s406 + $0xd8] sm:$0xff]
      %v563 = vld [vmem:[%s406 + $0xe0] sm:$0xff]
      %v564 = vld [vmem:[%s406 + $0xe8] sm:$0xff]
      %v565 = vld [vmem:[%s406 + $0xf0] sm:$0xff]
      %v566 = vld [vmem:[%s406 + $0xf8] sm:$0xff]
      %s567 = scalar_lea.vmem [#allocation2], 48
      %vm568 = vcmask 31744
      %569 = vst.msk [vmem:[%s567 + $0x1] sm:$0xff] %vm568, %v535
      %570 = vst.msk [vmem:[%s567 + $0x9] sm:$0xff] %vm568, %v536
      %571 = vst.msk [vmem:[%s567 + $0x19] sm:$0xff] %vm568, %v537
      %572 = vst.msk [vmem:[%s567 + $0x21] sm:$0xff] %vm568, %v538
      %573 = vst.msk [vmem:[%s567 + $0x31] sm:$0xff] %vm568, %v539
      %574 = vst.msk [vmem:[%s567 + $0x39] sm:$0xff] %vm568, %v540
      %575 = vst.msk [vmem:[%s567 + $0x49] sm:$0xff] %vm568, %v541
      %576 = vst.msk [vmem:[%s567 + $0x51] sm:$0xff] %vm568, %v542
      %577 = vst.msk [vmem:[%s567 + $0x61] sm:$0xff] %vm568, %v543
      %578 = vst.msk [vmem:[%s567 + $0x69] sm:$0xff] %vm568, %v544
      %579 = vst.msk [vmem:[%s567 + $0x79] sm:$0xff] %vm568, %v545
      %580 = vst.msk [vmem:[%s567 + $0x81] sm:$0xff] %vm568, %v546
      %581 = vst.msk [vmem:[%s567 + $0x91] sm:$0xff] %vm568, %v547
      %582 = vst.msk [vmem:[%s567 + $0x99] sm:$0xff] %vm568, %v548
      %583 = vst.msk [vmem:[%s567 + $0xa9] sm:$0xff] %vm568, %v549
      %584 = vst.msk [vmem:[%s567 + $0xb1] sm:$0xff] %vm568, %v550
      %585 = vst.msk [vmem:[%s567 + $0xc1] sm:$0xff] %vm568, %v551
      %586 = vst.msk [vmem:[%s567 + $0xc9] sm:$0xff] %vm568, %v552
      %587 = vst.msk [vmem:[%s567 + $0xd9] sm:$0xff] %vm568, %v553
      %588 = vst.msk [vmem:[%s567 + $0xe1] sm:$0xff] %vm568, %v554
      %589 = vst.msk [vmem:[%s567 + $0xf1] sm:$0xff] %vm568, %v555
      %590 = vst.msk [vmem:[%s567 + $0xf9] sm:$0xff] %vm568, %v556
      %591 = vst.msk [vmem:[%s567 + $0x109] sm:$0xff] %vm568, %v557
      %592 = vst.msk [vmem:[%s567 + $0x111] sm:$0xff] %vm568, %v558
      %593 = vst.msk [vmem:[%s567 + $0x121] sm:$0xff] %vm568, %v559
      %594 = vst.msk [vmem:[%s567 + $0x129] sm:$0xff] %vm568, %v560
      %595 = vst.msk [vmem:[%s567 + $0x139] sm:$0xff] %vm568, %v561
      %596 = vst.msk [vmem:[%s567 + $0x141] sm:$0xff] %vm568, %v562
      %597 = vst.msk [vmem:[%s567 + $0x151] sm:$0xff] %vm568, %v563
      %598 = vst.msk [vmem:[%s567 + $0x159] sm:$0xff] %vm568, %v564
      %599 = vst.msk [vmem:[%s567 + $0x169] sm:$0xff] %vm568, %v565
      %600 = vst.msk [vmem:[%s567 + $0x171] sm:$0xff] %vm568, %v566
      %p601 = scmp.eq.s32.totalorder %s23, 0
      // Predicated region
      $region49: #{tpu_custom_call.1} parent=47 // pred_check
        %p602 = pneg %p601
      $region50: #{tpu_custom_call.1} parent=47 // pred_check_branch
        %604 = sbr.rel (%p602) target = $region52
      $region51: #{tpu_custom_call.1} parent=47 // pred_region
        %605 = vst.msk [vmem:[#allocation2 + $0x1] sm:$0xff] %vm568, 0.0
        %606 = vst.msk [vmem:[#allocation2 + $0x9] sm:$0xff] %vm568, 0.0
        %607 = vst.msk [vmem:[#allocation2 + $0x19] sm:$0xff] %vm568, 0.0
        %608 = vst.msk [vmem:[#allocation2 + $0x21] sm:$0xff] %vm568, 0.0
      $region52: #{tpu_custom_call.1} parent=47 // pred_fallthru
        _
      %p609 = scmp.gt.s32.totalorder %s23, 0
      // Predicated region
      $region53: #{tpu_custom_call.1} parent=47 // pred_check
        %p610 = pneg %p609
      $region54: #{tpu_custom_call.1} parent=47 // pred_check_branch
        %612 = sbr.rel (%p610) target = $region56
      $region55: #{tpu_custom_call.1} parent=47 // pred_region
        %v613 = vld [vmem:[%s421] sm:$0xff]
        %v614 = vld [vmem:[%s421 + $0x8] sm:$0xff]
        %v615 = vld [vmem:[%s421 + $0x10] sm:$0xff]
        %v616 = vld [vmem:[%s421 + $0x18] sm:$0xff]
        %617 = vst.msk [vmem:[#allocation2 + $0x1] sm:$0xff] %vm568, %v613
        %618 = vst.msk [vmem:[#allocation2 + $0x9] sm:$0xff] %vm568, %v614
        %619 = vst.msk [vmem:[#allocation2 + $0x19] sm:$0xff] %vm568, %v615
        %620 = vst.msk [vmem:[#allocation2 + $0x21] sm:$0xff] %vm568, %v616
      $region56: #{tpu_custom_call.1} parent=47 // pred_fallthru
        _
      // Predicated region
      $region57: #{tpu_custom_call.1} parent=47 // pred_check
        %p621 = pneg %p601
      $region58: #{tpu_custom_call.1} parent=47 // pred_check_branch
        %623 = sbr.rel (%p621) target = $region60
      $region59: #{tpu_custom_call.1} parent=47 // pred_region
        %s624 = scalar_lea.vmem [#allocation2], 432
        %625 = vst.msk [vmem:[%s624 + $0x1] sm:$0xff] %vm568, 0.0
        %626 = vst.msk [vmem:[%s624 + $0x9] sm:$0xff] %vm568, 0.0
        %627 = vst.msk [vmem:[%s624 + $0x19] sm:$0xff] %vm568, 0.0
        %628 = vst.msk [vmem:[%s624 + $0x21] sm:$0xff] %vm568, 0.0
      $region60: #{tpu_custom_call.1} parent=47 // pred_fallthru
        _
      %p629 = scmp.lt.s32.totalorder %s23, 0
      // Predicated region
      $region61: #{tpu_custom_call.1} parent=47 // pred_check
        %p630 = pneg %p629
      $region62: #{tpu_custom_call.1} parent=47 // pred_check_branch
        %632 = sbr.rel (%p630) target = $region64
      $region63: #{tpu_custom_call.1} parent=47 // pred_region
        %v633 = vld [vmem:[%s440] sm:$0xff]
        %v634 = vld [vmem:[%s440 + $0x8] sm:$0xff]
        %v635 = vld [vmem:[%s440 + $0x10] sm:$0xff]
        %v636 = vld [vmem:[%s440 + $0x18] sm:$0xff]
        %s637 = scalar_lea.vmem [#allocation2], 432
        %638 = vst.msk [vmem:[%s637 + $0x1] sm:$0xff] %vm568, %v633
        %639 = vst.msk [vmem:[%s637 + $0x9] sm:$0xff] %vm568, %v634
        %640 = vst.msk [vmem:[%s637 + $0x19] sm:$0xff] %vm568, %v635
        %641 = vst.msk [vmem:[%s637 + $0x21] sm:$0xff] %vm568, %v636
      $region64: #{tpu_custom_call.1} parent=47 // pred_fallthru
        _
      %v642 = vld [vmem:[#allocation2] sm:$0xff]
      %v643 = vld [vmem:[#allocation2 + $0x8] sm:$0xff]
      %v644 = vld [vmem:[#allocation2 + $0x10] sm:$0x3]
      %v645 = vld [vmem:[#allocation2 + $0x18] sm:$0xff]
      %v646 = vld [vmem:[#allocation2 + $0x20] sm:$0xff]
      %v647 = vld [vmem:[#allocation2 + $0x28] sm:$0x3]
      %v648 = vld [vmem:[#allocation2 + $0x30] sm:$0xff]
      %v649 = vld [vmem:[#allocation2 + $0x38] sm:$0xff]
      %v650 = vld [vmem:[#allocation2 + $0x40] sm:$0x3]
      %v651 = vld [vmem:[#allocation2 + $0x48] sm:$0xff]
      %v652 = vld [vmem:[#allocation2 + $0x50] sm:$0xff]
      %v653 = vld [vmem:[#allocation2 + $0x58] sm:$0x3]
      %v654 = vld [vmem:[#allocation2 + $0x60] sm:$0xff]
      %v655 = vld [vmem:[#allocation2 + $0x68] sm:$0xff]
      %v656 = vld [vmem:[#allocation2 + $0x70] sm:$0x3]
      %v657 = vld [vmem:[#allocation2 + $0x78] sm:$0xff]
      %v658 = vld [vmem:[#allocation2 + $0x80] sm:$0xff]
      %v659 = vld [vmem:[#allocation2 + $0x88] sm:$0x3]
      %v660 = vld [vmem:[#allocation2 + $0x90] sm:$0xff]
      %v661 = vld [vmem:[#allocation2 + $0x98] sm:$0xff]
      %v662 = vld [vmem:[#allocation2 + $0xa0] sm:$0x3]
      %v663 = vld [vmem:[#allocation2 + $0xa8] sm:$0xff]
      %v664 = vld [vmem:[#allocation2 + $0xb0] sm:$0xff]
      %v665 = vld [vmem:[#allocation2 + $0xb8] sm:$0x3]
      %v666 = vld [vmem:[#allocation2 + $0xc0] sm:$0xff]
      %v667 = vld [vmem:[#allocation2 + $0xc8] sm:$0xff]
      %v668 = vld [vmem:[#allocation2 + $0xd0] sm:$0x3]
      %v669 = vld [vmem:[#allocation2 + $0xd8] sm:$0xff]
      %v670 = vld [vmem:[#allocation2 + $0xe0] sm:$0xff]
      %v671 = vld [vmem:[#allocation2 + $0xe8] sm:$0x3]
      %v672 = vld [vmem:[#allocation2 + $0xf0] sm:$0xff]
      %v673 = vld [vmem:[#allocation2 + $0xf8] sm:$0xff]
      %v674 = vld [vmem:[#allocation2 + $0x100] sm:$0x3]
      %v675 = vld [vmem:[#allocation2 + $0x108] sm:$0xff]
      %v676 = vld [vmem:[#allocation2 + $0x110] sm:$0xff]
      %v677 = vld [vmem:[#allocation2 + $0x118] sm:$0x3]
      %v678 = vld [vmem:[#allocation2 + $0x120] sm:$0xff]
      %v679 = vld [vmem:[#allocation2 + $0x128] sm:$0xff]
      %v680 = vld [vmem:[#allocation2 + $0x130] sm:$0x3]
      %v681 = vld [vmem:[#allocation2 + $0x138] sm:$0xff]
      %v682 = vld [vmem:[#allocation2 + $0x140] sm:$0xff]
      %v683 = vld [vmem:[#allocation2 + $0x148] sm:$0x3]
      %v684 = vld [vmem:[#allocation2 + $0x150] sm:$0xff]
      %v685 = vld [vmem:[#allocation2 + $0x158] sm:$0xff]
      %v686 = vld [vmem:[#allocation2 + $0x160] sm:$0x3]
      %v687 = vld [vmem:[#allocation2 + $0x168] sm:$0xff]
      %v688 = vld [vmem:[#allocation2 + $0x170] sm:$0xff]
      %v689 = vld [vmem:[#allocation2 + $0x178] sm:$0x3]
      %v690 = vld [vmem:[#allocation2 + $0x180] sm:$0xff]
      %v691 = vld [vmem:[#allocation2 + $0x188] sm:$0xff]
      %v692 = vld [vmem:[#allocation2 + $0x190] sm:$0x3]
      %v693 = vld [vmem:[#allocation2 + $0x198] sm:$0xff]
      %v694 = vld [vmem:[#allocation2 + $0x1a0] sm:$0xff]
      %v695 = vld [vmem:[#allocation2 + $0x1a8] sm:$0x3]
      %v696 = vld [vmem:[#allocation2 + $0x1b0] sm:$0xff]
      %v697 = vld [vmem:[#allocation2 + $0x1b8] sm:$0xff]
      %v698 = vld [vmem:[#allocation2 + $0x1c0] sm:$0x3]
      %v699 = vld [vmem:[#allocation2 + $0x1c8] sm:$0xff]
      %v700 = vld [vmem:[#allocation2 + $0x1d0] sm:$0xff]
      %v701 = vld [vmem:[#allocation2 + $0x1d8] sm:$0x3]
      %vm756 = vcmask 1046528
      %v757 = vrot.slane %v642, 1
      %v758 = vrot.slane %v643, 1
      %v759 = vsel %vm756, %v757, %v758
      %v760 = vrot.slane %v644, 1
      %v761 = vsel %vm756, %v758, %v760
      %v762 = vrot.slane %v645, 1
      %v763 = vrot.slane %v646, 1
      %v764 = vsel %vm756, %v762, %v763
      %v765 = vrot.slane %v647, 1
      %v766 = vsel %vm756, %v763, %v765
      %v767 = vrot.slane %v648, 1
      %v768 = vrot.slane %v649, 1
      %v769 = vsel %vm756, %v767, %v768
      %v770 = vrot.slane %v650, 1
      %v771 = vsel %vm756, %v768, %v770
      %v772 = vrot.slane %v651, 1
      %v773 = vrot.slane %v652, 1
      %v774 = vsel %vm756, %v772, %v773
      %v775 = vrot.slane %v653, 1
      %v776 = vsel %vm756, %v773, %v775
      %v777 = vrot.slane %v654, 1
      %v778 = vrot.slane %v655, 1
      %v779 = vsel %vm756, %v777, %v778
      %v780 = vrot.slane %v656, 1
      %v781 = vsel %vm756, %v778, %v780
      %v782 = vrot.slane %v657, 1
      %v783 = vrot.slane %v658, 1
      %v784 = vsel %vm756, %v782, %v783
      %v785 = vrot.slane %v659, 1
      %v786 = vsel %vm756, %v783, %v785
      %v787 = vrot.slane %v660, 1
      %v788 = vrot.slane %v661, 1
      %v789 = vsel %vm756, %v787, %v788
      %v790 = vrot.slane %v662, 1
      %v791 = vsel %vm756, %v788, %v790
      %v792 = vrot.slane %v663, 1
      %v793 = vrot.slane %v664, 1
      %v794 = vsel %vm756, %v792, %v793
      %v795 = vrot.slane %v665, 1
      %v796 = vsel %vm756, %v793, %v795
      %v797 = vrot.slane %v666, 1
      %v798 = vrot.slane %v667, 1
      %v799 = vsel %vm756, %v797, %v798
      %v800 = vrot.slane %v668, 1
      %v801 = vsel %vm756, %v798, %v800
      %v802 = vrot.slane %v669, 1
      %v803 = vrot.slane %v670, 1
      %v804 = vsel %vm756, %v802, %v803
      %v805 = vrot.slane %v671, 1
      %v806 = vsel %vm756, %v803, %v805
      %v807 = vrot.slane %v672, 1
      %v808 = vrot.slane %v673, 1
      %v809 = vsel %vm756, %v807, %v808
      %v810 = vrot.slane %v674, 1
      %v811 = vsel %vm756, %v808, %v810
      %v812 = vrot.slane %v675, 1
      %v813 = vrot.slane %v676, 1
      %v814 = vsel %vm756, %v812, %v813
      %v815 = vrot.slane %v677, 1
      %v816 = vsel %vm756, %v813, %v815
      %v817 = vrot.slane %v678, 1
      %v818 = vrot.slane %v679, 1
      %v819 = vsel %vm756, %v817, %v818
      %v820 = vrot.slane %v680, 1
      %v821 = vsel %vm756, %v818, %v820
      %v822 = vrot.slane %v681, 1
      %v823 = vrot.slane %v682, 1
      %v824 = vsel %vm756, %v822, %v823
      %v825 = vrot.slane %v683, 1
      %v826 = vsel %vm756, %v823, %v825
      %v827 = vrot.slane %v684, 1
      %v828 = vrot.slane %v685, 1
      %v829 = vsel %vm756, %v827, %v828
      %v830 = vrot.slane %v686, 1
      %v831 = vsel %vm756, %v828, %v830
      %v832 = vrot.slane %v687, 1
      %v833 = vrot.slane %v688, 1
      %v834 = vsel %vm756, %v832, %v833
      %v835 = vrot.slane %v689, 1
      %v836 = vsel %vm756, %v833, %v835
      %v837 = vrot.slane %v690, 1
      %v838 = vrot.slane %v691, 1
      %v839 = vsel %vm756, %v837, %v838
      %v840 = vrot.slane %v692, 1
      %v841 = vsel %vm756, %v838, %v840
      %v842 = vrot.slane %v693, 1
      %v843 = vrot.slane %v694, 1
      %v844 = vsel %vm756, %v842, %v843
      %v845 = vrot.slane %v695, 1
      %v846 = vsel %vm756, %v843, %v845
      %847 = vrot.lane.b32.xlu0 %v759, 4
      %v848 = vpop.permute.xlu0 %847
      %849 = vrot.lane.b32.xlu0 %v761, 4
      %v850 = vpop.permute.xlu0 %849
      %851 = vrot.lane.b32.xlu0 %v764, 4
      %v852 = vpop.permute.xlu0 %851
      %853 = vrot.lane.b32.xlu0 %v766, 4
      %v854 = vpop.permute.xlu0 %853
      %855 = vrot.lane.b32.xlu0 %v769, 4
      %v856 = vpop.permute.xlu0 %855
      %857 = vrot.lane.b32.xlu0 %v771, 4
      %v858 = vpop.permute.xlu0 %857
      %859 = vrot.lane.b32.xlu0 %v774, 4
      %v860 = vpop.permute.xlu0 %859
      %861 = vrot.lane.b32.xlu0 %v776, 4
      %v862 = vpop.permute.xlu0 %861
      %863 = vrot.lane.b32.xlu0 %v779, 4
      %v864 = vpop.permute.xlu0 %863
      %865 = vrot.lane.b32.xlu0 %v781, 4
      %v866 = vpop.permute.xlu0 %865
      %867 = vrot.lane.b32.xlu0 %v784, 4
      %v868 = vpop.permute.xlu0 %867
      %869 = vrot.lane.b32.xlu0 %v786, 4
      %v870 = vpop.permute.xlu0 %869
      %871 = vrot.lane.b32.xlu0 %v789, 4
      %v872 = vpop.permute.xlu0 %871
      %873 = vrot.lane.b32.xlu0 %v791, 4
      %v874 = vpop.permute.xlu0 %873
      %875 = vrot.lane.b32.xlu0 %v794, 4
      %v876 = vpop.permute.xlu0 %875
      %877 = vrot.lane.b32.xlu0 %v796, 4
      %v878 = vpop.permute.xlu0 %877
      %879 = vrot.lane.b32.xlu0 %v799, 4
      %v880 = vpop.permute.xlu0 %879
      %881 = vrot.lane.b32.xlu0 %v801, 4
      %v882 = vpop.permute.xlu0 %881
      %883 = vrot.lane.b32.xlu0 %v804, 4
      %v884 = vpop.permute.xlu0 %883
      %885 = vrot.lane.b32.xlu0 %v806, 4
      %v886 = vpop.permute.xlu0 %885
      %887 = vrot.lane.b32.xlu0 %v809, 4
      %v888 = vpop.permute.xlu0 %887
      %889 = vrot.lane.b32.xlu0 %v811, 4
      %v890 = vpop.permute.xlu0 %889
      %891 = vrot.lane.b32.xlu0 %v814, 4
      %v892 = vpop.permute.xlu0 %891
      %893 = vrot.lane.b32.xlu0 %v816, 4
      %v894 = vpop.permute.xlu0 %893
      %895 = vrot.lane.b32.xlu0 %v819, 4
      %v896 = vpop.permute.xlu0 %895
      %897 = vrot.lane.b32.xlu0 %v821, 4
      %v898 = vpop.permute.xlu0 %897
      %899 = vrot.lane.b32.xlu0 %v824, 4
      %v900 = vpop.permute.xlu0 %899
      %901 = vrot.lane.b32.xlu0 %v826, 4
      %v902 = vpop.permute.xlu0 %901
      %903 = vrot.lane.b32.xlu0 %v829, 4
      %v904 = vpop.permute.xlu0 %903
      %905 = vrot.lane.b32.xlu0 %v831, 4
      %v906 = vpop.permute.xlu0 %905
      %907 = vrot.lane.b32.xlu0 %v834, 4
      %v908 = vpop.permute.xlu0 %907
      %909 = vrot.lane.b32.xlu0 %v836, 4
      %v910 = vpop.permute.xlu0 %909
      %911 = vrot.lane.b32.xlu0 %v839, 4
      %v912 = vpop.permute.xlu0 %911
      %913 = vrot.lane.b32.xlu0 %v841, 4
      %v914 = vpop.permute.xlu0 %913
      %915 = vrot.lane.b32.xlu0 %v844, 4
      %v916 = vpop.permute.xlu0 %915
      %917 = vrot.lane.b32.xlu0 %v846, 4
      %v918 = vpop.permute.xlu0 %917
      %vm955 = vcmask 1045504
      %v956 = vrot.slane %v642, 2
      %v957 = vrot.slane %v643, 2
      %v958 = vsel %vm955, %v956, %v957
      %v959 = vrot.slane %v644, 2
      %v960 = vsel %vm955, %v957, %v959
      %v961 = vrot.slane %v645, 2
      %v962 = vrot.slane %v646, 2
      %v963 = vsel %vm955, %v961, %v962
      %v964 = vrot.slane %v647, 2
      %v965 = vsel %vm955, %v962, %v964
      %v966 = vrot.slane %v648, 2
      %v967 = vrot.slane %v649, 2
      %v968 = vsel %vm955, %v966, %v967
      %v969 = vrot.slane %v650, 2
      %v970 = vsel %vm955, %v967, %v969
      %v971 = vrot.slane %v651, 2
      %v972 = vrot.slane %v652, 2
      %v973 = vsel %vm955, %v971, %v972
      %v974 = vrot.slane %v653, 2
      %v975 = vsel %vm955, %v972, %v974
      %v976 = vrot.slane %v654, 2
      %v977 = vrot.slane %v655, 2
      %v978 = vsel %vm955, %v976, %v977
      %v979 = vrot.slane %v656, 2
      %v980 = vsel %vm955, %v977, %v979
      %v981 = vrot.slane %v657, 2
      %v982 = vrot.slane %v658, 2
      %v983 = vsel %vm955, %v981, %v982
      %v984 = vrot.slane %v659, 2
      %v985 = vsel %vm955, %v982, %v984
      %v986 = vrot.slane %v660, 2
      %v987 = vrot.slane %v661, 2
      %v988 = vsel %vm955, %v986, %v987
      %v989 = vrot.slane %v662, 2
      %v990 = vsel %vm955, %v987, %v989
      %v991 = vrot.slane %v663, 2
      %v992 = vrot.slane %v664, 2
      %v993 = vsel %vm955, %v991, %v992
      %v994 = vrot.slane %v665, 2
      %v995 = vsel %vm955, %v992, %v994
      %v996 = vrot.slane %v666, 2
      %v997 = vrot.slane %v667, 2
      %v998 = vsel %vm955, %v996, %v997
      %v999 = vrot.slane %v668, 2
      %v1000 = vsel %vm955, %v997, %v999
      %v1001 = vrot.slane %v669, 2
      %v1002 = vrot.slane %v670, 2
      %v1003 = vsel %vm955, %v1001, %v1002
      %v1004 = vrot.slane %v671, 2
      %v1005 = vsel %vm955, %v1002, %v1004
      %v1006 = vrot.slane %v672, 2
      %v1007 = vrot.slane %v673, 2
      %v1008 = vsel %vm955, %v1006, %v1007
      %v1009 = vrot.slane %v674, 2
      %v1010 = vsel %vm955, %v1007, %v1009
      %v1011 = vrot.slane %v675, 2
      %v1012 = vrot.slane %v676, 2
      %v1013 = vsel %vm955, %v1011, %v1012
      %v1014 = vrot.slane %v677, 2
      %v1015 = vsel %vm955, %v1012, %v1014
      %v1016 = vrot.slane %v678, 2
      %v1017 = vrot.slane %v679, 2
      %v1018 = vsel %vm955, %v1016, %v1017
      %v1019 = vrot.slane %v680, 2
      %v1020 = vsel %vm955, %v1017, %v1019
      %v1021 = vrot.slane %v681, 2
      %v1022 = vrot.slane %v682, 2
      %v1023 = vsel %vm955, %v1021, %v1022
      %v1024 = vrot.slane %v683, 2
      %v1025 = vsel %vm955, %v1022, %v1024
      %v1026 = vrot.slane %v684, 2
      %v1027 = vrot.slane %v685, 2
      %v1028 = vsel %vm955, %v1026, %v1027
      %v1029 = vrot.slane %v686, 2
      %v1030 = vsel %vm955, %v1027, %v1029
      %v1031 = vrot.slane %v687, 2
      %v1032 = vrot.slane %v688, 2
      %v1033 = vsel %vm955, %v1031, %v1032
      %v1034 = vrot.slane %v689, 2
      %v1035 = vsel %vm955, %v1032, %v1034
      %v1036 = vrot.slane %v690, 2
      %v1037 = vrot.slane %v691, 2
      %v1038 = vsel %vm955, %v1036, %v1037
      %v1039 = vrot.slane %v692, 2
      %v1040 = vsel %vm955, %v1037, %v1039
      %v1041 = vrot.slane %v693, 2
      %v1042 = vrot.slane %v694, 2
      %v1043 = vsel %vm955, %v1041, %v1042
      %v1044 = vrot.slane %v695, 2
      %v1045 = vsel %vm955, %v1042, %v1044
      %1046 = vrot.lane.b32.xlu0 %v958, 8
      %v1047 = vpop.permute.xlu0 %1046
      %1048 = vrot.lane.b32.xlu0 %v960, 8
      %v1049 = vpop.permute.xlu0 %1048
      %1050 = vrot.lane.b32.xlu0 %v963, 8
      %v1051 = vpop.permute.xlu0 %1050
      %1052 = vrot.lane.b32.xlu0 %v965, 8
      %v1053 = vpop.permute.xlu0 %1052
      %1054 = vrot.lane.b32.xlu0 %v968, 8
      %v1055 = vpop.permute.xlu0 %1054
      %1056 = vrot.lane.b32.xlu0 %v970, 8
      %v1057 = vpop.permute.xlu0 %1056
      %1058 = vrot.lane.b32.xlu0 %v973, 8
      %v1059 = vpop.permute.xlu0 %1058
      %1060 = vrot.lane.b32.xlu0 %v975, 8
      %v1061 = vpop.permute.xlu0 %1060
      %1062 = vrot.lane.b32.xlu0 %v978, 8
      %v1063 = vpop.permute.xlu0 %1062
      %1064 = vrot.lane.b32.xlu0 %v980, 8
      %v1065 = vpop.permute.xlu0 %1064
      %1066 = vrot.lane.b32.xlu0 %v983, 8
      %v1067 = vpop.permute.xlu0 %1066
      %1068 = vrot.lane.b32.xlu0 %v985, 8
      %v1069 = vpop.permute.xlu0 %1068
      %1070 = vrot.lane.b32.xlu0 %v988, 8
      %v1071 = vpop.permute.xlu0 %1070
      %1072 = vrot.lane.b32.xlu0 %v990, 8
      %v1073 = vpop.permute.xlu0 %1072
      %1074 = vrot.lane.b32.xlu0 %v993, 8
      %v1075 = vpop.permute.xlu0 %1074
      %1076 = vrot.lane.b32.xlu0 %v995, 8
      %v1077 = vpop.permute.xlu0 %1076
      %1078 = vrot.lane.b32.xlu0 %v998, 8
      %v1079 = vpop.permute.xlu0 %1078
      %1080 = vrot.lane.b32.xlu0 %v1000, 8
      %v1081 = vpop.permute.xlu0 %1080
      %1082 = vrot.lane.b32.xlu0 %v1003, 8
      %v1083 = vpop.permute.xlu0 %1082
      %1084 = vrot.lane.b32.xlu0 %v1005, 8
      %v1085 = vpop.permute.xlu0 %1084
      %1086 = vrot.lane.b32.xlu0 %v1008, 8
      %v1087 = vpop.permute.xlu0 %1086
      %1088 = vrot.lane.b32.xlu0 %v1010, 8
      %v1089 = vpop.permute.xlu0 %1088
      %1090 = vrot.lane.b32.xlu0 %v1013, 8
      %v1091 = vpop.permute.xlu0 %1090
      %1092 = vrot.lane.b32.xlu0 %v1015, 8
      %v1093 = vpop.permute.xlu0 %1092
      %1094 = vrot.lane.b32.xlu0 %v1018, 8
      %v1095 = vpop.permute.xlu0 %1094
      %1096 = vrot.lane.b32.xlu0 %v1020, 8
      %v1097 = vpop.permute.xlu0 %1096
      %1098 = vrot.lane.b32.xlu0 %v1023, 8
      %v1099 = vpop.permute.xlu0 %1098
      %1100 = vrot.lane.b32.xlu0 %v1025, 8
      %v1101 = vpop.permute.xlu0 %1100
      %1102 = vrot.lane.b32.xlu0 %v1028, 8
      %v1103 = vpop.permute.xlu0 %1102
      %1104 = vrot.lane.b32.xlu0 %v1030, 8
      %v1105 = vpop.permute.xlu0 %1104
      %1106 = vrot.lane.b32.xlu0 %v1033, 8
      %v1107 = vpop.permute.xlu0 %1106
      %1108 = vrot.lane.b32.xlu0 %v1035, 8
      %v1109 = vpop.permute.xlu0 %1108
      %1110 = vrot.lane.b32.xlu0 %v1038, 8
      %v1111 = vpop.permute.xlu0 %1110
      %1112 = vrot.lane.b32.xlu0 %v1040, 8
      %v1113 = vpop.permute.xlu0 %1112
      %1114 = vrot.lane.b32.xlu0 %v1043, 8
      %v1115 = vpop.permute.xlu0 %1114
      %1116 = vrot.lane.b32.xlu0 %v1045, 8
      %v1117 = vpop.permute.xlu0 %1116
      %v1154 = vsel %vm568, %v642, %v848
      %v1155 = vsel %vm568, %v643, %v850
      %v1156 = vsel %vm568, %v645, %v852
      %v1157 = vsel %vm568, %v646, %v854
      %v1158 = vsel %vm568, %v648, %v856
      %v1159 = vsel %vm568, %v649, %v858
      %v1160 = vsel %vm568, %v651, %v860
      %v1161 = vsel %vm568, %v652, %v862
      %v1162 = vsel %vm568, %v654, %v864
      %v1163 = vsel %vm568, %v655, %v866
      %v1164 = vsel %vm568, %v657, %v868
      %v1165 = vsel %vm568, %v658, %v870
      %v1166 = vsel %vm568, %v660, %v872
      %v1167 = vsel %vm568, %v661, %v874
      %v1168 = vsel %vm568, %v663, %v876
      %v1169 = vsel %vm568, %v664, %v878
      %v1170 = vsel %vm568, %v666, %v880
      %v1171 = vsel %vm568, %v667, %v882
      %v1172 = vsel %vm568, %v669, %v884
      %v1173 = vsel %vm568, %v670, %v886
      %v1174 = vsel %vm568, %v672, %v888
      %v1175 = vsel %vm568, %v673, %v890
      %v1176 = vsel %vm568, %v675, %v892
      %v1177 = vsel %vm568, %v676, %v894
      %v1178 = vsel %vm568, %v678, %v896
      %v1179 = vsel %vm568, %v679, %v898
      %v1180 = vsel %vm568, %v681, %v900
      %v1181 = vsel %vm568, %v682, %v902
      %v1182 = vsel %vm568, %v684, %v904
      %v1183 = vsel %vm568, %v685, %v906
      %v1184 = vsel %vm568, %v687, %v908
      %v1185 = vsel %vm568, %v688, %v910
      %v1186 = vsel %vm568, %v690, %v912
      %v1187 = vsel %vm568, %v691, %v914
      %v1188 = vsel %vm568, %v693, %v916
      %v1189 = vsel %vm568, %v694, %v918
      %vm1190 = vcmask 64512
      %v1191 = vsel %vm1190, %v1154, %v1047
      %v1192 = vsel %vm1190, %v1155, %v1049
      %v1193 = vsel %vm1190, %v1156, %v1051
      %v1194 = vsel %vm1190, %v1157, %v1053
      %v1195 = vsel %vm1190, %v1158, %v1055
      %v1196 = vsel %vm1190, %v1159, %v1057
      %v1197 = vsel %vm1190, %v1160, %v1059
      %v1198 = vsel %vm1190, %v1161, %v1061
      %v1199 = vsel %vm1190, %v1162, %v1063
      %v1200 = vsel %vm1190, %v1163, %v1065
      %v1201 = vsel %vm1190, %v1164, %v1067
      %v1202 = vsel %vm1190, %v1165, %v1069
      %v1203 = vsel %vm1190, %v1166, %v1071
      %v1204 = vsel %vm1190, %v1167, %v1073
      %v1205 = vsel %vm1190, %v1168, %v1075
      %v1206 = vsel %vm1190, %v1169, %v1077
      %v1207 = vsel %vm1190, %v1170, %v1079
      %v1208 = vsel %vm1190, %v1171, %v1081
      %v1209 = vsel %vm1190, %v1172, %v1083
      %v1210 = vsel %vm1190, %v1173, %v1085
      %v1211 = vsel %vm1190, %v1174, %v1087
      %v1212 = vsel %vm1190, %v1175, %v1089
      %v1213 = vsel %vm1190, %v1176, %v1091
      %v1214 = vsel %vm1190, %v1177, %v1093
      %v1215 = vsel %vm1190, %v1178, %v1095
      %v1216 = vsel %vm1190, %v1179, %v1097
      %v1217 = vsel %vm1190, %v1180, %v1099
      %v1218 = vsel %vm1190, %v1181, %v1101
      %v1219 = vsel %vm1190, %v1182, %v1103
      %v1220 = vsel %vm1190, %v1183, %v1105
      %v1221 = vsel %vm1190, %v1184, %v1107
      %v1222 = vsel %vm1190, %v1185, %v1109
      %v1223 = vsel %vm1190, %v1186, %v1111
      %v1224 = vsel %vm1190, %v1187, %v1113
      %v1225 = vsel %vm1190, %v1188, %v1115
      %v1226 = vsel %vm1190, %v1189, %v1117
      %v1227 = vld [vmem:[%s3] sm:$0xff]
      %v1228 = vld [vmem:[%s3 + $0x8] sm:$0xf]
      %v1232 = vrot.slane %v696, 1
      %v1233 = vrot.slane %v697, 1
      %v1234 = vsel %vm756, %v1232, %v1233
      %v1235 = vrot.slane %v698, 1
      %v1236 = vsel %vm756, %v1233, %v1235
      %1237 = vrot.lane.b32.xlu0 %v1234, 4
      %v1238 = vpop.permute.xlu0 %1237
      %1239 = vrot.lane.b32.xlu0 %v1236, 4
      %v1240 = vpop.permute.xlu0 %1239
      %v1243 = vrot.slane %v696, 2
      %v1244 = vrot.slane %v697, 2
      %v1245 = vsel %vm955, %v1243, %v1244
      %v1246 = vrot.slane %v698, 2
      %v1247 = vsel %vm955, %v1244, %v1246
      %1248 = vrot.lane.b32.xlu0 %v1245, 8
      %v1249 = vpop.permute.xlu0 %1248
      %1250 = vrot.lane.b32.xlu0 %v1247, 8
      %v1251 = vpop.permute.xlu0 %1250
      %v1254 = vsel %vm568, %v696, %v1238
      %v1255 = vsel %vm568, %v697, %v1240
      %v1256 = vsel %vm1190, %v1254, %v1249
      %v1257 = vsel %vm1190, %v1255, %v1251
      %s1258 = scalar_lea.vmem %s3, 16
      %v1259 = vld [vmem:[%s1258] sm:$0xff]
      %v1260 = vld [vmem:[%s1258 + $0x8] sm:$0xf]
      %vm1261 = vcmask 97280
      %v1263 = vsel %vm1261, %v1193, 0
      %v1266 = vsel %vm1261, %v1194, 0
      %v1269 = vsel %vm1261, %v1195, 0
      %v1272 = vsel %vm1261, %v1196, 0
      %v1275 = vsel %vm1261, %v1197, 0
      %v1278 = vsel %vm1261, %v1198, 0
      %v1281 = vsel %vm1261, %v1199, 0
      %v1284 = vsel %vm1261, %v1200, 0
      %v1287 = vsel %vm1261, %v1201, 0
      %v1290 = vsel %vm1261, %v1202, 0
      %v1293 = vsel %vm1261, %v1203, 0
      %v1296 = vsel %vm1261, %v1204, 0
      %v1299 = vsel %vm1261, %v1205, 0
      %v1302 = vsel %vm1261, %v1206, 0
      %v1305 = vsel %vm1261, %v1207, 0
      %v1308 = vsel %vm1261, %v1208, 0
      %v1311 = vsel %vm1261, %v1209, 0
      %v1314 = vsel %vm1261, %v1210, 0
      %v1317 = vsel %vm1261, %v1211, 0
      %v1320 = vsel %vm1261, %v1212, 0
      %v1323 = vsel %vm1261, %v1213, 0
      %v1326 = vsel %vm1261, %v1214, 0
      %v1329 = vsel %vm1261, %v1215, 0
      %v1332 = vsel %vm1261, %v1216, 0
      %v1335 = vsel %vm1261, %v1217, 0
      %v1338 = vsel %vm1261, %v1218, 0
      %v1341 = vsel %vm1261, %v1219, 0
      %v1344 = vsel %vm1261, %v1220, 0
      %v1347 = vsel %vm1261, %v1221, 0
      %v1350 = vsel %vm1261, %v1222, 0
      %v1353 = vsel %vm1261, %v1223, 0
      %v1356 = vsel %vm1261, %v1224, 0
      %v1359 = vsel %vm1261, %v1225, 0
      %v1362 = vsel %vm1261, %v1226, 0
      %v1365 = vsel %vm1261, %v1256, 0
      %v1368 = vsel %vm1261, %v1257, 0
      %vm1370 = vcmask 1043456
      %v1372 = vsel %vm1370, %v1260, 0
      %1374 = vmatprep.subr.mxu0 0.0
      %1375 = vmatpush1.msra.mxu0 0.0
      %1376 = vmatprep.subr.mxu0 0.0
      %1377 = vmatpush1.msra.mxu0 0.0
      %1378 = vmatprep.subr.mxu0 0.0
      %1379 = vmatpush1.msra.mxu0 0.0
      %1380 = vmatprep.subr.mxu0 0.0
      %1381 = vmatpush1.msra.mxu0 0.0
      %1382 = vmatprep.subr.mxu0 0.0
      %1383 = vmatpush1.msra.mxu0 0.0
      %1384 = vmatprep.subr.mxu0 0.0
      %1385 = vmatpush1.msra.mxu0 0.0
      %1386 = vmatprep.subr.mxu0 0.0
      %1387 = vmatpush1.msra.mxu0 0.0
      %1388 = vmatprep.subr.mxu0 0.0
      %1389 = vmatpush1.msra.mxu0 0.0
      %1390 = vmatprep.subr.mxu0 0.0
      %1391 = vmatpush1.msra.mxu0 0.0
      %1392 = vmatprep.subr.mxu0 0.0
      %1393 = vmatpush1.msra.mxu0 0.0
      %1394 = vmatprep.subr.mxu0 0.0
      %1395 = vmatpush1.msra.mxu0 0.0
      %1396 = vmatprep.subr.mxu0 0.0
      %1397 = vmatpush1.msra.mxu0 0.0
      %1398 = vmatprep.subr.mxu0 0.0
      %1399 = vmatpush1.msra.mxu0 0.0
      %1400 = vmatprep.subr.mxu0 0.0
      %1401 = vmatpush1.msra.mxu0 0.0
      %1402 = vmatprep.subr.mxu0 0.0
      %1403 = vmatpush1.msra.mxu0 %v1372
      %1404 = vmatprep.subr.mxu0 0.0
      %1405 = vmatpush1.msra.mxu0 %v1259
      %1406 = vmatprep.subr.mxu0 0.0
      %1407 = vmatpush2.msra.mxu0 0.0
      %1408 = vmatprep.subr.mxu0 0.0
      %1409 = vmatpush2.msra.mxu0 0.0
      %1410 = vmatprep.subr.mxu0 0.0
      %1411 = vmatpush2.msra.mxu0 0.0
      %1412 = vmatprep.subr.mxu0 0.0
      %1413 = vmatpush2.msra.mxu0 0.0
      %1414 = vmatprep.subr.mxu0 0.0
      %1415 = vmatpush2.msra.mxu0 0.0
      %1416 = vmatprep.subr.mxu0 0.0
      %1417 = vmatpush2.msra.mxu0 0.0
      %1418 = vmatprep.subr.mxu0 0.0
      %1419 = vmatpush2.msra.mxu0 0.0
      %1420 = vmatprep.subr.mxu0 0.0
      %1421 = vmatpush2.msra.mxu0 0.0
      %1422 = vmatprep.subr.mxu0 0.0
      %1423 = vmatpush2.msra.mxu0 0.0
      %1424 = vmatprep.subr.mxu0 0.0
      %1425 = vmatpush2.msra.mxu0 0.0
      %1426 = vmatprep.subr.mxu0 0.0
      %1427 = vmatpush2.msra.mxu0 0.0
      %1428 = vmatprep.subr.mxu0 0.0
      %1429 = vmatpush2.msra.mxu0 0.0
      %1430 = vmatprep.subr.mxu0 0.0
      %1431 = vmatpush2.msra.mxu0 0.0
      %1432 = vmatprep.subr.mxu0 0.0
      %1433 = vmatpush2.msra.mxu0 0.0
      %1434 = vmatprep.subr.mxu0 0.0
      %1435 = vmatpush2.msra.mxu0 0.0
      %1436 = vmatprep.subr.mxu0 0.0
      %1437 = vmatpush2.msra.mxu0 0.0
      %1438 = vmatprep.mubr.f32.mxu0 0.0
      %1439 = vmatmul.mubr.f32.gmra.mxu0 %v1263
      %v1440 = vpop.f32.mrf.mxu0
      %v1441 = vadd.f32 0.0, %v1440
      %v1442 = vpop.f32.mrf.mxu0
      %1443 = vmatprep.mubr.f32.mxu0 0.0
      %1444 = vmatmul.mubr.f32.gmra.mxu0 %v1266
      %v1445 = vpop.f32.mrf.mxu0
      %v1446 = vadd.f32 0.0, %v1445
      %v1447 = vpop.f32.mrf.mxu0
      %1448 = vmatprep.mubr.f32.mxu0 0.0
      %1449 = vmatmul.mubr.f32.gmra.mxu0 %v1269
      %v1450 = vpop.f32.mrf.mxu0
      %v1451 = vadd.f32 0.0, %v1450
      %v1452 = vpop.f32.mrf.mxu0
      %1453 = vmatprep.mubr.f32.mxu0 0.0
      %1454 = vmatmul.mubr.f32.gmra.mxu0 %v1272
      %v1455 = vpop.f32.mrf.mxu0
      %v1456 = vadd.f32 0.0, %v1455
      %v1457 = vpop.f32.mrf.mxu0
      %1458 = vmatprep.mubr.f32.mxu0 0.0
      %1459 = vmatmul.mubr.f32.gmra.mxu0 %v1275
      %v1460 = vpop.f32.mrf.mxu0
      %v1461 = vadd.f32 0.0, %v1460
      %v1462 = vpop.f32.mrf.mxu0
      %1463 = vmatprep.mubr.f32.mxu0 0.0
      %1464 = vmatmul.mubr.f32.gmra.mxu0 %v1278
      %v1465 = vpop.f32.mrf.mxu0
      %v1466 = vadd.f32 0.0, %v1465
      %v1467 = vpop.f32.mrf.mxu0
      %1468 = vmatprep.mubr.f32.mxu0 0.0
      %1469 = vmatmul.mubr.f32.gmra.mxu0 %v1281
      %v1470 = vpop.f32.mrf.mxu0
      %v1471 = vadd.f32 0.0, %v1470
      %v1472 = vpop.f32.mrf.mxu0
      %1473 = vmatprep.mubr.f32.mxu0 0.0
      %1474 = vmatmul.mubr.f32.gmra.mxu0 %v1284
      %v1475 = vpop.f32.mrf.mxu0
      %v1476 = vadd.f32 0.0, %v1475
      %v1477 = vpop.f32.mrf.mxu0
      %1478 = vmatprep.mubr.f32.mxu0 0.0
      %1479 = vmatmul.mubr.f32.gmra.mxu0 %v1287
      %v1480 = vpop.f32.mrf.mxu0
      %v1481 = vadd.f32 0.0, %v1480
      %v1482 = vpop.f32.mrf.mxu0
      %1483 = vmatprep.mubr.f32.mxu0 0.0
      %1484 = vmatmul.mubr.f32.gmra.mxu0 %v1290
      %v1485 = vpop.f32.mrf.mxu0
      %v1486 = vadd.f32 0.0, %v1485
      %v1487 = vpop.f32.mrf.mxu0
      %1488 = vmatprep.mubr.f32.mxu0 0.0
      %1489 = vmatmul.mubr.f32.gmra.mxu0 %v1293
      %v1490 = vpop.f32.mrf.mxu0
      %v1491 = vadd.f32 0.0, %v1490
      %v1492 = vpop.f32.mrf.mxu0
      %1493 = vmatprep.mubr.f32.mxu0 0.0
      %1494 = vmatmul.mubr.f32.gmra.mxu0 %v1296
      %v1495 = vpop.f32.mrf.mxu0
      %v1496 = vadd.f32 0.0, %v1495
      %v1497 = vpop.f32.mrf.mxu0
      %1498 = vmatprep.mubr.f32.mxu0 0.0
      %1499 = vmatmul.mubr.f32.gmra.mxu0 %v1299
      %v1500 = vpop.f32.mrf.mxu0
      %v1501 = vadd.f32 0.0, %v1500
      %v1502 = vpop.f32.mrf.mxu0
      %1503 = vmatprep.mubr.f32.mxu0 0.0
      %1504 = vmatmul.mubr.f32.gmra.mxu0 %v1302
      %v1505 = vpop.f32.mrf.mxu0
      %v1506 = vadd.f32 0.0, %v1505
      %v1507 = vpop.f32.mrf.mxu0
      %1508 = vmatprep.mubr.f32.mxu0 0.0
      %1509 = vmatmul.mubr.f32.gmra.mxu0 %v1305
      %v1510 = vpop.f32.mrf.mxu0
      %v1511 = vadd.f32 0.0, %v1510
      %v1512 = vpop.f32.mrf.mxu0
      %1513 = vmatprep.mubr.f32.mxu0 0.0
      %1514 = vmatmul.mubr.f32.gmra.mxu0 %v1308
      %v1515 = vpop.f32.mrf.mxu0
      %v1516 = vadd.f32 0.0, %v1515
      %v1517 = vpop.f32.mrf.mxu0
      %1518 = vmatprep.mubr.f32.mxu0 0.0
      %1519 = vmatmul.mubr.f32.gmra.mxu0 %v1311
      %v1520 = vpop.f32.mrf.mxu0
      %v1521 = vadd.f32 0.0, %v1520
      %v1522 = vpop.f32.mrf.mxu0
      %1523 = vmatprep.mubr.f32.mxu0 0.0
      %1524 = vmatmul.mubr.f32.gmra.mxu0 %v1314
      %v1525 = vpop.f32.mrf.mxu0
      %v1526 = vadd.f32 0.0, %v1525
      %v1527 = vpop.f32.mrf.mxu0
      %1528 = vmatprep.mubr.f32.mxu0 0.0
      %1529 = vmatmul.mubr.f32.gmra.mxu0 %v1317
      %v1530 = vpop.f32.mrf.mxu0
      %v1531 = vadd.f32 0.0, %v1530
      %v1532 = vpop.f32.mrf.mxu0
      %1533 = vmatprep.mubr.f32.mxu0 0.0
      %1534 = vmatmul.mubr.f32.gmra.mxu0 %v1320
      %v1535 = vpop.f32.mrf.mxu0
      %v1536 = vadd.f32 0.0, %v1535
      %v1537 = vpop.f32.mrf.mxu0
      %1538 = vmatprep.mubr.f32.mxu0 0.0
      %1539 = vmatmul.mubr.f32.gmra.mxu0 %v1323
      %v1540 = vpop.f32.mrf.mxu0
      %v1541 = vadd.f32 0.0, %v1540
      %v1542 = vpop.f32.mrf.mxu0
      %1543 = vmatprep.mubr.f32.mxu0 0.0
      %1544 = vmatmul.mubr.f32.gmra.mxu0 %v1326
      %v1545 = vpop.f32.mrf.mxu0
      %v1546 = vadd.f32 0.0, %v1545
      %v1547 = vpop.f32.mrf.mxu0
      %1548 = vmatprep.mubr.f32.mxu0 0.0
      %1549 = vmatmul.mubr.f32.gmra.mxu0 %v1329
      %v1550 = vpop.f32.mrf.mxu0
      %v1551 = vadd.f32 0.0, %v1550
      %v1552 = vpop.f32.mrf.mxu0
      %1553 = vmatprep.mubr.f32.mxu0 0.0
      %1554 = vmatmul.mubr.f32.gmra.mxu0 %v1332
      %v1555 = vpop.f32.mrf.mxu0
      %v1556 = vadd.f32 0.0, %v1555
      %v1557 = vpop.f32.mrf.mxu0
      %1558 = vmatprep.mubr.f32.mxu0 0.0
      %1559 = vmatmul.mubr.f32.gmra.mxu0 %v1335
      %v1560 = vpop.f32.mrf.mxu0
      %v1561 = vadd.f32 0.0, %v1560
      %v1562 = vpop.f32.mrf.mxu0
      %1563 = vmatprep.mubr.f32.mxu0 0.0
      %1564 = vmatmul.mubr.f32.gmra.mxu0 %v1338
      %v1565 = vpop.f32.mrf.mxu0
      %v1566 = vadd.f32 0.0, %v1565
      %v1567 = vpop.f32.mrf.mxu0
      %1568 = vmatprep.mubr.f32.mxu0 0.0
      %1569 = vmatmul.mubr.f32.gmra.mxu0 %v1341
      %v1570 = vpop.f32.mrf.mxu0
      %v1571 = vadd.f32 0.0, %v1570
      %v1572 = vpop.f32.mrf.mxu0
      %1573 = vmatprep.mubr.f32.mxu0 0.0
      %1574 = vmatmul.mubr.f32.gmra.mxu0 %v1344
      %v1575 = vpop.f32.mrf.mxu0
      %v1576 = vadd.f32 0.0, %v1575
      %v1577 = vpop.f32.mrf.mxu0
      %1578 = vmatprep.mubr.f32.mxu0 0.0
      %1579 = vmatmul.mubr.f32.gmra.mxu0 %v1347
      %v1580 = vpop.f32.mrf.mxu0
      %v1581 = vadd.f32 0.0, %v1580
      %v1582 = vpop.f32.mrf.mxu0
      %1583 = vmatprep.mubr.f32.mxu0 0.0
      %1584 = vmatmul.mubr.f32.gmra.mxu0 %v1350
      %v1585 = vpop.f32.mrf.mxu0
      %v1586 = vadd.f32 0.0, %v1585
      %v1587 = vpop.f32.mrf.mxu0
      %1588 = vmatprep.mubr.f32.mxu0 0.0
      %1589 = vmatmul.mubr.f32.gmra.mxu0 %v1353
      %v1590 = vpop.f32.mrf.mxu0
      %v1591 = vadd.f32 0.0, %v1590
      %v1592 = vpop.f32.mrf.mxu0
      %1593 = vmatprep.mubr.f32.mxu0 0.0
      %1594 = vmatmul.mubr.f32.gmra.mxu0 %v1356
      %v1595 = vpop.f32.mrf.mxu0
      %v1596 = vadd.f32 0.0, %v1595
      %v1597 = vpop.f32.mrf.mxu0
      %1598 = vmatprep.mubr.f32.mxu0 0.0
      %1599 = vmatmul.mubr.f32.gmra.mxu0 %v1359
      %v1600 = vpop.f32.mrf.mxu0
      %v1601 = vadd.f32 0.0, %v1600
      %v1602 = vpop.f32.mrf.mxu0
      %1603 = vmatprep.mubr.f32.mxu0 0.0
      %1604 = vmatmul.mubr.f32.gmra.mxu0 %v1362
      %v1605 = vpop.f32.mrf.mxu0
      %v1606 = vadd.f32 0.0, %v1605
      %v1607 = vpop.f32.mrf.mxu0
      %1608 = vmatprep.mubr.f32.mxu0 0.0
      %1609 = vmatmul.mubr.f32.gmra.mxu0 %v1365
      %v1610 = vpop.f32.mrf.mxu0
      %v1611 = vadd.f32 0.0, %v1610
      %v1612 = vpop.f32.mrf.mxu0
      %1613 = vmatprep.mubr.f32.mxu0 0.0
      %1614 = vmatmul.mubr.f32.gmra.mxu0 %v1368
      %v1615 = vpop.f32.mrf.mxu0
      %v1616 = vadd.f32 0.0, %v1615
      %v1617 = vpop.f32.mrf.mxu0
      %1618 = vdwg.mxu0
      %v1620 = vsel %vm1261, %v1191, 0
      %v1623 = vsel %vm1261, %v1192, 0
      %v1626 = vsel %vm1370, %v1228, 0
      %1628 = vmatprep.subr.mxu0 0.0
      %1629 = vmatpush1.msra.mxu0 0.0
      %1630 = vmatprep.subr.mxu0 0.0
      %1631 = vmatpush1.msra.mxu0 0.0
      %1632 = vmatprep.subr.mxu0 0.0
      %1633 = vmatpush1.msra.mxu0 0.0
      %1634 = vmatprep.subr.mxu0 0.0
      %1635 = vmatpush1.msra.mxu0 0.0
      %1636 = vmatprep.subr.mxu0 0.0
      %1637 = vmatpush1.msra.mxu0 0.0
      %1638 = vmatprep.subr.mxu0 0.0
      %1639 = vmatpush1.msra.mxu0 0.0
      %1640 = vmatprep.subr.mxu0 0.0
      %1641 = vmatpush1.msra.mxu0 0.0
      %1642 = vmatprep.subr.mxu0 0.0
      %1643 = vmatpush1.msra.mxu0 0.0
      %1644 = vmatprep.subr.mxu0 0.0
      %1645 = vmatpush1.msra.mxu0 0.0
      %1646 = vmatprep.subr.mxu0 0.0
      %1647 = vmatpush1.msra.mxu0 0.0
      %1648 = vmatprep.subr.mxu0 0.0
      %1649 = vmatpush1.msra.mxu0 0.0
      %1650 = vmatprep.subr.mxu0 0.0
      %1651 = vmatpush1.msra.mxu0 0.0
      %1652 = vmatprep.subr.mxu0 0.0
      %1653 = vmatpush1.msra.mxu0 0.0
      %1654 = vmatprep.subr.mxu0 0.0
      %1655 = vmatpush1.msra.mxu0 0.0
      %1656 = vmatprep.subr.mxu0 0.0
      %1657 = vmatpush1.msra.mxu0 %v1626
      %1658 = vmatprep.subr.mxu0 0.0
      %1659 = vmatpush1.msra.mxu0 %v1227
      %1660 = vmatprep.subr.mxu0 0.0
      %1661 = vmatpush2.msra.mxu0 0.0
      %1662 = vmatprep.subr.mxu0 0.0
      %1663 = vmatpush2.msra.mxu0 0.0
      %1664 = vmatprep.subr.mxu0 0.0
      %1665 = vmatpush2.msra.mxu0 0.0
      %1666 = vmatprep.subr.mxu0 0.0
      %1667 = vmatpush2.msra.mxu0 0.0
      %1668 = vmatprep.subr.mxu0 0.0
      %1669 = vmatpush2.msra.mxu0 0.0
      %1670 = vmatprep.subr.mxu0 0.0
      %1671 = vmatpush2.msra.mxu0 0.0
      %1672 = vmatprep.subr.mxu0 0.0
      %1673 = vmatpush2.msra.mxu0 0.0
      %1674 = vmatprep.subr.mxu0 0.0
      %1675 = vmatpush2.msra.mxu0 0.0
      %1676 = vmatprep.subr.mxu0 0.0
      %1677 = vmatpush2.msra.mxu0 0.0
      %1678 = vmatprep.subr.mxu0 0.0
      %1679 = vmatpush2.msra.mxu0 0.0
      %1680 = vmatprep.subr.mxu0 0.0
      %1681 = vmatpush2.msra.mxu0 0.0
      %1682 = vmatprep.subr.mxu0 0.0
      %1683 = vmatpush2.msra.mxu0 0.0
      %1684 = vmatprep.subr.mxu0 0.0
      %1685 = vmatpush2.msra.mxu0 0.0
      %1686 = vmatprep.subr.mxu0 0.0
      %1687 = vmatpush2.msra.mxu0 0.0
      %1688 = vmatprep.subr.mxu0 0.0
      %1689 = vmatpush2.msra.mxu0 0.0
      %1690 = vmatprep.subr.mxu0 0.0
      %1691 = vmatpush2.msra.mxu0 0.0
      %1692 = vmatprep.mubr.f32.mxu0 0.0
      %1693 = vmatmul.mubr.f32.gmra.mxu0 %v1620
      %v1694 = vpop.f32.mrf.mxu0
      %v1695 = vadd.f32 %v1441, %v1694
      %v1696 = vpop.f32.mrf.mxu0
      %1697 = vmatprep.mubr.f32.mxu0 0.0
      %1698 = vmatmul.mubr.f32.gmra.mxu0 %v1623
      %v1699 = vpop.f32.mrf.mxu0
      %v1700 = vadd.f32 %v1446, %v1699
      %v1701 = vpop.f32.mrf.mxu0
      %1702 = vmatprep.mubr.f32.mxu0 0.0
      %1703 = vmatmul.mubr.f32.gmra.mxu0 %v1263
      %v1704 = vpop.f32.mrf.mxu0
      %v1705 = vadd.f32 %v1451, %v1704
      %v1706 = vpop.f32.mrf.mxu0
      %1707 = vmatprep.mubr.f32.mxu0 0.0
      %1708 = vmatmul.mubr.f32.gmra.mxu0 %v1266
      %v1709 = vpop.f32.mrf.mxu0
      %v1710 = vadd.f32 %v1456, %v1709
      %v1711 = vpop.f32.mrf.mxu0
      %1712 = vmatprep.mubr.f32.mxu0 0.0
      %1713 = vmatmul.mubr.f32.gmra.mxu0 %v1269
      %v1714 = vpop.f32.mrf.mxu0
      %v1715 = vadd.f32 %v1461, %v1714
      %v1716 = vpop.f32.mrf.mxu0
      %1717 = vmatprep.mubr.f32.mxu0 0.0
      %1718 = vmatmul.mubr.f32.gmra.mxu0 %v1272
      %v1719 = vpop.f32.mrf.mxu0
      %v1720 = vadd.f32 %v1466, %v1719
      %v1721 = vpop.f32.mrf.mxu0
      %1722 = vmatprep.mubr.f32.mxu0 0.0
      %1723 = vmatmul.mubr.f32.gmra.mxu0 %v1275
      %v1724 = vpop.f32.mrf.mxu0
      %v1725 = vadd.f32 %v1471, %v1724
      %v1726 = vpop.f32.mrf.mxu0
      %1727 = vmatprep.mubr.f32.mxu0 0.0
      %1728 = vmatmul.mubr.f32.gmra.mxu0 %v1278
      %v1729 = vpop.f32.mrf.mxu0
      %v1730 = vadd.f32 %v1476, %v1729
      %v1731 = vpop.f32.mrf.mxu0
      %1732 = vmatprep.mubr.f32.mxu0 0.0
      %1733 = vmatmul.mubr.f32.gmra.mxu0 %v1281
      %v1734 = vpop.f32.mrf.mxu0
      %v1735 = vadd.f32 %v1481, %v1734
      %v1736 = vpop.f32.mrf.mxu0
      %1737 = vmatprep.mubr.f32.mxu0 0.0
      %1738 = vmatmul.mubr.f32.gmra.mxu0 %v1284
      %v1739 = vpop.f32.mrf.mxu0
      %v1740 = vadd.f32 %v1486, %v1739
      %v1741 = vpop.f32.mrf.mxu0
      %1742 = vmatprep.mubr.f32.mxu0 0.0
      %1743 = vmatmul.mubr.f32.gmra.mxu0 %v1287
      %v1744 = vpop.f32.mrf.mxu0
      %v1745 = vadd.f32 %v1491, %v1744
      %v1746 = vpop.f32.mrf.mxu0
      %1747 = vmatprep.mubr.f32.mxu0 0.0
      %1748 = vmatmul.mubr.f32.gmra.mxu0 %v1290
      %v1749 = vpop.f32.mrf.mxu0
      %v1750 = vadd.f32 %v1496, %v1749
      %v1751 = vpop.f32.mrf.mxu0
      %1752 = vmatprep.mubr.f32.mxu0 0.0
      %1753 = vmatmul.mubr.f32.gmra.mxu0 %v1293
      %v1754 = vpop.f32.mrf.mxu0
      %v1755 = vadd.f32 %v1501, %v1754
      %v1756 = vpop.f32.mrf.mxu0
      %1757 = vmatprep.mubr.f32.mxu0 0.0
      %1758 = vmatmul.mubr.f32.gmra.mxu0 %v1296
      %v1759 = vpop.f32.mrf.mxu0
      %v1760 = vadd.f32 %v1506, %v1759
      %v1761 = vpop.f32.mrf.mxu0
      %1762 = vmatprep.mubr.f32.mxu0 0.0
      %1763 = vmatmul.mubr.f32.gmra.mxu0 %v1299
      %v1764 = vpop.f32.mrf.mxu0
      %v1765 = vadd.f32 %v1511, %v1764
      %v1766 = vpop.f32.mrf.mxu0
      %1767 = vmatprep.mubr.f32.mxu0 0.0
      %1768 = vmatmul.mubr.f32.gmra.mxu0 %v1302
      %v1769 = vpop.f32.mrf.mxu0
      %v1770 = vadd.f32 %v1516, %v1769
      %v1771 = vpop.f32.mrf.mxu0
      %1772 = vmatprep.mubr.f32.mxu0 0.0
      %1773 = vmatmul.mubr.f32.gmra.mxu0 %v1305
      %v1774 = vpop.f32.mrf.mxu0
      %v1775 = vadd.f32 %v1521, %v1774
      %v1776 = vpop.f32.mrf.mxu0
      %1777 = vmatprep.mubr.f32.mxu0 0.0
      %1778 = vmatmul.mubr.f32.gmra.mxu0 %v1308
      %v1779 = vpop.f32.mrf.mxu0
      %v1780 = vadd.f32 %v1526, %v1779
      %v1781 = vpop.f32.mrf.mxu0
      %1782 = vmatprep.mubr.f32.mxu0 0.0
      %1783 = vmatmul.mubr.f32.gmra.mxu0 %v1311
      %v1784 = vpop.f32.mrf.mxu0
      %v1785 = vadd.f32 %v1531, %v1784
      %v1786 = vpop.f32.mrf.mxu0
      %1787 = vmatprep.mubr.f32.mxu0 0.0
      %1788 = vmatmul.mubr.f32.gmra.mxu0 %v1314
      %v1789 = vpop.f32.mrf.mxu0
      %v1790 = vadd.f32 %v1536, %v1789
      %v1791 = vpop.f32.mrf.mxu0
      %1792 = vmatprep.mubr.f32.mxu0 0.0
      %1793 = vmatmul.mubr.f32.gmra.mxu0 %v1317
      %v1794 = vpop.f32.mrf.mxu0
      %v1795 = vadd.f32 %v1541, %v1794
      %v1796 = vpop.f32.mrf.mxu0
      %1797 = vmatprep.mubr.f32.mxu0 0.0
      %1798 = vmatmul.mubr.f32.gmra.mxu0 %v1320
      %v1799 = vpop.f32.mrf.mxu0
      %v1800 = vadd.f32 %v1546, %v1799
      %v1801 = vpop.f32.mrf.mxu0
      %1802 = vmatprep.mubr.f32.mxu0 0.0
      %1803 = vmatmul.mubr.f32.gmra.mxu0 %v1323
      %v1804 = vpop.f32.mrf.mxu0
      %v1805 = vadd.f32 %v1551, %v1804
      %v1806 = vpop.f32.mrf.mxu0
      %1807 = vmatprep.mubr.f32.mxu0 0.0
      %1808 = vmatmul.mubr.f32.gmra.mxu0 %v1326
      %v1809 = vpop.f32.mrf.mxu0
      %v1810 = vadd.f32 %v1556, %v1809
      %v1811 = vpop.f32.mrf.mxu0
      %1812 = vmatprep.mubr.f32.mxu0 0.0
      %1813 = vmatmul.mubr.f32.gmra.mxu0 %v1329
      %v1814 = vpop.f32.mrf.mxu0
      %v1815 = vadd.f32 %v1561, %v1814
      %v1816 = vpop.f32.mrf.mxu0
      %1817 = vmatprep.mubr.f32.mxu0 0.0
      %1818 = vmatmul.mubr.f32.gmra.mxu0 %v1332
      %v1819 = vpop.f32.mrf.mxu0
      %v1820 = vadd.f32 %v1566, %v1819
      %v1821 = vpop.f32.mrf.mxu0
      %1822 = vmatprep.mubr.f32.mxu0 0.0
      %1823 = vmatmul.mubr.f32.gmra.mxu0 %v1335
      %v1824 = vpop.f32.mrf.mxu0
      %v1825 = vadd.f32 %v1571, %v1824
      %v1826 = vpop.f32.mrf.mxu0
      %1827 = vmatprep.mubr.f32.mxu0 0.0
      %1828 = vmatmul.mubr.f32.gmra.mxu0 %v1338
      %v1829 = vpop.f32.mrf.mxu0
      %v1830 = vadd.f32 %v1576, %v1829
      %v1831 = vpop.f32.mrf.mxu0
      %1832 = vmatprep.mubr.f32.mxu0 0.0
      %1833 = vmatmul.mubr.f32.gmra.mxu0 %v1341
      %v1834 = vpop.f32.mrf.mxu0
      %v1835 = vadd.f32 %v1581, %v1834
      %v1836 = vpop.f32.mrf.mxu0
      %1837 = vmatprep.mubr.f32.mxu0 0.0
      %1838 = vmatmul.mubr.f32.gmra.mxu0 %v1344
      %v1839 = vpop.f32.mrf.mxu0
      %v1840 = vadd.f32 %v1586, %v1839
      %v1841 = vpop.f32.mrf.mxu0
      %1842 = vmatprep.mubr.f32.mxu0 0.0
      %1843 = vmatmul.mubr.f32.gmra.mxu0 %v1347
      %v1844 = vpop.f32.mrf.mxu0
      %v1845 = vadd.f32 %v1591, %v1844
      %v1846 = vpop.f32.mrf.mxu0
      %1847 = vmatprep.mubr.f32.mxu0 0.0
      %1848 = vmatmul.mubr.f32.gmra.mxu0 %v1350
      %v1849 = vpop.f32.mrf.mxu0
      %v1850 = vadd.f32 %v1596, %v1849
      %v1851 = vpop.f32.mrf.mxu0
      %1852 = vmatprep.mubr.f32.mxu0 0.0
      %1853 = vmatmul.mubr.f32.gmra.mxu0 %v1353
      %v1854 = vpop.f32.mrf.mxu0
      %v1855 = vadd.f32 %v1601, %v1854
      %v1856 = vpop.f32.mrf.mxu0
      %1857 = vmatprep.mubr.f32.mxu0 0.0
      %1858 = vmatmul.mubr.f32.gmra.mxu0 %v1356
      %v1859 = vpop.f32.mrf.mxu0
      %v1860 = vadd.f32 %v1606, %v1859
      %v1861 = vpop.f32.mrf.mxu0
      %1862 = vmatprep.mubr.f32.mxu0 0.0
      %1863 = vmatmul.mubr.f32.gmra.mxu0 %v1359
      %v1864 = vpop.f32.mrf.mxu0
      %v1865 = vadd.f32 %v1611, %v1864
      %v1866 = vpop.f32.mrf.mxu0
      %1867 = vmatprep.mubr.f32.mxu0 0.0
      %1868 = vmatmul.mubr.f32.gmra.mxu0 %v1362
      %v1869 = vpop.f32.mrf.mxu0
      %v1870 = vadd.f32 %v1616, %v1869
      %v1871 = vpop.f32.mrf.mxu0
      %1872 = vdwg.mxu0
      %v1876 = vrot.slane %v699, 1
      %v1877 = vrot.slane %v700, 1
      %v1878 = vsel %vm756, %v1876, %v1877
      %v1879 = vrot.slane %v701, 1
      %v1880 = vsel %vm756, %v1877, %v1879
      %1881 = vrot.lane.b32.xlu0 %v1878, 4
      %v1882 = vpop.permute.xlu0 %1881
      %1883 = vrot.lane.b32.xlu0 %v1880, 4
      %v1884 = vpop.permute.xlu0 %1883
      %v1887 = vrot.slane %v699, 2
      %v1888 = vrot.slane %v700, 2
      %v1889 = vsel %vm955, %v1887, %v1888
      %v1890 = vrot.slane %v701, 2
      %v1891 = vsel %vm955, %v1888, %v1890
      %1892 = vrot.lane.b32.xlu0 %v1889, 8
      %v1893 = vpop.permute.xlu0 %1892
      %1894 = vrot.lane.b32.xlu0 %v1891, 8
      %v1895 = vpop.permute.xlu0 %1894
      %v1898 = vsel %vm568, %v699, %v1882
      %v1899 = vsel %vm568, %v700, %v1884
      %v1900 = vsel %vm1190, %v1898, %v1893
      %v1901 = vsel %vm1190, %v1899, %v1895
      %s1902 = scalar_lea.vmem %s3, 32
      %v1903 = vld [vmem:[%s1902] sm:$0xff]
      %v1904 = vld [vmem:[%s1902 + $0x8] sm:$0xf]
      %v1906 = vsel %vm1261, %v1900, 0
      %v1909 = vsel %vm1261, %v1901, 0
      %v1912 = vsel %vm1370, %v1904, 0
      %1914 = vmatprep.subr.mxu0 0.0
      %1915 = vmatpush1.msra.mxu0 0.0
      %1916 = vmatprep.subr.mxu0 0.0
      %1917 = vmatpush1.msra.mxu0 0.0
      %1918 = vmatprep.subr.mxu0 0.0
      %1919 = vmatpush1.msra.mxu0 0.0
      %1920 = vmatprep.subr.mxu0 0.0
      %1921 = vmatpush1.msra.mxu0 0.0
      %1922 = vmatprep.subr.mxu0 0.0
      %1923 = vmatpush1.msra.mxu0 0.0
      %1924 = vmatprep.subr.mxu0 0.0
      %1925 = vmatpush1.msra.mxu0 0.0
      %1926 = vmatprep.subr.mxu0 0.0
      %1927 = vmatpush1.msra.mxu0 0.0
      %1928 = vmatprep.subr.mxu0 0.0
      %1929 = vmatpush1.msra.mxu0 0.0
      %1930 = vmatprep.subr.mxu0 0.0
      %1931 = vmatpush1.msra.mxu0 0.0
      %1932 = vmatprep.subr.mxu0 0.0
      %1933 = vmatpush1.msra.mxu0 0.0
      %1934 = vmatprep.subr.mxu0 0.0
      %1935 = vmatpush1.msra.mxu0 0.0
      %1936 = vmatprep.subr.mxu0 0.0
      %1937 = vmatpush1.msra.mxu0 0.0
      %1938 = vmatprep.subr.mxu0 0.0
      %1939 = vmatpush1.msra.mxu0 0.0
      %1940 = vmatprep.subr.mxu0 0.0
      %1941 = vmatpush1.msra.mxu0 0.0
      %1942 = vmatprep.subr.mxu0 0.0
      %1943 = vmatpush1.msra.mxu0 %v1912
      %1944 = vmatprep.subr.mxu0 0.0
      %1945 = vmatpush1.msra.mxu0 %v1903
      %1946 = vmatprep.subr.mxu0 0.0
      %1947 = vmatpush2.msra.mxu0 0.0
      %1948 = vmatprep.subr.mxu0 0.0
      %1949 = vmatpush2.msra.mxu0 0.0
      %1950 = vmatprep.subr.mxu0 0.0
      %1951 = vmatpush2.msra.mxu0 0.0
      %1952 = vmatprep.subr.mxu0 0.0
      %1953 = vmatpush2.msra.mxu0 0.0
      %1954 = vmatprep.subr.mxu0 0.0
      %1955 = vmatpush2.msra.mxu0 0.0
      %1956 = vmatprep.subr.mxu0 0.0
      %1957 = vmatpush2.msra.mxu0 0.0
      %1958 = vmatprep.subr.mxu0 0.0
      %1959 = vmatpush2.msra.mxu0 0.0
      %1960 = vmatprep.subr.mxu0 0.0
      %1961 = vmatpush2.msra.mxu0 0.0
      %1962 = vmatprep.subr.mxu0 0.0
      %1963 = vmatpush2.msra.mxu0 0.0
      %1964 = vmatprep.subr.mxu0 0.0
      %1965 = vmatpush2.msra.mxu0 0.0
      %1966 = vmatprep.subr.mxu0 0.0
      %1967 = vmatpush2.msra.mxu0 0.0
      %1968 = vmatprep.subr.mxu0 0.0
      %1969 = vmatpush2.msra.mxu0 0.0
      %1970 = vmatprep.subr.mxu0 0.0
      %1971 = vmatpush2.msra.mxu0 0.0
      %1972 = vmatprep.subr.mxu0 0.0
      %1973 = vmatpush2.msra.mxu0 0.0
      %1974 = vmatprep.subr.mxu0 0.0
      %1975 = vmatpush2.msra.mxu0 0.0
      %1976 = vmatprep.subr.mxu0 0.0
      %1977 = vmatpush2.msra.mxu0 0.0
      %1978 = vmatprep.mubr.f32.mxu0 0.0
      %1979 = vmatmul.mubr.f32.gmra.mxu0 %v1269
      %v1980 = vpop.f32.mrf.mxu0
      %v1981 = vadd.f32 0.0, %v1980
      %v1982 = vpop.f32.mrf.mxu0
      %1983 = vmatprep.mubr.f32.mxu0 0.0
      %1984 = vmatmul.mubr.f32.gmra.mxu0 %v1272
      %v1985 = vpop.f32.mrf.mxu0
      %v1986 = vadd.f32 0.0, %v1985
      %v1987 = vpop.f32.mrf.mxu0
      %1988 = vmatprep.mubr.f32.mxu0 0.0
      %1989 = vmatmul.mubr.f32.gmra.mxu0 %v1275
      %v1990 = vpop.f32.mrf.mxu0
      %v1991 = vadd.f32 0.0, %v1990
      %v1992 = vpop.f32.mrf.mxu0
      %1993 = vmatprep.mubr.f32.mxu0 0.0
      %1994 = vmatmul.mubr.f32.gmra.mxu0 %v1278
      %v1995 = vpop.f32.mrf.mxu0
      %v1996 = vadd.f32 0.0, %v1995
      %v1997 = vpop.f32.mrf.mxu0
      %1998 = vmatprep.mubr.f32.mxu0 0.0
      %1999 = vmatmul.mubr.f32.gmra.mxu0 %v1281
      %v2000 = vpop.f32.mrf.mxu0
      %v2001 = vadd.f32 0.0, %v2000
      %v2002 = vpop.f32.mrf.mxu0
      %2003 = vmatprep.mubr.f32.mxu0 0.0
      %2004 = vmatmul.mubr.f32.gmra.mxu0 %v1284
      %v2005 = vpop.f32.mrf.mxu0
      %v2006 = vadd.f32 0.0, %v2005
      %v2007 = vpop.f32.mrf.mxu0
      %2008 = vmatprep.mubr.f32.mxu0 0.0
      %2009 = vmatmul.mubr.f32.gmra.mxu0 %v1287
      %v2010 = vpop.f32.mrf.mxu0
      %v2011 = vadd.f32 0.0, %v2010
      %v2012 = vpop.f32.mrf.mxu0
      %2013 = vmatprep.mubr.f32.mxu0 0.0
      %2014 = vmatmul.mubr.f32.gmra.mxu0 %v1290
      %v2015 = vpop.f32.mrf.mxu0
      %v2016 = vadd.f32 0.0, %v2015
      %v2017 = vpop.f32.mrf.mxu0
      %2018 = vmatprep.mubr.f32.mxu0 0.0
      %2019 = vmatmul.mubr.f32.gmra.mxu0 %v1293
      %v2020 = vpop.f32.mrf.mxu0
      %v2021 = vadd.f32 0.0, %v2020
      %v2022 = vpop.f32.mrf.mxu0
      %2023 = vmatprep.mubr.f32.mxu0 0.0
      %2024 = vmatmul.mubr.f32.gmra.mxu0 %v1296
      %v2025 = vpop.f32.mrf.mxu0
      %v2026 = vadd.f32 0.0, %v2025
      %v2027 = vpop.f32.mrf.mxu0
      %2028 = vmatprep.mubr.f32.mxu0 0.0
      %2029 = vmatmul.mubr.f32.gmra.mxu0 %v1299
      %v2030 = vpop.f32.mrf.mxu0
      %v2031 = vadd.f32 0.0, %v2030
      %v2032 = vpop.f32.mrf.mxu0
      %2033 = vmatprep.mubr.f32.mxu0 0.0
      %2034 = vmatmul.mubr.f32.gmra.mxu0 %v1302
      %v2035 = vpop.f32.mrf.mxu0
      %v2036 = vadd.f32 0.0, %v2035
      %v2037 = vpop.f32.mrf.mxu0
      %2038 = vmatprep.mubr.f32.mxu0 0.0
      %2039 = vmatmul.mubr.f32.gmra.mxu0 %v1305
      %v2040 = vpop.f32.mrf.mxu0
      %v2041 = vadd.f32 0.0, %v2040
      %v2042 = vpop.f32.mrf.mxu0
      %2043 = vmatprep.mubr.f32.mxu0 0.0
      %2044 = vmatmul.mubr.f32.gmra.mxu0 %v1308
      %v2045 = vpop.f32.mrf.mxu0
      %v2046 = vadd.f32 0.0, %v2045
      %v2047 = vpop.f32.mrf.mxu0
      %2048 = vmatprep.mubr.f32.mxu0 0.0
      %2049 = vmatmul.mubr.f32.gmra.mxu0 %v1311
      %v2050 = vpop.f32.mrf.mxu0
      %v2051 = vadd.f32 0.0, %v2050
      %v2052 = vpop.f32.mrf.mxu0
      %2053 = vmatprep.mubr.f32.mxu0 0.0
      %2054 = vmatmul.mubr.f32.gmra.mxu0 %v1314
      %v2055 = vpop.f32.mrf.mxu0
      %v2056 = vadd.f32 0.0, %v2055
      %v2057 = vpop.f32.mrf.mxu0
      %2058 = vmatprep.mubr.f32.mxu0 0.0
      %2059 = vmatmul.mubr.f32.gmra.mxu0 %v1317
      %v2060 = vpop.f32.mrf.mxu0
      %v2061 = vadd.f32 0.0, %v2060
      %v2062 = vpop.f32.mrf.mxu0
      %2063 = vmatprep.mubr.f32.mxu0 0.0
      %2064 = vmatmul.mubr.f32.gmra.mxu0 %v1320
      %v2065 = vpop.f32.mrf.mxu0
      %v2066 = vadd.f32 0.0, %v2065
      %v2067 = vpop.f32.mrf.mxu0
      %2068 = vmatprep.mubr.f32.mxu0 0.0
      %2069 = vmatmul.mubr.f32.gmra.mxu0 %v1323
      %v2070 = vpop.f32.mrf.mxu0
      %v2071 = vadd.f32 0.0, %v2070
      %v2072 = vpop.f32.mrf.mxu0
      %2073 = vmatprep.mubr.f32.mxu0 0.0
      %2074 = vmatmul.mubr.f32.gmra.mxu0 %v1326
      %v2075 = vpop.f32.mrf.mxu0
      %v2076 = vadd.f32 0.0, %v2075
      %v2077 = vpop.f32.mrf.mxu0
      %2078 = vmatprep.mubr.f32.mxu0 0.0
      %2079 = vmatmul.mubr.f32.gmra.mxu0 %v1329
      %v2080 = vpop.f32.mrf.mxu0
      %v2081 = vadd.f32 0.0, %v2080
      %v2082 = vpop.f32.mrf.mxu0
      %2083 = vmatprep.mubr.f32.mxu0 0.0
      %2084 = vmatmul.mubr.f32.gmra.mxu0 %v1332
      %v2085 = vpop.f32.mrf.mxu0
      %v2086 = vadd.f32 0.0, %v2085
      %v2087 = vpop.f32.mrf.mxu0
      %2088 = vmatprep.mubr.f32.mxu0 0.0
      %2089 = vmatmul.mubr.f32.gmra.mxu0 %v1335
      %v2090 = vpop.f32.mrf.mxu0
      %v2091 = vadd.f32 0.0, %v2090
      %v2092 = vpop.f32.mrf.mxu0
      %2093 = vmatprep.mubr.f32.mxu0 0.0
      %2094 = vmatmul.mubr.f32.gmra.mxu0 %v1338
      %v2095 = vpop.f32.mrf.mxu0
      %v2096 = vadd.f32 0.0, %v2095
      %v2097 = vpop.f32.mrf.mxu0
      %2098 = vmatprep.mubr.f32.mxu0 0.0
      %2099 = vmatmul.mubr.f32.gmra.mxu0 %v1341
      %v2100 = vpop.f32.mrf.mxu0
      %v2101 = vadd.f32 0.0, %v2100
      %v2102 = vpop.f32.mrf.mxu0
      %2103 = vmatprep.mubr.f32.mxu0 0.0
      %2104 = vmatmul.mubr.f32.gmra.mxu0 %v1344
      %v2105 = vpop.f32.mrf.mxu0
      %v2106 = vadd.f32 0.0, %v2105
      %v2107 = vpop.f32.mrf.mxu0
      %2108 = vmatprep.mubr.f32.mxu0 0.0
      %2109 = vmatmul.mubr.f32.gmra.mxu0 %v1347
      %v2110 = vpop.f32.mrf.mxu0
      %v2111 = vadd.f32 0.0, %v2110
      %v2112 = vpop.f32.mrf.mxu0
      %2113 = vmatprep.mubr.f32.mxu0 0.0
      %2114 = vmatmul.mubr.f32.gmra.mxu0 %v1350
      %v2115 = vpop.f32.mrf.mxu0
      %v2116 = vadd.f32 0.0, %v2115
      %v2117 = vpop.f32.mrf.mxu0
      %2118 = vmatprep.mubr.f32.mxu0 0.0
      %2119 = vmatmul.mubr.f32.gmra.mxu0 %v1353
      %v2120 = vpop.f32.mrf.mxu0
      %v2121 = vadd.f32 0.0, %v2120
      %v2122 = vpop.f32.mrf.mxu0
      %2123 = vmatprep.mubr.f32.mxu0 0.0
      %2124 = vmatmul.mubr.f32.gmra.mxu0 %v1356
      %v2125 = vpop.f32.mrf.mxu0
      %v2126 = vadd.f32 0.0, %v2125
      %v2127 = vpop.f32.mrf.mxu0
      %2128 = vmatprep.mubr.f32.mxu0 0.0
      %2129 = vmatmul.mubr.f32.gmra.mxu0 %v1359
      %v2130 = vpop.f32.mrf.mxu0
      %v2131 = vadd.f32 0.0, %v2130
      %v2132 = vpop.f32.mrf.mxu0
      %2133 = vmatprep.mubr.f32.mxu0 0.0
      %2134 = vmatmul.mubr.f32.gmra.mxu0 %v1362
      %v2135 = vpop.f32.mrf.mxu0
      %v2136 = vadd.f32 0.0, %v2135
      %v2137 = vpop.f32.mrf.mxu0
      %2138 = vmatprep.mubr.f32.mxu0 0.0
      %2139 = vmatmul.mubr.f32.gmra.mxu0 %v1365
      %v2140 = vpop.f32.mrf.mxu0
      %v2141 = vadd.f32 0.0, %v2140
      %v2142 = vpop.f32.mrf.mxu0
      %2143 = vmatprep.mubr.f32.mxu0 0.0
      %2144 = vmatmul.mubr.f32.gmra.mxu0 %v1368
      %v2145 = vpop.f32.mrf.mxu0
      %v2146 = vadd.f32 0.0, %v2145
      %v2147 = vpop.f32.mrf.mxu0
      %2148 = vmatprep.mubr.f32.mxu0 0.0
      %2149 = vmatmul.mubr.f32.gmra.mxu0 %v1906
      %v2150 = vpop.f32.mrf.mxu0
      %v2151 = vadd.f32 0.0, %v2150
      %v2152 = vpop.f32.mrf.mxu0
      %2153 = vmatprep.mubr.f32.mxu0 0.0
      %2154 = vmatmul.mubr.f32.gmra.mxu0 %v1909
      %v2155 = vpop.f32.mrf.mxu0
      %v2156 = vadd.f32 0.0, %v2155
      %v2157 = vpop.f32.mrf.mxu0
      %2158 = vdwg.mxu0
      %v2159 = vadd.f32 %v1695, %v1981
      %v2160 = vadd.f32 %v1700, %v1986
      %v2161 = vadd.f32 %v1705, %v1991
      %v2162 = vadd.f32 %v1710, %v1996
      %v2163 = vadd.f32 %v1715, %v2001
      %v2164 = vadd.f32 %v1720, %v2006
      %v2165 = vadd.f32 %v1725, %v2011
      %v2166 = vadd.f32 %v1730, %v2016
      %v2167 = vadd.f32 %v1735, %v2021
      %v2168 = vadd.f32 %v1740, %v2026
      %v2169 = vadd.f32 %v1745, %v2031
      %v2170 = vadd.f32 %v1750, %v2036
      %v2171 = vadd.f32 %v1755, %v2041
      %v2172 = vadd.f32 %v1760, %v2046
      %v2173 = vadd.f32 %v1765, %v2051
      %v2174 = vadd.f32 %v1770, %v2056
      %v2175 = vadd.f32 %v1775, %v2061
      %v2176 = vadd.f32 %v1780, %v2066
      %v2177 = vadd.f32 %v1785, %v2071
      %v2178 = vadd.f32 %v1790, %v2076
      %v2179 = vadd.f32 %v1795, %v2081
      %v2180 = vadd.f32 %v1800, %v2086
      %v2181 = vadd.f32 %v1805, %v2091
      %v2182 = vadd.f32 %v1810, %v2096
      %v2183 = vadd.f32 %v1815, %v2101
      %v2184 = vadd.f32 %v1820, %v2106
      %v2185 = vadd.f32 %v1825, %v2111
      %v2186 = vadd.f32 %v1830, %v2116
      %v2187 = vadd.f32 %v1835, %v2121
      %v2188 = vadd.f32 %v1840, %v2126
      %v2189 = vadd.f32 %v1845, %v2131
      %v2190 = vadd.f32 %v1850, %v2136
      %v2191 = vadd.f32 %v1855, %v2141
      %v2192 = vadd.f32 %v1860, %v2146
      %v2193 = vadd.f32 %v1865, %v2151
      %v2194 = vadd.f32 %v1870, %v2156
      %v2195 = vld [vmem:[%s4] sm:$0x1]
      %v2197 = vlaneseq
      %v2198 = vshrl.u32 %v2197, 7
      %v2199 = vsub.s32 0, %v2198
      %v2200 = vrot.slane %v2195, %v2199
      %v2202 = vadd.f32 %v2159, %v2200
      %v2203 = vadd.f32 %v2160, %v2200
      %v2204 = vadd.f32 %v2161, %v2200
      %v2205 = vadd.f32 %v2162, %v2200
      %v2206 = vadd.f32 %v2163, %v2200
      %v2207 = vadd.f32 %v2164, %v2200
      %v2208 = vadd.f32 %v2165, %v2200
      %v2209 = vadd.f32 %v2166, %v2200
      %v2210 = vadd.f32 %v2167, %v2200
      %v2211 = vadd.f32 %v2168, %v2200
      %v2212 = vadd.f32 %v2169, %v2200
      %v2213 = vadd.f32 %v2170, %v2200
      %v2214 = vadd.f32 %v2171, %v2200
      %v2215 = vadd.f32 %v2172, %v2200
      %v2216 = vadd.f32 %v2173, %v2200
      %v2217 = vadd.f32 %v2174, %v2200
      %v2218 = vadd.f32 %v2175, %v2200
      %v2219 = vadd.f32 %v2176, %v2200
      %v2220 = vadd.f32 %v2177, %v2200
      %v2221 = vadd.f32 %v2178, %v2200
      %v2222 = vadd.f32 %v2179, %v2200
      %v2223 = vadd.f32 %v2180, %v2200
      %v2224 = vadd.f32 %v2181, %v2200
      %v2225 = vadd.f32 %v2182, %v2200
      %v2226 = vadd.f32 %v2183, %v2200
      %v2227 = vadd.f32 %v2184, %v2200
      %v2228 = vadd.f32 %v2185, %v2200
      %v2229 = vadd.f32 %v2186, %v2200
      %v2230 = vadd.f32 %v2187, %v2200
      %v2231 = vadd.f32 %v2188, %v2200
      %v2232 = vadd.f32 %v2189, %v2200
      %v2233 = vadd.f32 %v2190, %v2200
      %v2234 = vadd.f32 %v2191, %v2200
      %v2235 = vadd.f32 %v2192, %v2200
      %v2236 = vadd.f32 %v2193, %v2200
      %v2237 = vadd.f32 %v2194, %v2200
      %v2238 = vmax.f32 %v2202, 0.0
      %v2239 = vmax.f32 %v2203, 0.0
      %v2240 = vmax.f32 %v2204, 0.0
      %v2241 = vmax.f32 %v2205, 0.0
      %v2242 = vmax.f32 %v2206, 0.0
      %v2243 = vmax.f32 %v2207, 0.0
      %v2244 = vmax.f32 %v2208, 0.0
      %v2245 = vmax.f32 %v2209, 0.0
      %v2246 = vmax.f32 %v2210, 0.0
      %v2247 = vmax.f32 %v2211, 0.0
      %v2248 = vmax.f32 %v2212, 0.0
      %v2249 = vmax.f32 %v2213, 0.0
      %v2250 = vmax.f32 %v2214, 0.0
      %v2251 = vmax.f32 %v2215, 0.0
      %v2252 = vmax.f32 %v2216, 0.0
      %v2253 = vmax.f32 %v2217, 0.0
      %v2254 = vmax.f32 %v2218, 0.0
      %v2255 = vmax.f32 %v2219, 0.0
      %v2256 = vmax.f32 %v2220, 0.0
      %v2257 = vmax.f32 %v2221, 0.0
      %v2258 = vmax.f32 %v2222, 0.0
      %v2259 = vmax.f32 %v2223, 0.0
      %v2260 = vmax.f32 %v2224, 0.0
      %v2261 = vmax.f32 %v2225, 0.0
      %v2262 = vmax.f32 %v2226, 0.0
      %v2263 = vmax.f32 %v2227, 0.0
      %v2264 = vmax.f32 %v2228, 0.0
      %v2265 = vmax.f32 %v2229, 0.0
      %v2266 = vmax.f32 %v2230, 0.0
      %v2267 = vmax.f32 %v2231, 0.0
      %v2268 = vmax.f32 %v2232, 0.0
      %v2269 = vmax.f32 %v2233, 0.0
      %v2270 = vmax.f32 %v2234, 0.0
      %v2271 = vmax.f32 %v2235, 0.0
      %v2272 = vmax.f32 %v2236, 0.0
      %v2273 = vmax.f32 %v2237, 0.0
      %2274 = vst.msk [vmem:[#allocation3 + $0x1] sm:$0xff] %vm1190, %v2238
      %2275 = vst.msk [vmem:[#allocation3 + $0x9] sm:$0xff] %vm1190, %v2239
      %2276 = vst.msk [vmem:[#allocation3 + $0x19] sm:$0xff] %vm1190, %v2240
      %2277 = vst.msk [vmem:[#allocation3 + $0x21] sm:$0xff] %vm1190, %v2241
      %2278 = vst.msk [vmem:[#allocation3 + $0x31] sm:$0xff] %vm1190, %v2242
      %2279 = vst.msk [vmem:[#allocation3 + $0x39] sm:$0xff] %vm1190, %v2243
      %2280 = vst.msk [vmem:[#allocation3 + $0x49] sm:$0xff] %vm1190, %v2244
      %2281 = vst.msk [vmem:[#allocation3 + $0x51] sm:$0xff] %vm1190, %v2245
      %2282 = vst.msk [vmem:[#allocation3 + $0x61] sm:$0xff] %vm1190, %v2246
      %2283 = vst.msk [vmem:[#allocation3 + $0x69] sm:$0xff] %vm1190, %v2247
      %2284 = vst.msk [vmem:[#allocation3 + $0x79] sm:$0xff] %vm1190, %v2248
      %2285 = vst.msk [vmem:[#allocation3 + $0x81] sm:$0xff] %vm1190, %v2249
      %2286 = vst.msk [vmem:[#allocation3 + $0x91] sm:$0xff] %vm1190, %v2250
      %2287 = vst.msk [vmem:[#allocation3 + $0x99] sm:$0xff] %vm1190, %v2251
      %2288 = vst.msk [vmem:[#allocation3 + $0xa9] sm:$0xff] %vm1190, %v2252
      %2289 = vst.msk [vmem:[#allocation3 + $0xb1] sm:$0xff] %vm1190, %v2253
      %2290 = vst.msk [vmem:[#allocation3 + $0xc1] sm:$0xff] %vm1190, %v2254
      %2291 = vst.msk [vmem:[#allocation3 + $0xc9] sm:$0xff] %vm1190, %v2255
      %2292 = vst.msk [vmem:[#allocation3 + $0xd9] sm:$0xff] %vm1190, %v2256
      %2293 = vst.msk [vmem:[#allocation3 + $0xe1] sm:$0xff] %vm1190, %v2257
      %2294 = vst.msk [vmem:[#allocation3 + $0xf1] sm:$0xff] %vm1190, %v2258
      %2295 = vst.msk [vmem:[#allocation3 + $0xf9] sm:$0xff] %vm1190, %v2259
      %2296 = vst.msk [vmem:[#allocation3 + $0x109] sm:$0xff] %vm1190, %v2260
      %2297 = vst.msk [vmem:[#allocation3 + $0x111] sm:$0xff] %vm1190, %v2261
      %2298 = vst.msk [vmem:[#allocation3 + $0x121] sm:$0xff] %vm1190, %v2262
      %2299 = vst.msk [vmem:[#allocation3 + $0x129] sm:$0xff] %vm1190, %v2263
      %2300 = vst.msk [vmem:[#allocation3 + $0x139] sm:$0xff] %vm1190, %v2264
      %2301 = vst.msk [vmem:[#allocation3 + $0x141] sm:$0xff] %vm1190, %v2265
      %2302 = vst.msk [vmem:[#allocation3 + $0x151] sm:$0xff] %vm1190, %v2266
      %2303 = vst.msk [vmem:[#allocation3 + $0x159] sm:$0xff] %vm1190, %v2267
      %2304 = vst.msk [vmem:[#allocation3 + $0x169] sm:$0xff] %vm1190, %v2268
      %2305 = vst.msk [vmem:[#allocation3 + $0x171] sm:$0xff] %vm1190, %v2269
      %2306 = vst.msk [vmem:[#allocation3 + $0x181] sm:$0xff] %vm1190, %v2270
      %2307 = vst.msk [vmem:[#allocation3 + $0x189] sm:$0xff] %vm1190, %v2271
      %2308 = vst.msk [vmem:[#allocation3 + $0x199] sm:$0xff] %vm1190, %v2272
      %2309 = vst.msk [vmem:[#allocation3 + $0x1a1] sm:$0xff] %vm1190, %v2273
      // Predicated region
      $region65: #{tpu_custom_call.1} parent=47 // pred_check
        %p2310 = pneg %p601
      $region66: #{tpu_custom_call.1} parent=47 // pred_check_branch
        %2312 = sbr.rel (%p2310) target = $region68
      $region67: #{tpu_custom_call.1} parent=47 // pred_region
        %2313 = vst.msk [vmem:[#allocation3 + $0x1] sm:$0xff] %vm1190, 0.0
        %2314 = vst.msk [vmem:[#allocation3 + $0x9] sm:$0xff] %vm1190, 0.0
        %s2315 = scalar_lea.vmem [#allocation3], 408
        %2316 = vst.msk [vmem:[%s2315 + $0x1] sm:$0xff] %vm1190, 0.0
        %2317 = vst.msk [vmem:[%s2315 + $0x9] sm:$0xff] %vm1190, 0.0
      $region68: #{tpu_custom_call.1} parent=47 // pred_fallthru
        _
      %v2318 = vld [vmem:[#allocation3] sm:$0xff]
      %v2319 = vld [vmem:[#allocation3 + $0x8] sm:$0xff]
      %v2320 = vld [vmem:[#allocation3 + $0x10] sm:$0x3]
      %v2321 = vld [vmem:[#allocation3 + $0x18] sm:$0xff]
      %v2322 = vld [vmem:[#allocation3 + $0x20] sm:$0xff]
      %v2323 = vld [vmem:[#allocation3 + $0x28] sm:$0x3]
      %v2324 = vld [vmem:[#allocation3 + $0x30] sm:$0xff]
      %v2325 = vld [vmem:[#allocation3 + $0x38] sm:$0xff]
      %v2326 = vld [vmem:[#allocation3 + $0x40] sm:$0x3]
      %v2327 = vld [vmem:[#allocation3 + $0x48] sm:$0xff]
      %v2328 = vld [vmem:[#allocation3 + $0x50] sm:$0xff]
      %v2329 = vld [vmem:[#allocation3 + $0x58] sm:$0x3]
      %v2330 = vld [vmem:[#allocation3 + $0x60] sm:$0xff]
      %v2331 = vld [vmem:[#allocation3 + $0x68] sm:$0xff]
      %v2332 = vld [vmem:[#allocation3 + $0x70] sm:$0x3]
      %v2333 = vld [vmem:[#allocation3 + $0x78] sm:$0xff]
      %v2334 = vld [vmem:[#allocation3 + $0x80] sm:$0xff]
      %v2335 = vld [vmem:[#allocation3 + $0x88] sm:$0x3]
      %v2336 = vld [vmem:[#allocation3 + $0x90] sm:$0xff]
      %v2337 = vld [vmem:[#allocation3 + $0x98] sm:$0xff]
      %v2338 = vld [vmem:[#allocation3 + $0xa0] sm:$0x3]
      %v2339 = vld [vmem:[#allocation3 + $0xa8] sm:$0xff]
      %v2340 = vld [vmem:[#allocation3 + $0xb0] sm:$0xff]
      %v2341 = vld [vmem:[#allocation3 + $0xb8] sm:$0x3]
      %v2342 = vld [vmem:[#allocation3 + $0xc0] sm:$0xff]
      %v2343 = vld [vmem:[#allocation3 + $0xc8] sm:$0xff]
      %v2344 = vld [vmem:[#allocation3 + $0xd0] sm:$0x3]
      %v2345 = vld [vmem:[#allocation3 + $0xd8] sm:$0xff]
      %v2346 = vld [vmem:[#allocation3 + $0xe0] sm:$0xff]
      %v2347 = vld [vmem:[#allocation3 + $0xe8] sm:$0x3]
      %v2348 = vld [vmem:[#allocation3 + $0xf0] sm:$0xff]
      %v2349 = vld [vmem:[#allocation3 + $0xf8] sm:$0xff]
      %v2350 = vld [vmem:[#allocation3 + $0x100] sm:$0x3]
      %v2351 = vld [vmem:[#allocation3 + $0x108] sm:$0xff]
      %v2352 = vld [vmem:[#allocation3 + $0x110] sm:$0xff]
      %v2353 = vld [vmem:[#allocation3 + $0x118] sm:$0x3]
      %v2354 = vld [vmem:[#allocation3 + $0x120] sm:$0xff]
      %v2355 = vld [vmem:[#allocation3 + $0x128] sm:$0xff]
      %v2356 = vld [vmem:[#allocation3 + $0x130] sm:$0x3]
      %v2357 = vld [vmem:[#allocation3 + $0x138] sm:$0xff]
      %v2358 = vld [vmem:[#allocation3 + $0x140] sm:$0xff]
      %v2359 = vld [vmem:[#allocation3 + $0x148] sm:$0x3]
      %v2360 = vld [vmem:[#allocation3 + $0x150] sm:$0xff]
      %v2361 = vld [vmem:[#allocation3 + $0x158] sm:$0xff]
      %v2362 = vld [vmem:[#allocation3 + $0x160] sm:$0x3]
      %v2363 = vld [vmem:[#allocation3 + $0x168] sm:$0xff]
      %v2364 = vld [vmem:[#allocation3 + $0x170] sm:$0xff]
      %v2365 = vld [vmem:[#allocation3 + $0x178] sm:$0x3]
      %v2366 = vld [vmem:[#allocation3 + $0x180] sm:$0xff]
      %v2367 = vld [vmem:[#allocation3 + $0x188] sm:$0xff]
      %v2368 = vld [vmem:[#allocation3 + $0x190] sm:$0x3]
      %v2369 = vld [vmem:[#allocation3 + $0x198] sm:$0xff]
      %v2370 = vld [vmem:[#allocation3 + $0x1a0] sm:$0xff]
      %v2371 = vld [vmem:[#allocation3 + $0x1a8] sm:$0x3]
      %v2420 = vrot.slane %v2318, 1
      %v2421 = vrot.slane %v2319, 1
      %v2422 = vsel %vm756, %v2420, %v2421
      %v2423 = vrot.slane %v2320, 1
      %v2424 = vsel %vm756, %v2421, %v2423
      %v2425 = vrot.slane %v2321, 1
      %v2426 = vrot.slane %v2322, 1
      %v2427 = vsel %vm756, %v2425, %v2426
      %v2428 = vrot.slane %v2323, 1
      %v2429 = vsel %vm756, %v2426, %v2428
      %v2430 = vrot.slane %v2324, 1
      %v2431 = vrot.slane %v2325, 1
      %v2432 = vsel %vm756, %v2430, %v2431
      %v2433 = vrot.slane %v2326, 1
      %v2434 = vsel %vm756, %v2431, %v2433
      %v2435 = vrot.slane %v2327, 1
      %v2436 = vrot.slane %v2328, 1
      %v2437 = vsel %vm756, %v2435, %v2436
      %v2438 = vrot.slane %v2329, 1
      %v2439 = vsel %vm756, %v2436, %v2438
      %v2440 = vrot.slane %v2330, 1
      %v2441 = vrot.slane %v2331, 1
      %v2442 = vsel %vm756, %v2440, %v2441
      %v2443 = vrot.slane %v2332, 1
      %v2444 = vsel %vm756, %v2441, %v2443
      %v2445 = vrot.slane %v2333, 1
      %v2446 = vrot.slane %v2334, 1
      %v2447 = vsel %vm756, %v2445, %v2446
      %v2448 = vrot.slane %v2335, 1
      %v2449 = vsel %vm756, %v2446, %v2448
      %v2450 = vrot.slane %v2336, 1
      %v2451 = vrot.slane %v2337, 1
      %v2452 = vsel %vm756, %v2450, %v2451
      %v2453 = vrot.slane %v2338, 1
      %v2454 = vsel %vm756, %v2451, %v2453
      %v2455 = vrot.slane %v2339, 1
      %v2456 = vrot.slane %v2340, 1
      %v2457 = vsel %vm756, %v2455, %v2456
      %v2458 = vrot.slane %v2341, 1
      %v2459 = vsel %vm756, %v2456, %v2458
      %v2460 = vrot.slane %v2342, 1
      %v2461 = vrot.slane %v2343, 1
      %v2462 = vsel %vm756, %v2460, %v2461
      %v2463 = vrot.slane %v2344, 1
      %v2464 = vsel %vm756, %v2461, %v2463
      %v2465 = vrot.slane %v2345, 1
      %v2466 = vrot.slane %v2346, 1
      %v2467 = vsel %vm756, %v2465, %v2466
      %v2468 = vrot.slane %v2347, 1
      %v2469 = vsel %vm756, %v2466, %v2468
      %v2470 = vrot.slane %v2348, 1
      %v2471 = vrot.slane %v2349, 1
      %v2472 = vsel %vm756, %v2470, %v2471
      %v2473 = vrot.slane %v2350, 1
      %v2474 = vsel %vm756, %v2471, %v2473
      %v2475 = vrot.slane %v2351, 1
      %v2476 = vrot.slane %v2352, 1
      %v2477 = vsel %vm756, %v2475, %v2476
      %v2478 = vrot.slane %v2353, 1
      %v2479 = vsel %vm756, %v2476, %v2478
      %v2480 = vrot.slane %v2354, 1
      %v2481 = vrot.slane %v2355, 1
      %v2482 = vsel %vm756, %v2480, %v2481
      %v2483 = vrot.slane %v2356, 1
      %v2484 = vsel %vm756, %v2481, %v2483
      %v2485 = vrot.slane %v2357, 1
      %v2486 = vrot.slane %v2358, 1
      %v2487 = vsel %vm756, %v2485, %v2486
      %v2488 = vrot.slane %v2359, 1
      %v2489 = vsel %vm756, %v2486, %v2488
      %v2490 = vrot.slane %v2360, 1
      %v2491 = vrot.slane %v2361, 1
      %v2492 = vsel %vm756, %v2490, %v2491
      %v2493 = vrot.slane %v2362, 1
      %v2494 = vsel %vm756, %v2491, %v2493
      %v2495 = vrot.slane %v2363, 1
      %v2496 = vrot.slane %v2364, 1
      %v2497 = vsel %vm756, %v2495, %v2496
      %v2498 = vrot.slane %v2365, 1
      %v2499 = vsel %vm756, %v2496, %v2498
      %2500 = vrot.lane.b32.xlu0 %v2422, 8
      %v2501 = vpop.permute.xlu0 %2500
      %2502 = vrot.lane.b32.xlu0 %v2424, 8
      %v2503 = vpop.permute.xlu0 %2502
      %2504 = vrot.lane.b32.xlu0 %v2427, 8
      %v2505 = vpop.permute.xlu0 %2504
      %2506 = vrot.lane.b32.xlu0 %v2429, 8
      %v2507 = vpop.permute.xlu0 %2506
      %2508 = vrot.lane.b32.xlu0 %v2432, 8
      %v2509 = vpop.permute.xlu0 %2508
      %2510 = vrot.lane.b32.xlu0 %v2434, 8
      %v2511 = vpop.permute.xlu0 %2510
      %2512 = vrot.lane.b32.xlu0 %v2437, 8
      %v2513 = vpop.permute.xlu0 %2512
      %2514 = vrot.lane.b32.xlu0 %v2439, 8
      %v2515 = vpop.permute.xlu0 %2514
      %2516 = vrot.lane.b32.xlu0 %v2442, 8
      %v2517 = vpop.permute.xlu0 %2516
      %2518 = vrot.lane.b32.xlu0 %v2444, 8
      %v2519 = vpop.permute.xlu0 %2518
      %2520 = vrot.lane.b32.xlu0 %v2447, 8
      %v2521 = vpop.permute.xlu0 %2520
      %2522 = vrot.lane.b32.xlu0 %v2449, 8
      %v2523 = vpop.permute.xlu0 %2522
      %2524 = vrot.lane.b32.xlu0 %v2452, 8
      %v2525 = vpop.permute.xlu0 %2524
      %2526 = vrot.lane.b32.xlu0 %v2454, 8
      %v2527 = vpop.permute.xlu0 %2526
      %2528 = vrot.lane.b32.xlu0 %v2457, 8
      %v2529 = vpop.permute.xlu0 %2528
      %2530 = vrot.lane.b32.xlu0 %v2459, 8
      %v2531 = vpop.permute.xlu0 %2530
      %2532 = vrot.lane.b32.xlu0 %v2462, 8
      %v2533 = vpop.permute.xlu0 %2532
      %2534 = vrot.lane.b32.xlu0 %v2464, 8
      %v2535 = vpop.permute.xlu0 %2534
      %2536 = vrot.lane.b32.xlu0 %v2467, 8
      %v2537 = vpop.permute.xlu0 %2536
      %2538 = vrot.lane.b32.xlu0 %v2469, 8
      %v2539 = vpop.permute.xlu0 %2538
      %2540 = vrot.lane.b32.xlu0 %v2472, 8
      %v2541 = vpop.permute.xlu0 %2540
      %2542 = vrot.lane.b32.xlu0 %v2474, 8
      %v2543 = vpop.permute.xlu0 %2542
      %2544 = vrot.lane.b32.xlu0 %v2477, 8
      %v2545 = vpop.permute.xlu0 %2544
      %2546 = vrot.lane.b32.xlu0 %v2479, 8
      %v2547 = vpop.permute.xlu0 %2546
      %2548 = vrot.lane.b32.xlu0 %v2482, 8
      %v2549 = vpop.permute.xlu0 %2548
      %2550 = vrot.lane.b32.xlu0 %v2484, 8
      %v2551 = vpop.permute.xlu0 %2550
      %2552 = vrot.lane.b32.xlu0 %v2487, 8
      %v2553 = vpop.permute.xlu0 %2552
      %2554 = vrot.lane.b32.xlu0 %v2489, 8
      %v2555 = vpop.permute.xlu0 %2554
      %2556 = vrot.lane.b32.xlu0 %v2492, 8
      %v2557 = vpop.permute.xlu0 %2556
      %2558 = vrot.lane.b32.xlu0 %v2494, 8
      %v2559 = vpop.permute.xlu0 %2558
      %2560 = vrot.lane.b32.xlu0 %v2497, 8
      %v2561 = vpop.permute.xlu0 %2560
      %2562 = vrot.lane.b32.xlu0 %v2499, 8
      %v2563 = vpop.permute.xlu0 %2562
      %v2596 = vrot.slane %v2318, 2
      %v2597 = vrot.slane %v2319, 2
      %v2598 = vsel %vm955, %v2596, %v2597
      %v2599 = vrot.slane %v2320, 2
      %v2600 = vsel %vm955, %v2597, %v2599
      %v2601 = vrot.slane %v2321, 2
      %v2602 = vrot.slane %v2322, 2
      %v2603 = vsel %vm955, %v2601, %v2602
      %v2604 = vrot.slane %v2323, 2
      %v2605 = vsel %vm955, %v2602, %v2604
      %v2606 = vrot.slane %v2324, 2
      %v2607 = vrot.slane %v2325, 2
      %v2608 = vsel %vm955, %v2606, %v2607
      %v2609 = vrot.slane %v2326, 2
      %v2610 = vsel %vm955, %v2607, %v2609
      %v2611 = vrot.slane %v2327, 2
      %v2612 = vrot.slane %v2328, 2
      %v2613 = vsel %vm955, %v2611, %v2612
      %v2614 = vrot.slane %v2329, 2
      %v2615 = vsel %vm955, %v2612, %v2614
      %v2616 = vrot.slane %v2330, 2
      %v2617 = vrot.slane %v2331, 2
      %v2618 = vsel %vm955, %v2616, %v2617
      %v2619 = vrot.slane %v2332, 2
      %v2620 = vsel %vm955, %v2617, %v2619
      %v2621 = vrot.slane %v2333, 2
      %v2622 = vrot.slane %v2334, 2
      %v2623 = vsel %vm955, %v2621, %v2622
      %v2624 = vrot.slane %v2335, 2
      %v2625 = vsel %vm955, %v2622, %v2624
      %v2626 = vrot.slane %v2336, 2
      %v2627 = vrot.slane %v2337, 2
      %v2628 = vsel %vm955, %v2626, %v2627
      %v2629 = vrot.slane %v2338, 2
      %v2630 = vsel %vm955, %v2627, %v2629
      %v2631 = vrot.slane %v2339, 2
      %v2632 = vrot.slane %v2340, 2
      %v2633 = vsel %vm955, %v2631, %v2632
      %v2634 = vrot.slane %v2341, 2
      %v2635 = vsel %vm955, %v2632, %v2634
      %v2636 = vrot.slane %v2342, 2
      %v2637 = vrot.slane %v2343, 2
      %v2638 = vsel %vm955, %v2636, %v2637
      %v2639 = vrot.slane %v2344, 2
      %v2640 = vsel %vm955, %v2637, %v2639
      %v2641 = vrot.slane %v2345, 2
      %v2642 = vrot.slane %v2346, 2
      %v2643 = vsel %vm955, %v2641, %v2642
      %v2644 = vrot.slane %v2347, 2
      %v2645 = vsel %vm955, %v2642, %v2644
      %v2646 = vrot.slane %v2348, 2
      %v2647 = vrot.slane %v2349, 2
      %v2648 = vsel %vm955, %v2646, %v2647
      %v2649 = vrot.slane %v2350, 2
      %v2650 = vsel %vm955, %v2647, %v2649
      %v2651 = vrot.slane %v2351, 2
      %v2652 = vrot.slane %v2352, 2
      %v2653 = vsel %vm955, %v2651, %v2652
      %v2654 = vrot.slane %v2353, 2
      %v2655 = vsel %vm955, %v2652, %v2654
      %v2656 = vrot.slane %v2354, 2
      %v2657 = vrot.slane %v2355, 2
      %v2658 = vsel %vm955, %v2656, %v2657
      %v2659 = vrot.slane %v2356, 2
      %v2660 = vsel %vm955, %v2657, %v2659
      %v2661 = vrot.slane %v2357, 2
      %v2662 = vrot.slane %v2358, 2
      %v2663 = vsel %vm955, %v2661, %v2662
      %v2664 = vrot.slane %v2359, 2
      %v2665 = vsel %vm955, %v2662, %v2664
      %v2666 = vrot.slane %v2360, 2
      %v2667 = vrot.slane %v2361, 2
      %v2668 = vsel %vm955, %v2666, %v2667
      %v2669 = vrot.slane %v2362, 2
      %v2670 = vsel %vm955, %v2667, %v2669
      %v2671 = vrot.slane %v2363, 2
      %v2672 = vrot.slane %v2364, 2
      %v2673 = vsel %vm955, %v2671, %v2672
      %v2674 = vrot.slane %v2365, 2
      %v2675 = vsel %vm955, %v2672, %v2674
      %2676 = vrot.lane.b32.xlu0 %v2598, 16
      %v2677 = vpop.permute.xlu0 %2676
      %2678 = vrot.lane.b32.xlu0 %v2600, 16
      %v2679 = vpop.permute.xlu0 %2678
      %2680 = vrot.lane.b32.xlu0 %v2603, 16
      %v2681 = vpop.permute.xlu0 %2680
      %2682 = vrot.lane.b32.xlu0 %v2605, 16
      %v2683 = vpop.permute.xlu0 %2682
      %2684 = vrot.lane.b32.xlu0 %v2608, 16
      %v2685 = vpop.permute.xlu0 %2684
      %2686 = vrot.lane.b32.xlu0 %v2610, 16
      %v2687 = vpop.permute.xlu0 %2686
      %2688 = vrot.lane.b32.xlu0 %v2613, 16
      %v2689 = vpop.permute.xlu0 %2688
      %2690 = vrot.lane.b32.xlu0 %v2615, 16
      %v2691 = vpop.permute.xlu0 %2690
      %2692 = vrot.lane.b32.xlu0 %v2618, 16
      %v2693 = vpop.permute.xlu0 %2692
      %2694 = vrot.lane.b32.xlu0 %v2620, 16
      %v2695 = vpop.permute.xlu0 %2694
      %2696 = vrot.lane.b32.xlu0 %v2623, 16
      %v2697 = vpop.permute.xlu0 %2696
      %2698 = vrot.lane.b32.xlu0 %v2625, 16
      %v2699 = vpop.permute.xlu0 %2698
      %2700 = vrot.lane.b32.xlu0 %v2628, 16
      %v2701 = vpop.permute.xlu0 %2700
      %2702 = vrot.lane.b32.xlu0 %v2630, 16
      %v2703 = vpop.permute.xlu0 %2702
      %2704 = vrot.lane.b32.xlu0 %v2633, 16
      %v2705 = vpop.permute.xlu0 %2704
      %2706 = vrot.lane.b32.xlu0 %v2635, 16
      %v2707 = vpop.permute.xlu0 %2706
      %2708 = vrot.lane.b32.xlu0 %v2638, 16
      %v2709 = vpop.permute.xlu0 %2708
      %2710 = vrot.lane.b32.xlu0 %v2640, 16
      %v2711 = vpop.permute.xlu0 %2710
      %2712 = vrot.lane.b32.xlu0 %v2643, 16
      %v2713 = vpop.permute.xlu0 %2712
      %2714 = vrot.lane.b32.xlu0 %v2645, 16
      %v2715 = vpop.permute.xlu0 %2714
      %2716 = vrot.lane.b32.xlu0 %v2648, 16
      %v2717 = vpop.permute.xlu0 %2716
      %2718 = vrot.lane.b32.xlu0 %v2650, 16
      %v2719 = vpop.permute.xlu0 %2718
      %2720 = vrot.lane.b32.xlu0 %v2653, 16
      %v2721 = vpop.permute.xlu0 %2720
      %2722 = vrot.lane.b32.xlu0 %v2655, 16
      %v2723 = vpop.permute.xlu0 %2722
      %2724 = vrot.lane.b32.xlu0 %v2658, 16
      %v2725 = vpop.permute.xlu0 %2724
      %2726 = vrot.lane.b32.xlu0 %v2660, 16
      %v2727 = vpop.permute.xlu0 %2726
      %2728 = vrot.lane.b32.xlu0 %v2663, 16
      %v2729 = vpop.permute.xlu0 %2728
      %2730 = vrot.lane.b32.xlu0 %v2665, 16
      %v2731 = vpop.permute.xlu0 %2730
      %2732 = vrot.lane.b32.xlu0 %v2668, 16
      %v2733 = vpop.permute.xlu0 %2732
      %2734 = vrot.lane.b32.xlu0 %v2670, 16
      %v2735 = vpop.permute.xlu0 %2734
      %2736 = vrot.lane.b32.xlu0 %v2673, 16
      %v2737 = vpop.permute.xlu0 %2736
      %2738 = vrot.lane.b32.xlu0 %v2675, 16
      %v2739 = vpop.permute.xlu0 %2738
      %v2772 = vsel %vm1190, %v2318, %v2501
      %v2773 = vsel %vm1190, %v2319, %v2503
      %v2774 = vsel %vm1190, %v2321, %v2505
      %v2775 = vsel %vm1190, %v2322, %v2507
      %v2776 = vsel %vm1190, %v2324, %v2509
      %v2777 = vsel %vm1190, %v2325, %v2511
      %v2778 = vsel %vm1190, %v2327, %v2513
      %v2779 = vsel %vm1190, %v2328, %v2515
      %v2780 = vsel %vm1190, %v2330, %v2517
      %v2781 = vsel %vm1190, %v2331, %v2519
      %v2782 = vsel %vm1190, %v2333, %v2521
      %v2783 = vsel %vm1190, %v2334, %v2523
      %v2784 = vsel %vm1190, %v2336, %v2525
      %v2785 = vsel %vm1190, %v2337, %v2527
      %v2786 = vsel %vm1190, %v2339, %v2529
      %v2787 = vsel %vm1190, %v2340, %v2531
      %v2788 = vsel %vm1190, %v2342, %v2533
      %v2789 = vsel %vm1190, %v2343, %v2535
      %v2790 = vsel %vm1190, %v2345, %v2537
      %v2791 = vsel %vm1190, %v2346, %v2539
      %v2792 = vsel %vm1190, %v2348, %v2541
      %v2793 = vsel %vm1190, %v2349, %v2543
      %v2794 = vsel %vm1190, %v2351, %v2545
      %v2795 = vsel %vm1190, %v2352, %v2547
      %v2796 = vsel %vm1190, %v2354, %v2549
      %v2797 = vsel %vm1190, %v2355, %v2551
      %v2798 = vsel %vm1190, %v2357, %v2553
      %v2799 = vsel %vm1190, %v2358, %v2555
      %v2800 = vsel %vm1190, %v2360, %v2557
      %v2801 = vsel %vm1190, %v2361, %v2559
      %v2802 = vsel %vm1190, %v2363, %v2561
      %v2803 = vsel %vm1190, %v2364, %v2563
      %vm2804 = vcmask 130048
      %v2805 = vsel %vm2804, %v2772, %v2677
      %v2806 = vsel %vm2804, %v2773, %v2679
      %v2807 = vsel %vm2804, %v2774, %v2681
      %v2808 = vsel %vm2804, %v2775, %v2683
      %v2809 = vsel %vm2804, %v2776, %v2685
      %v2810 = vsel %vm2804, %v2777, %v2687
      %v2811 = vsel %vm2804, %v2778, %v2689
      %v2812 = vsel %vm2804, %v2779, %v2691
      %v2813 = vsel %vm2804, %v2780, %v2693
      %v2814 = vsel %vm2804, %v2781, %v2695
      %v2815 = vsel %vm2804, %v2782, %v2697
      %v2816 = vsel %vm2804, %v2783, %v2699
      %v2817 = vsel %vm2804, %v2784, %v2701
      %v2818 = vsel %vm2804, %v2785, %v2703
      %v2819 = vsel %vm2804, %v2786, %v2705
      %v2820 = vsel %vm2804, %v2787, %v2707
      %v2821 = vsel %vm2804, %v2788, %v2709
      %v2822 = vsel %vm2804, %v2789, %v2711
      %v2823 = vsel %vm2804, %v2790, %v2713
      %v2824 = vsel %vm2804, %v2791, %v2715
      %v2825 = vsel %vm2804, %v2792, %v2717
      %v2826 = vsel %vm2804, %v2793, %v2719
      %v2827 = vsel %vm2804, %v2794, %v2721
      %v2828 = vsel %vm2804, %v2795, %v2723
      %v2829 = vsel %vm2804, %v2796, %v2725
      %v2830 = vsel %vm2804, %v2797, %v2727
      %v2831 = vsel %vm2804, %v2798, %v2729
      %v2832 = vsel %vm2804, %v2799, %v2731
      %v2833 = vsel %vm2804, %v2800, %v2733
      %v2834 = vsel %vm2804, %v2801, %v2735
      %v2835 = vsel %vm2804, %v2802, %v2737
      %v2836 = vsel %vm2804, %v2803, %v2739
      %v2837 = vld [vmem:[%s5] sm:$0xff]
      %v2838 = vld [vmem:[%s5 + $0x8] sm:$0xff]
      %v2839 = vld [vmem:[%s5 + $0x10] sm:$0xff]
      %v2843 = vrot.slane %v2366, 1
      %v2844 = vrot.slane %v2367, 1
      %v2845 = vsel %vm756, %v2843, %v2844
      %v2846 = vrot.slane %v2368, 1
      %v2847 = vsel %vm756, %v2844, %v2846
      %2848 = vrot.lane.b32.xlu0 %v2845, 8
      %v2849 = vpop.permute.xlu0 %2848
      %2850 = vrot.lane.b32.xlu0 %v2847, 8
      %v2851 = vpop.permute.xlu0 %2850
      %v2854 = vrot.slane %v2366, 2
      %v2855 = vrot.slane %v2367, 2
      %v2856 = vsel %vm955, %v2854, %v2855
      %v2857 = vrot.slane %v2368, 2
      %v2858 = vsel %vm955, %v2855, %v2857
      %2859 = vrot.lane.b32.xlu0 %v2856, 16
      %v2860 = vpop.permute.xlu0 %2859
      %2861 = vrot.lane.b32.xlu0 %v2858, 16
      %v2862 = vpop.permute.xlu0 %2861
      %v2865 = vsel %vm1190, %v2366, %v2849
      %v2866 = vsel %vm1190, %v2367, %v2851
      %v2867 = vsel %vm2804, %v2865, %v2860
      %v2868 = vsel %vm2804, %v2866, %v2862
      %s2869 = scalar_lea.vmem %s5, 24
      %v2870 = vld [vmem:[%s2869] sm:$0xff]
      %v2871 = vld [vmem:[%s2869 + $0x8] sm:$0xff]
      %v2872 = vld [vmem:[%s2869 + $0x10] sm:$0xff]
      %vm2873 = vcmask 195584
      %v2875 = vsel %vm2873, %v2807, 0
      %v2878 = vsel %vm2873, %v2808, 0
      %v2881 = vsel %vm2873, %v2809, 0
      %v2884 = vsel %vm2873, %v2810, 0
      %v2887 = vsel %vm2873, %v2811, 0
      %v2890 = vsel %vm2873, %v2812, 0
      %v2893 = vsel %vm2873, %v2813, 0
      %v2896 = vsel %vm2873, %v2814, 0
      %v2899 = vsel %vm2873, %v2815, 0
      %v2902 = vsel %vm2873, %v2816, 0
      %v2905 = vsel %vm2873, %v2817, 0
      %v2908 = vsel %vm2873, %v2818, 0
      %v2911 = vsel %vm2873, %v2819, 0
      %v2914 = vsel %vm2873, %v2820, 0
      %v2917 = vsel %vm2873, %v2821, 0
      %v2920 = vsel %vm2873, %v2822, 0
      %v2923 = vsel %vm2873, %v2823, 0
      %v2926 = vsel %vm2873, %v2824, 0
      %v2929 = vsel %vm2873, %v2825, 0
      %v2932 = vsel %vm2873, %v2826, 0
      %v2935 = vsel %vm2873, %v2827, 0
      %v2938 = vsel %vm2873, %v2828, 0
      %v2941 = vsel %vm2873, %v2829, 0
      %v2944 = vsel %vm2873, %v2830, 0
      %v2947 = vsel %vm2873, %v2831, 0
      %v2950 = vsel %vm2873, %v2832, 0
      %v2953 = vsel %vm2873, %v2833, 0
      %v2956 = vsel %vm2873, %v2834, 0
      %v2959 = vsel %vm2873, %v2835, 0
      %v2962 = vsel %vm2873, %v2836, 0
      %v2965 = vsel %vm2873, %v2867, 0
      %v2968 = vsel %vm2873, %v2868, 0
      %2970 = vmatprep.subr.mxu0 0.0
      %2971 = vmatpush1.msra.mxu0 0.0
      %2972 = vmatprep.subr.mxu0 0.0
      %2973 = vmatpush1.msra.mxu0 0.0
      %2974 = vmatprep.subr.mxu0 0.0
      %2975 = vmatpush1.msra.mxu0 0.0
      %2976 = vmatprep.subr.mxu0 0.0
      %2977 = vmatpush1.msra.mxu0 0.0
      %2978 = vmatprep.subr.mxu0 0.0
      %2979 = vmatpush1.msra.mxu0 0.0
      %2980 = vmatprep.subr.mxu0 0.0
      %2981 = vmatpush1.msra.mxu0 0.0
      %2982 = vmatprep.subr.mxu0 0.0
      %2983 = vmatpush1.msra.mxu0 0.0
      %2984 = vmatprep.subr.mxu0 0.0
      %2985 = vmatpush1.msra.mxu0 0.0
      %2986 = vmatprep.subr.mxu0 0.0
      %2987 = vmatpush1.msra.mxu0 0.0
      %2988 = vmatprep.subr.mxu0 0.0
      %2989 = vmatpush1.msra.mxu0 0.0
      %2990 = vmatprep.subr.mxu0 0.0
      %2991 = vmatpush1.msra.mxu0 0.0
      %2992 = vmatprep.subr.mxu0 0.0
      %2993 = vmatpush1.msra.mxu0 0.0
      %2994 = vmatprep.subr.mxu0 0.0
      %2995 = vmatpush1.msra.mxu0 0.0
      %2996 = vmatprep.subr.mxu0 0.0
      %2997 = vmatpush1.msra.mxu0 %v2872
      %2998 = vmatprep.subr.mxu0 0.0
      %2999 = vmatpush1.msra.mxu0 %v2871
      %3000 = vmatprep.subr.mxu0 0.0
      %3001 = vmatpush1.msra.mxu0 %v2870
      %3002 = vmatprep.subr.mxu0 0.0
      %3003 = vmatpush2.msra.mxu0 0.0
      %3004 = vmatprep.subr.mxu0 0.0
      %3005 = vmatpush2.msra.mxu0 0.0
      %3006 = vmatprep.subr.mxu0 0.0
      %3007 = vmatpush2.msra.mxu0 0.0
      %3008 = vmatprep.subr.mxu0 0.0
      %3009 = vmatpush2.msra.mxu0 0.0
      %3010 = vmatprep.subr.mxu0 0.0
      %3011 = vmatpush2.msra.mxu0 0.0
      %3012 = vmatprep.subr.mxu0 0.0
      %3013 = vmatpush2.msra.mxu0 0.0
      %3014 = vmatprep.subr.mxu0 0.0
      %3015 = vmatpush2.msra.mxu0 0.0
      %3016 = vmatprep.subr.mxu0 0.0
      %3017 = vmatpush2.msra.mxu0 0.0
      %3018 = vmatprep.subr.mxu0 0.0
      %3019 = vmatpush2.msra.mxu0 0.0
      %3020 = vmatprep.subr.mxu0 0.0
      %3021 = vmatpush2.msra.mxu0 0.0
      %3022 = vmatprep.subr.mxu0 0.0
      %3023 = vmatpush2.msra.mxu0 0.0
      %3024 = vmatprep.subr.mxu0 0.0
      %3025 = vmatpush2.msra.mxu0 0.0
      %3026 = vmatprep.subr.mxu0 0.0
      %3027 = vmatpush2.msra.mxu0 0.0
      %3028 = vmatprep.subr.mxu0 0.0
      %3029 = vmatpush2.msra.mxu0 0.0
      %3030 = vmatprep.subr.mxu0 0.0
      %3031 = vmatpush2.msra.mxu0 0.0
      %3032 = vmatprep.subr.mxu0 0.0
      %3033 = vmatpush2.msra.mxu0 0.0
      %3034 = vmatprep.mubr.f32.mxu0 0.0
      %3035 = vmatmul.mubr.f32.gmra.mxu0 %v2875
      %v3036 = vpop.f32.mrf.mxu0
      %v3037 = vadd.f32 0.0, %v3036
      %v3038 = vpop.f32.mrf.mxu0
      %3039 = vmatprep.mubr.f32.mxu0 0.0
      %3040 = vmatmul.mubr.f32.gmra.mxu0 %v2878
      %v3041 = vpop.f32.mrf.mxu0
      %v3042 = vadd.f32 0.0, %v3041
      %v3043 = vpop.f32.mrf.mxu0
      %3044 = vmatprep.mubr.f32.mxu0 0.0
      %3045 = vmatmul.mubr.f32.gmra.mxu0 %v2881
      %v3046 = vpop.f32.mrf.mxu0
      %v3047 = vadd.f32 0.0, %v3046
      %v3048 = vpop.f32.mrf.mxu0
      %3049 = vmatprep.mubr.f32.mxu0 0.0
      %3050 = vmatmul.mubr.f32.gmra.mxu0 %v2884
      %v3051 = vpop.f32.mrf.mxu0
      %v3052 = vadd.f32 0.0, %v3051
      %v3053 = vpop.f32.mrf.mxu0
      %3054 = vmatprep.mubr.f32.mxu0 0.0
      %3055 = vmatmul.mubr.f32.gmra.mxu0 %v2887
      %v3056 = vpop.f32.mrf.mxu0
      %v3057 = vadd.f32 0.0, %v3056
      %v3058 = vpop.f32.mrf.mxu0
      %3059 = vmatprep.mubr.f32.mxu0 0.0
      %3060 = vmatmul.mubr.f32.gmra.mxu0 %v2890
      %v3061 = vpop.f32.mrf.mxu0
      %v3062 = vadd.f32 0.0, %v3061
      %v3063 = vpop.f32.mrf.mxu0
      %3064 = vmatprep.mubr.f32.mxu0 0.0
      %3065 = vmatmul.mubr.f32.gmra.mxu0 %v2893
      %v3066 = vpop.f32.mrf.mxu0
      %v3067 = vadd.f32 0.0, %v3066
      %v3068 = vpop.f32.mrf.mxu0
      %3069 = vmatprep.mubr.f32.mxu0 0.0
      %3070 = vmatmul.mubr.f32.gmra.mxu0 %v2896
      %v3071 = vpop.f32.mrf.mxu0
      %v3072 = vadd.f32 0.0, %v3071
      %v3073 = vpop.f32.mrf.mxu0
      %3074 = vmatprep.mubr.f32.mxu0 0.0
      %3075 = vmatmul.mubr.f32.gmra.mxu0 %v2899
      %v3076 = vpop.f32.mrf.mxu0
      %v3077 = vadd.f32 0.0, %v3076
      %v3078 = vpop.f32.mrf.mxu0
      %3079 = vmatprep.mubr.f32.mxu0 0.0
      %3080 = vmatmul.mubr.f32.gmra.mxu0 %v2902
      %v3081 = vpop.f32.mrf.mxu0
      %v3082 = vadd.f32 0.0, %v3081
      %v3083 = vpop.f32.mrf.mxu0
      %3084 = vmatprep.mubr.f32.mxu0 0.0
      %3085 = vmatmul.mubr.f32.gmra.mxu0 %v2905
      %v3086 = vpop.f32.mrf.mxu0
      %v3087 = vadd.f32 0.0, %v3086
      %v3088 = vpop.f32.mrf.mxu0
      %3089 = vmatprep.mubr.f32.mxu0 0.0
      %3090 = vmatmul.mubr.f32.gmra.mxu0 %v2908
      %v3091 = vpop.f32.mrf.mxu0
      %v3092 = vadd.f32 0.0, %v3091
      %v3093 = vpop.f32.mrf.mxu0
      %3094 = vmatprep.mubr.f32.mxu0 0.0
      %3095 = vmatmul.mubr.f32.gmra.mxu0 %v2911
      %v3096 = vpop.f32.mrf.mxu0
      %v3097 = vadd.f32 0.0, %v3096
      %v3098 = vpop.f32.mrf.mxu0
      %3099 = vmatprep.mubr.f32.mxu0 0.0
      %3100 = vmatmul.mubr.f32.gmra.mxu0 %v2914
      %v3101 = vpop.f32.mrf.mxu0
      %v3102 = vadd.f32 0.0, %v3101
      %v3103 = vpop.f32.mrf.mxu0
      %3104 = vmatprep.mubr.f32.mxu0 0.0
      %3105 = vmatmul.mubr.f32.gmra.mxu0 %v2917
      %v3106 = vpop.f32.mrf.mxu0
      %v3107 = vadd.f32 0.0, %v3106
      %v3108 = vpop.f32.mrf.mxu0
      %3109 = vmatprep.mubr.f32.mxu0 0.0
      %3110 = vmatmul.mubr.f32.gmra.mxu0 %v2920
      %v3111 = vpop.f32.mrf.mxu0
      %v3112 = vadd.f32 0.0, %v3111
      %v3113 = vpop.f32.mrf.mxu0
      %3114 = vmatprep.mubr.f32.mxu0 0.0
      %3115 = vmatmul.mubr.f32.gmra.mxu0 %v2923
      %v3116 = vpop.f32.mrf.mxu0
      %v3117 = vadd.f32 0.0, %v3116
      %v3118 = vpop.f32.mrf.mxu0
      %3119 = vmatprep.mubr.f32.mxu0 0.0
      %3120 = vmatmul.mubr.f32.gmra.mxu0 %v2926
      %v3121 = vpop.f32.mrf.mxu0
      %v3122 = vadd.f32 0.0, %v3121
      %v3123 = vpop.f32.mrf.mxu0
      %3124 = vmatprep.mubr.f32.mxu0 0.0
      %3125 = vmatmul.mubr.f32.gmra.mxu0 %v2929
      %v3126 = vpop.f32.mrf.mxu0
      %v3127 = vadd.f32 0.0, %v3126
      %v3128 = vpop.f32.mrf.mxu0
      %3129 = vmatprep.mubr.f32.mxu0 0.0
      %3130 = vmatmul.mubr.f32.gmra.mxu0 %v2932
      %v3131 = vpop.f32.mrf.mxu0
      %v3132 = vadd.f32 0.0, %v3131
      %v3133 = vpop.f32.mrf.mxu0
      %3134 = vmatprep.mubr.f32.mxu0 0.0
      %3135 = vmatmul.mubr.f32.gmra.mxu0 %v2935
      %v3136 = vpop.f32.mrf.mxu0
      %v3137 = vadd.f32 0.0, %v3136
      %v3138 = vpop.f32.mrf.mxu0
      %3139 = vmatprep.mubr.f32.mxu0 0.0
      %3140 = vmatmul.mubr.f32.gmra.mxu0 %v2938
      %v3141 = vpop.f32.mrf.mxu0
      %v3142 = vadd.f32 0.0, %v3141
      %v3143 = vpop.f32.mrf.mxu0
      %3144 = vmatprep.mubr.f32.mxu0 0.0
      %3145 = vmatmul.mubr.f32.gmra.mxu0 %v2941
      %v3146 = vpop.f32.mrf.mxu0
      %v3147 = vadd.f32 0.0, %v3146
      %v3148 = vpop.f32.mrf.mxu0
      %3149 = vmatprep.mubr.f32.mxu0 0.0
      %3150 = vmatmul.mubr.f32.gmra.mxu0 %v2944
      %v3151 = vpop.f32.mrf.mxu0
      %v3152 = vadd.f32 0.0, %v3151
      %v3153 = vpop.f32.mrf.mxu0
      %3154 = vmatprep.mubr.f32.mxu0 0.0
      %3155 = vmatmul.mubr.f32.gmra.mxu0 %v2947
      %v3156 = vpop.f32.mrf.mxu0
      %v3157 = vadd.f32 0.0, %v3156
      %v3158 = vpop.f32.mrf.mxu0
      %3159 = vmatprep.mubr.f32.mxu0 0.0
      %3160 = vmatmul.mubr.f32.gmra.mxu0 %v2950
      %v3161 = vpop.f32.mrf.mxu0
      %v3162 = vadd.f32 0.0, %v3161
      %v3163 = vpop.f32.mrf.mxu0
      %3164 = vmatprep.mubr.f32.mxu0 0.0
      %3165 = vmatmul.mubr.f32.gmra.mxu0 %v2953
      %v3166 = vpop.f32.mrf.mxu0
      %v3167 = vadd.f32 0.0, %v3166
      %v3168 = vpop.f32.mrf.mxu0
      %3169 = vmatprep.mubr.f32.mxu0 0.0
      %3170 = vmatmul.mubr.f32.gmra.mxu0 %v2956
      %v3171 = vpop.f32.mrf.mxu0
      %v3172 = vadd.f32 0.0, %v3171
      %v3173 = vpop.f32.mrf.mxu0
      %3174 = vmatprep.mubr.f32.mxu0 0.0
      %3175 = vmatmul.mubr.f32.gmra.mxu0 %v2959
      %v3176 = vpop.f32.mrf.mxu0
      %v3177 = vadd.f32 0.0, %v3176
      %v3178 = vpop.f32.mrf.mxu0
      %3179 = vmatprep.mubr.f32.mxu0 0.0
      %3180 = vmatmul.mubr.f32.gmra.mxu0 %v2962
      %v3181 = vpop.f32.mrf.mxu0
      %v3182 = vadd.f32 0.0, %v3181
      %v3183 = vpop.f32.mrf.mxu0
      %3184 = vmatprep.mubr.f32.mxu0 0.0
      %3185 = vmatmul.mubr.f32.gmra.mxu0 %v2965
      %v3186 = vpop.f32.mrf.mxu0
      %v3187 = vadd.f32 0.0, %v3186
      %v3188 = vpop.f32.mrf.mxu0
      %3189 = vmatprep.mubr.f32.mxu0 0.0
      %3190 = vmatmul.mubr.f32.gmra.mxu0 %v2968
      %v3191 = vpop.f32.mrf.mxu0
      %v3192 = vadd.f32 0.0, %v3191
      %v3193 = vpop.f32.mrf.mxu0
      %3194 = vdwg.mxu0
      %v3196 = vsel %vm2873, %v2805, 0
      %v3199 = vsel %vm2873, %v2806, 0
      %3201 = vmatprep.subr.mxu0 0.0
      %3202 = vmatpush1.msra.mxu0 0.0
      %3203 = vmatprep.subr.mxu0 0.0
      %3204 = vmatpush1.msra.mxu0 0.0
      %3205 = vmatprep.subr.mxu0 0.0
      %3206 = vmatpush1.msra.mxu0 0.0
      %3207 = vmatprep.subr.mxu0 0.0
      %3208 = vmatpush1.msra.mxu0 0.0
      %3209 = vmatprep.subr.mxu0 0.0
      %3210 = vmatpush1.msra.mxu0 0.0
      %3211 = vmatprep.subr.mxu0 0.0
      %3212 = vmatpush1.msra.mxu0 0.0
      %3213 = vmatprep.subr.mxu0 0.0
      %3214 = vmatpush1.msra.mxu0 0.0
      %3215 = vmatprep.subr.mxu0 0.0
      %3216 = vmatpush1.msra.mxu0 0.0
      %3217 = vmatprep.subr.mxu0 0.0
      %3218 = vmatpush1.msra.mxu0 0.0
      %3219 = vmatprep.subr.mxu0 0.0
      %3220 = vmatpush1.msra.mxu0 0.0
      %3221 = vmatprep.subr.mxu0 0.0
      %3222 = vmatpush1.msra.mxu0 0.0
      %3223 = vmatprep.subr.mxu0 0.0
      %3224 = vmatpush1.msra.mxu0 0.0
      %3225 = vmatprep.subr.mxu0 0.0
      %3226 = vmatpush1.msra.mxu0 0.0
      %3227 = vmatprep.subr.mxu0 0.0
      %3228 = vmatpush1.msra.mxu0 %v2839
      %3229 = vmatprep.subr.mxu0 0.0
      %3230 = vmatpush1.msra.mxu0 %v2838
      %3231 = vmatprep.subr.mxu0 0.0
      %3232 = vmatpush1.msra.mxu0 %v2837
      %3233 = vmatprep.subr.mxu0 0.0
      %3234 = vmatpush2.msra.mxu0 0.0
      %3235 = vmatprep.subr.mxu0 0.0
      %3236 = vmatpush2.msra.mxu0 0.0
      %3237 = vmatprep.subr.mxu0 0.0
      %3238 = vmatpush2.msra.mxu0 0.0
      %3239 = vmatprep.subr.mxu0 0.0
      %3240 = vmatpush2.msra.mxu0 0.0
      %3241 = vmatprep.subr.mxu0 0.0
      %3242 = vmatpush2.msra.mxu0 0.0
      %3243 = vmatprep.subr.mxu0 0.0
      %3244 = vmatpush2.msra.mxu0 0.0
      %3245 = vmatprep.subr.mxu0 0.0
      %3246 = vmatpush2.msra.mxu0 0.0
      %3247 = vmatprep.subr.mxu0 0.0
      %3248 = vmatpush2.msra.mxu0 0.0
      %3249 = vmatprep.subr.mxu0 0.0
      %3250 = vmatpush2.msra.mxu0 0.0
      %3251 = vmatprep.subr.mxu0 0.0
      %3252 = vmatpush2.msra.mxu0 0.0
      %3253 = vmatprep.subr.mxu0 0.0
      %3254 = vmatpush2.msra.mxu0 0.0
      %3255 = vmatprep.subr.mxu0 0.0
      %3256 = vmatpush2.msra.mxu0 0.0
      %3257 = vmatprep.subr.mxu0 0.0
      %3258 = vmatpush2.msra.mxu0 0.0
      %3259 = vmatprep.subr.mxu0 0.0
      %3260 = vmatpush2.msra.mxu0 0.0
      %3261 = vmatprep.subr.mxu0 0.0
      %3262 = vmatpush2.msra.mxu0 0.0
      %3263 = vmatprep.subr.mxu0 0.0
      %3264 = vmatpush2.msra.mxu0 0.0
      %3265 = vmatprep.mubr.f32.mxu0 0.0
      %3266 = vmatmul.mubr.f32.gmra.mxu0 %v3196
      %v3267 = vpop.f32.mrf.mxu0
      %v3268 = vadd.f32 %v3037, %v3267
      %v3269 = vpop.f32.mrf.mxu0
      %3270 = vmatprep.mubr.f32.mxu0 0.0
      %3271 = vmatmul.mubr.f32.gmra.mxu0 %v3199
      %v3272 = vpop.f32.mrf.mxu0
      %v3273 = vadd.f32 %v3042, %v3272
      %v3274 = vpop.f32.mrf.mxu0
      %3275 = vmatprep.mubr.f32.mxu0 0.0
      %3276 = vmatmul.mubr.f32.gmra.mxu0 %v2875
      %v3277 = vpop.f32.mrf.mxu0
      %v3278 = vadd.f32 %v3047, %v3277
      %v3279 = vpop.f32.mrf.mxu0
      %3280 = vmatprep.mubr.f32.mxu0 0.0
      %3281 = vmatmul.mubr.f32.gmra.mxu0 %v2878
      %v3282 = vpop.f32.mrf.mxu0
      %v3283 = vadd.f32 %v3052, %v3282
      %v3284 = vpop.f32.mrf.mxu0
      %3285 = vmatprep.mubr.f32.mxu0 0.0
      %3286 = vmatmul.mubr.f32.gmra.mxu0 %v2881
      %v3287 = vpop.f32.mrf.mxu0
      %v3288 = vadd.f32 %v3057, %v3287
      %v3289 = vpop.f32.mrf.mxu0
      %3290 = vmatprep.mubr.f32.mxu0 0.0
      %3291 = vmatmul.mubr.f32.gmra.mxu0 %v2884
      %v3292 = vpop.f32.mrf.mxu0
      %v3293 = vadd.f32 %v3062, %v3292
      %v3294 = vpop.f32.mrf.mxu0
      %3295 = vmatprep.mubr.f32.mxu0 0.0
      %3296 = vmatmul.mubr.f32.gmra.mxu0 %v2887
      %v3297 = vpop.f32.mrf.mxu0
      %v3298 = vadd.f32 %v3067, %v3297
      %v3299 = vpop.f32.mrf.mxu0
      %3300 = vmatprep.mubr.f32.mxu0 0.0
      %3301 = vmatmul.mubr.f32.gmra.mxu0 %v2890
      %v3302 = vpop.f32.mrf.mxu0
      %v3303 = vadd.f32 %v3072, %v3302
      %v3304 = vpop.f32.mrf.mxu0
      %3305 = vmatprep.mubr.f32.mxu0 0.0
      %3306 = vmatmul.mubr.f32.gmra.mxu0 %v2893
      %v3307 = vpop.f32.mrf.mxu0
      %v3308 = vadd.f32 %v3077, %v3307
      %v3309 = vpop.f32.mrf.mxu0
      %3310 = vmatprep.mubr.f32.mxu0 0.0
      %3311 = vmatmul.mubr.f32.gmra.mxu0 %v2896
      %v3312 = vpop.f32.mrf.mxu0
      %v3313 = vadd.f32 %v3082, %v3312
      %v3314 = vpop.f32.mrf.mxu0
      %3315 = vmatprep.mubr.f32.mxu0 0.0
      %3316 = vmatmul.mubr.f32.gmra.mxu0 %v2899
      %v3317 = vpop.f32.mrf.mxu0
      %v3318 = vadd.f32 %v3087, %v3317
      %v3319 = vpop.f32.mrf.mxu0
      %3320 = vmatprep.mubr.f32.mxu0 0.0
      %3321 = vmatmul.mubr.f32.gmra.mxu0 %v2902
      %v3322 = vpop.f32.mrf.mxu0
      %v3323 = vadd.f32 %v3092, %v3322
      %v3324 = vpop.f32.mrf.mxu0
      %3325 = vmatprep.mubr.f32.mxu0 0.0
      %3326 = vmatmul.mubr.f32.gmra.mxu0 %v2905
      %v3327 = vpop.f32.mrf.mxu0
      %v3328 = vadd.f32 %v3097, %v3327
      %v3329 = vpop.f32.mrf.mxu0
      %3330 = vmatprep.mubr.f32.mxu0 0.0
      %3331 = vmatmul.mubr.f32.gmra.mxu0 %v2908
      %v3332 = vpop.f32.mrf.mxu0
      %v3333 = vadd.f32 %v3102, %v3332
      %v3334 = vpop.f32.mrf.mxu0
      %3335 = vmatprep.mubr.f32.mxu0 0.0
      %3336 = vmatmul.mubr.f32.gmra.mxu0 %v2911
      %v3337 = vpop.f32.mrf.mxu0
      %v3338 = vadd.f32 %v3107, %v3337
      %v3339 = vpop.f32.mrf.mxu0
      %3340 = vmatprep.mubr.f32.mxu0 0.0
      %3341 = vmatmul.mubr.f32.gmra.mxu0 %v2914
      %v3342 = vpop.f32.mrf.mxu0
      %v3343 = vadd.f32 %v3112, %v3342
      %v3344 = vpop.f32.mrf.mxu0
      %3345 = vmatprep.mubr.f32.mxu0 0.0
      %3346 = vmatmul.mubr.f32.gmra.mxu0 %v2917
      %v3347 = vpop.f32.mrf.mxu0
      %v3348 = vadd.f32 %v3117, %v3347
      %v3349 = vpop.f32.mrf.mxu0
      %3350 = vmatprep.mubr.f32.mxu0 0.0
      %3351 = vmatmul.mubr.f32.gmra.mxu0 %v2920
      %v3352 = vpop.f32.mrf.mxu0
      %v3353 = vadd.f32 %v3122, %v3352
      %v3354 = vpop.f32.mrf.mxu0
      %3355 = vmatprep.mubr.f32.mxu0 0.0
      %3356 = vmatmul.mubr.f32.gmra.mxu0 %v2923
      %v3357 = vpop.f32.mrf.mxu0
      %v3358 = vadd.f32 %v3127, %v3357
      %v3359 = vpop.f32.mrf.mxu0
      %3360 = vmatprep.mubr.f32.mxu0 0.0
      %3361 = vmatmul.mubr.f32.gmra.mxu0 %v2926
      %v3362 = vpop.f32.mrf.mxu0
      %v3363 = vadd.f32 %v3132, %v3362
      %v3364 = vpop.f32.mrf.mxu0
      %3365 = vmatprep.mubr.f32.mxu0 0.0
      %3366 = vmatmul.mubr.f32.gmra.mxu0 %v2929
      %v3367 = vpop.f32.mrf.mxu0
      %v3368 = vadd.f32 %v3137, %v3367
      %v3369 = vpop.f32.mrf.mxu0
      %3370 = vmatprep.mubr.f32.mxu0 0.0
      %3371 = vmatmul.mubr.f32.gmra.mxu0 %v2932
      %v3372 = vpop.f32.mrf.mxu0
      %v3373 = vadd.f32 %v3142, %v3372
      %v3374 = vpop.f32.mrf.mxu0
      %3375 = vmatprep.mubr.f32.mxu0 0.0
      %3376 = vmatmul.mubr.f32.gmra.mxu0 %v2935
      %v3377 = vpop.f32.mrf.mxu0
      %v3378 = vadd.f32 %v3147, %v3377
      %v3379 = vpop.f32.mrf.mxu0
      %3380 = vmatprep.mubr.f32.mxu0 0.0
      %3381 = vmatmul.mubr.f32.gmra.mxu0 %v2938
      %v3382 = vpop.f32.mrf.mxu0
      %v3383 = vadd.f32 %v3152, %v3382
      %v3384 = vpop.f32.mrf.mxu0
      %3385 = vmatprep.mubr.f32.mxu0 0.0
      %3386 = vmatmul.mubr.f32.gmra.mxu0 %v2941
      %v3387 = vpop.f32.mrf.mxu0
      %v3388 = vadd.f32 %v3157, %v3387
      %v3389 = vpop.f32.mrf.mxu0
      %3390 = vmatprep.mubr.f32.mxu0 0.0
      %3391 = vmatmul.mubr.f32.gmra.mxu0 %v2944
      %v3392 = vpop.f32.mrf.mxu0
      %v3393 = vadd.f32 %v3162, %v3392
      %v3394 = vpop.f32.mrf.mxu0
      %3395 = vmatprep.mubr.f32.mxu0 0.0
      %3396 = vmatmul.mubr.f32.gmra.mxu0 %v2947
      %v3397 = vpop.f32.mrf.mxu0
      %v3398 = vadd.f32 %v3167, %v3397
      %v3399 = vpop.f32.mrf.mxu0
      %3400 = vmatprep.mubr.f32.mxu0 0.0
      %3401 = vmatmul.mubr.f32.gmra.mxu0 %v2950
      %v3402 = vpop.f32.mrf.mxu0
      %v3403 = vadd.f32 %v3172, %v3402
      %v3404 = vpop.f32.mrf.mxu0
      %3405 = vmatprep.mubr.f32.mxu0 0.0
      %3406 = vmatmul.mubr.f32.gmra.mxu0 %v2953
      %v3407 = vpop.f32.mrf.mxu0
      %v3408 = vadd.f32 %v3177, %v3407
      %v3409 = vpop.f32.mrf.mxu0
      %3410 = vmatprep.mubr.f32.mxu0 0.0
      %3411 = vmatmul.mubr.f32.gmra.mxu0 %v2956
      %v3412 = vpop.f32.mrf.mxu0
      %v3413 = vadd.f32 %v3182, %v3412
      %v3414 = vpop.f32.mrf.mxu0
      %3415 = vmatprep.mubr.f32.mxu0 0.0
      %3416 = vmatmul.mubr.f32.gmra.mxu0 %v2959
      %v3417 = vpop.f32.mrf.mxu0
      %v3418 = vadd.f32 %v3187, %v3417
      %v3419 = vpop.f32.mrf.mxu0
      %3420 = vmatprep.mubr.f32.mxu0 0.0
      %3421 = vmatmul.mubr.f32.gmra.mxu0 %v2962
      %v3422 = vpop.f32.mrf.mxu0
      %v3423 = vadd.f32 %v3192, %v3422
      %v3424 = vpop.f32.mrf.mxu0
      %3425 = vdwg.mxu0
      %v3429 = vrot.slane %v2369, 1
      %v3430 = vrot.slane %v2370, 1
      %v3431 = vsel %vm756, %v3429, %v3430
      %v3432 = vrot.slane %v2371, 1
      %v3433 = vsel %vm756, %v3430, %v3432
      %3434 = vrot.lane.b32.xlu0 %v3431, 8
      %v3435 = vpop.permute.xlu0 %3434
      %3436 = vrot.lane.b32.xlu0 %v3433, 8
      %v3437 = vpop.permute.xlu0 %3436
      %v3440 = vrot.slane %v2369, 2
      %v3441 = vrot.slane %v2370, 2
      %v3442 = vsel %vm955, %v3440, %v3441
      %v3443 = vrot.slane %v2371, 2
      %v3444 = vsel %vm955, %v3441, %v3443
      %3445 = vrot.lane.b32.xlu0 %v3442, 16
      %v3446 = vpop.permute.xlu0 %3445
      %3447 = vrot.lane.b32.xlu0 %v3444, 16
      %v3448 = vpop.permute.xlu0 %3447
      %v3451 = vsel %vm1190, %v2369, %v3435
      %v3452 = vsel %vm1190, %v2370, %v3437
      %v3453 = vsel %vm2804, %v3451, %v3446
      %v3454 = vsel %vm2804, %v3452, %v3448
      %s3455 = scalar_lea.vmem %s5, 48
      %v3456 = vld [vmem:[%s3455] sm:$0xff]
      %v3457 = vld [vmem:[%s3455 + $0x8] sm:$0xff]
      %v3458 = vld [vmem:[%s3455 + $0x10] sm:$0xff]
      %v3460 = vsel %vm2873, %v3453, 0
      %v3463 = vsel %vm2873, %v3454, 0
      %3465 = vmatprep.subr.mxu0 0.0
      %3466 = vmatpush1.msra.mxu0 0.0
      %3467 = vmatprep.subr.mxu0 0.0
      %3468 = vmatpush1.msra.mxu0 0.0
      %3469 = vmatprep.subr.mxu0 0.0
      %3470 = vmatpush1.msra.mxu0 0.0
      %3471 = vmatprep.subr.mxu0 0.0
      %3472 = vmatpush1.msra.mxu0 0.0
      %3473 = vmatprep.subr.mxu0 0.0
      %3474 = vmatpush1.msra.mxu0 0.0
      %3475 = vmatprep.subr.mxu0 0.0
      %3476 = vmatpush1.msra.mxu0 0.0
      %3477 = vmatprep.subr.mxu0 0.0
      %3478 = vmatpush1.msra.mxu0 0.0
      %3479 = vmatprep.subr.mxu0 0.0
      %3480 = vmatpush1.msra.mxu0 0.0
      %3481 = vmatprep.subr.mxu0 0.0
      %3482 = vmatpush1.msra.mxu0 0.0
      %3483 = vmatprep.subr.mxu0 0.0
      %3484 = vmatpush1.msra.mxu0 0.0
      %3485 = vmatprep.subr.mxu0 0.0
      %3486 = vmatpush1.msra.mxu0 0.0
      %3487 = vmatprep.subr.mxu0 0.0
      %3488 = vmatpush1.msra.mxu0 0.0
      %3489 = vmatprep.subr.mxu0 0.0
      %3490 = vmatpush1.msra.mxu0 0.0
      %3491 = vmatprep.subr.mxu0 0.0
      %3492 = vmatpush1.msra.mxu0 %v3458
      %3493 = vmatprep.subr.mxu0 0.0
      %3494 = vmatpush1.msra.mxu0 %v3457
      %3495 = vmatprep.subr.mxu0 0.0
      %3496 = vmatpush1.msra.mxu0 %v3456
      %3497 = vmatprep.subr.mxu0 0.0
      %3498 = vmatpush2.msra.mxu0 0.0
      %3499 = vmatprep.subr.mxu0 0.0
      %3500 = vmatpush2.msra.mxu0 0.0
      %3501 = vmatprep.subr.mxu0 0.0
      %3502 = vmatpush2.msra.mxu0 0.0
      %3503 = vmatprep.subr.mxu0 0.0
      %3504 = vmatpush2.msra.mxu0 0.0
      %3505 = vmatprep.subr.mxu0 0.0
      %3506 = vmatpush2.msra.mxu0 0.0
      %3507 = vmatprep.subr.mxu0 0.0
      %3508 = vmatpush2.msra.mxu0 0.0
      %3509 = vmatprep.subr.mxu0 0.0
      %3510 = vmatpush2.msra.mxu0 0.0
      %3511 = vmatprep.subr.mxu0 0.0
      %3512 = vmatpush2.msra.mxu0 0.0
      %3513 = vmatprep.subr.mxu0 0.0
      %3514 = vmatpush2.msra.mxu0 0.0
      %3515 = vmatprep.subr.mxu0 0.0
      %3516 = vmatpush2.msra.mxu0 0.0
      %3517 = vmatprep.subr.mxu0 0.0
      %3518 = vmatpush2.msra.mxu0 0.0
      %3519 = vmatprep.subr.mxu0 0.0
      %3520 = vmatpush2.msra.mxu0 0.0
      %3521 = vmatprep.subr.mxu0 0.0
      %3522 = vmatpush2.msra.mxu0 0.0
      %3523 = vmatprep.subr.mxu0 0.0
      %3524 = vmatpush2.msra.mxu0 0.0
      %3525 = vmatprep.subr.mxu0 0.0
      %3526 = vmatpush2.msra.mxu0 0.0
      %3527 = vmatprep.subr.mxu0 0.0
      %3528 = vmatpush2.msra.mxu0 0.0
      %3529 = vmatprep.mubr.f32.mxu0 0.0
      %3530 = vmatmul.mubr.f32.gmra.mxu0 %v2881
      %v3531 = vpop.f32.mrf.mxu0
      %v3532 = vadd.f32 0.0, %v3531
      %v3533 = vpop.f32.mrf.mxu0
      %3534 = vmatprep.mubr.f32.mxu0 0.0
      %3535 = vmatmul.mubr.f32.gmra.mxu0 %v2884
      %v3536 = vpop.f32.mrf.mxu0
      %v3537 = vadd.f32 0.0, %v3536
      %v3538 = vpop.f32.mrf.mxu0
      %3539 = vmatprep.mubr.f32.mxu0 0.0
      %3540 = vmatmul.mubr.f32.gmra.mxu0 %v2887
      %v3541 = vpop.f32.mrf.mxu0
      %v3542 = vadd.f32 0.0, %v3541
      %v3543 = vpop.f32.mrf.mxu0
      %3544 = vmatprep.mubr.f32.mxu0 0.0
      %3545 = vmatmul.mubr.f32.gmra.mxu0 %v2890
      %v3546 = vpop.f32.mrf.mxu0
      %v3547 = vadd.f32 0.0, %v3546
      %v3548 = vpop.f32.mrf.mxu0
      %3549 = vmatprep.mubr.f32.mxu0 0.0
      %3550 = vmatmul.mubr.f32.gmra.mxu0 %v2893
      %v3551 = vpop.f32.mrf.mxu0
      %v3552 = vadd.f32 0.0, %v3551
      %v3553 = vpop.f32.mrf.mxu0
      %3554 = vmatprep.mubr.f32.mxu0 0.0
      %3555 = vmatmul.mubr.f32.gmra.mxu0 %v2896
      %v3556 = vpop.f32.mrf.mxu0
      %v3557 = vadd.f32 0.0, %v3556
      %v3558 = vpop.f32.mrf.mxu0
      %3559 = vmatprep.mubr.f32.mxu0 0.0
      %3560 = vmatmul.mubr.f32.gmra.mxu0 %v2899
      %v3561 = vpop.f32.mrf.mxu0
      %v3562 = vadd.f32 0.0, %v3561
      %v3563 = vpop.f32.mrf.mxu0
      %3564 = vmatprep.mubr.f32.mxu0 0.0
      %3565 = vmatmul.mubr.f32.gmra.mxu0 %v2902
      %v3566 = vpop.f32.mrf.mxu0
      %v3567 = vadd.f32 0.0, %v3566
      %v3568 = vpop.f32.mrf.mxu0
      %3569 = vmatprep.mubr.f32.mxu0 0.0
      %3570 = vmatmul.mubr.f32.gmra.mxu0 %v2905
      %v3571 = vpop.f32.mrf.mxu0
      %v3572 = vadd.f32 0.0, %v3571
      %v3573 = vpop.f32.mrf.mxu0
      %3574 = vmatprep.mubr.f32.mxu0 0.0
      %3575 = vmatmul.mubr.f32.gmra.mxu0 %v2908
      %v3576 = vpop.f32.mrf.mxu0
      %v3577 = vadd.f32 0.0, %v3576
      %v3578 = vpop.f32.mrf.mxu0
      %3579 = vmatprep.mubr.f32.mxu0 0.0
      %3580 = vmatmul.mubr.f32.gmra.mxu0 %v2911
      %v3581 = vpop.f32.mrf.mxu0
      %v3582 = vadd.f32 0.0, %v3581
      %v3583 = vpop.f32.mrf.mxu0
      %3584 = vmatprep.mubr.f32.mxu0 0.0
      %3585 = vmatmul.mubr.f32.gmra.mxu0 %v2914
      %v3586 = vpop.f32.mrf.mxu0
      %v3587 = vadd.f32 0.0, %v3586
      %v3588 = vpop.f32.mrf.mxu0
      %3589 = vmatprep.mubr.f32.mxu0 0.0
      %3590 = vmatmul.mubr.f32.gmra.mxu0 %v2917
      %v3591 = vpop.f32.mrf.mxu0
      %v3592 = vadd.f32 0.0, %v3591
      %v3593 = vpop.f32.mrf.mxu0
      %3594 = vmatprep.mubr.f32.mxu0 0.0
      %3595 = vmatmul.mubr.f32.gmra.mxu0 %v2920
      %v3596 = vpop.f32.mrf.mxu0
      %v3597 = vadd.f32 0.0, %v3596
      %v3598 = vpop.f32.mrf.mxu0
      %3599 = vmatprep.mubr.f32.mxu0 0.0
      %3600 = vmatmul.mubr.f32.gmra.mxu0 %v2923
      %v3601 = vpop.f32.mrf.mxu0
      %v3602 = vadd.f32 0.0, %v3601
      %v3603 = vpop.f32.mrf.mxu0
      %3604 = vmatprep.mubr.f32.mxu0 0.0
      %3605 = vmatmul.mubr.f32.gmra.mxu0 %v2926
      %v3606 = vpop.f32.mrf.mxu0
      %v3607 = vadd.f32 0.0, %v3606
      %v3608 = vpop.f32.mrf.mxu0
      %3609 = vmatprep.mubr.f32.mxu0 0.0
      %3610 = vmatmul.mubr.f32.gmra.mxu0 %v2929
      %v3611 = vpop.f32.mrf.mxu0
      %v3612 = vadd.f32 0.0, %v3611
      %v3613 = vpop.f32.mrf.mxu0
      %3614 = vmatprep.mubr.f32.mxu0 0.0
      %3615 = vmatmul.mubr.f32.gmra.mxu0 %v2932
      %v3616 = vpop.f32.mrf.mxu0
      %v3617 = vadd.f32 0.0, %v3616
      %v3618 = vpop.f32.mrf.mxu0
      %3619 = vmatprep.mubr.f32.mxu0 0.0
      %3620 = vmatmul.mubr.f32.gmra.mxu0 %v2935
      %v3621 = vpop.f32.mrf.mxu0
      %v3622 = vadd.f32 0.0, %v3621
      %v3623 = vpop.f32.mrf.mxu0
      %3624 = vmatprep.mubr.f32.mxu0 0.0
      %3625 = vmatmul.mubr.f32.gmra.mxu0 %v2938
      %v3626 = vpop.f32.mrf.mxu0
      %v3627 = vadd.f32 0.0, %v3626
      %v3628 = vpop.f32.mrf.mxu0
      %3629 = vmatprep.mubr.f32.mxu0 0.0
      %3630 = vmatmul.mubr.f32.gmra.mxu0 %v2941
      %v3631 = vpop.f32.mrf.mxu0
      %v3632 = vadd.f32 0.0, %v3631
      %v3633 = vpop.f32.mrf.mxu0
      %3634 = vmatprep.mubr.f32.mxu0 0.0
      %3635 = vmatmul.mubr.f32.gmra.mxu0 %v2944
      %v3636 = vpop.f32.mrf.mxu0
      %v3637 = vadd.f32 0.0, %v3636
      %v3638 = vpop.f32.mrf.mxu0
      %3639 = vmatprep.mubr.f32.mxu0 0.0
      %3640 = vmatmul.mubr.f32.gmra.mxu0 %v2947
      %v3641 = vpop.f32.mrf.mxu0
      %v3642 = vadd.f32 0.0, %v3641
      %v3643 = vpop.f32.mrf.mxu0
      %3644 = vmatprep.mubr.f32.mxu0 0.0
      %3645 = vmatmul.mubr.f32.gmra.mxu0 %v2950
      %v3646 = vpop.f32.mrf.mxu0
      %v3647 = vadd.f32 0.0, %v3646
      %v3648 = vpop.f32.mrf.mxu0
      %3649 = vmatprep.mubr.f32.mxu0 0.0
      %3650 = vmatmul.mubr.f32.gmra.mxu0 %v2953
      %v3651 = vpop.f32.mrf.mxu0
      %v3652 = vadd.f32 0.0, %v3651
      %v3653 = vpop.f32.mrf.mxu0
      %3654 = vmatprep.mubr.f32.mxu0 0.0
      %3655 = vmatmul.mubr.f32.gmra.mxu0 %v2956
      %v3656 = vpop.f32.mrf.mxu0
      %v3657 = vadd.f32 0.0, %v3656
      %v3658 = vpop.f32.mrf.mxu0
      %3659 = vmatprep.mubr.f32.mxu0 0.0
      %3660 = vmatmul.mubr.f32.gmra.mxu0 %v2959
      %v3661 = vpop.f32.mrf.mxu0
      %v3662 = vadd.f32 0.0, %v3661
      %v3663 = vpop.f32.mrf.mxu0
      %3664 = vmatprep.mubr.f32.mxu0 0.0
      %3665 = vmatmul.mubr.f32.gmra.mxu0 %v2962
      %v3666 = vpop.f32.mrf.mxu0
      %v3667 = vadd.f32 0.0, %v3666
      %v3668 = vpop.f32.mrf.mxu0
      %3669 = vmatprep.mubr.f32.mxu0 0.0
      %3670 = vmatmul.mubr.f32.gmra.mxu0 %v2965
      %v3671 = vpop.f32.mrf.mxu0
      %v3672 = vadd.f32 0.0, %v3671
      %v3673 = vpop.f32.mrf.mxu0
      %3674 = vmatprep.mubr.f32.mxu0 0.0
      %3675 = vmatmul.mubr.f32.gmra.mxu0 %v2968
      %v3676 = vpop.f32.mrf.mxu0
      %v3677 = vadd.f32 0.0, %v3676
      %v3678 = vpop.f32.mrf.mxu0
      %3679 = vmatprep.mubr.f32.mxu0 0.0
      %3680 = vmatmul.mubr.f32.gmra.mxu0 %v3460
      %v3681 = vpop.f32.mrf.mxu0
      %v3682 = vadd.f32 0.0, %v3681
      %v3683 = vpop.f32.mrf.mxu0
      %3684 = vmatprep.mubr.f32.mxu0 0.0
      %3685 = vmatmul.mubr.f32.gmra.mxu0 %v3463
      %v3686 = vpop.f32.mrf.mxu0
      %v3687 = vadd.f32 0.0, %v3686
      %v3688 = vpop.f32.mrf.mxu0
      %3689 = vdwg.mxu0
      %v3690 = vadd.f32 %v3268, %v3532
      %v3691 = vadd.f32 %v3273, %v3537
      %v3692 = vadd.f32 %v3278, %v3542
      %v3693 = vadd.f32 %v3283, %v3547
      %v3694 = vadd.f32 %v3288, %v3552
      %v3695 = vadd.f32 %v3293, %v3557
      %v3696 = vadd.f32 %v3298, %v3562
      %v3697 = vadd.f32 %v3303, %v3567
      %v3698 = vadd.f32 %v3308, %v3572
      %v3699 = vadd.f32 %v3313, %v3577
      %v3700 = vadd.f32 %v3318, %v3582
      %v3701 = vadd.f32 %v3323, %v3587
      %v3702 = vadd.f32 %v3328, %v3592
      %v3703 = vadd.f32 %v3333, %v3597
      %v3704 = vadd.f32 %v3338, %v3602
      %v3705 = vadd.f32 %v3343, %v3607
      %v3706 = vadd.f32 %v3348, %v3612
      %v3707 = vadd.f32 %v3353, %v3617
      %v3708 = vadd.f32 %v3358, %v3622
      %v3709 = vadd.f32 %v3363, %v3627
      %v3710 = vadd.f32 %v3368, %v3632
      %v3711 = vadd.f32 %v3373, %v3637
      %v3712 = vadd.f32 %v3378, %v3642
      %v3713 = vadd.f32 %v3383, %v3647
      %v3714 = vadd.f32 %v3388, %v3652
      %v3715 = vadd.f32 %v3393, %v3657
      %v3716 = vadd.f32 %v3398, %v3662
      %v3717 = vadd.f32 %v3403, %v3667
      %v3718 = vadd.f32 %v3408, %v3672
      %v3719 = vadd.f32 %v3413, %v3677
      %v3720 = vadd.f32 %v3418, %v3682
      %v3721 = vadd.f32 %v3423, %v3687
      %v3722 = vld [vmem:[%s6] sm:$0x1]
      %v3724 = vlaneseq
      %v3725 = vshrl.u32 %v3724, 7
      %v3726 = vsub.s32 0, %v3725
      %v3727 = vrot.slane %v3722, %v3726
      %v3729 = vadd.f32 %v3690, %v3727
      %v3730 = vadd.f32 %v3691, %v3727
      %v3731 = vadd.f32 %v3692, %v3727
      %v3732 = vadd.f32 %v3693, %v3727
      %v3733 = vadd.f32 %v3694, %v3727
      %v3734 = vadd.f32 %v3695, %v3727
      %v3735 = vadd.f32 %v3696, %v3727
      %v3736 = vadd.f32 %v3697, %v3727
      %v3737 = vadd.f32 %v3698, %v3727
      %v3738 = vadd.f32 %v3699, %v3727
      %v3739 = vadd.f32 %v3700, %v3727
      %v3740 = vadd.f32 %v3701, %v3727
      %v3741 = vadd.f32 %v3702, %v3727
      %v3742 = vadd.f32 %v3703, %v3727
      %v3743 = vadd.f32 %v3704, %v3727
      %v3744 = vadd.f32 %v3705, %v3727
      %v3745 = vadd.f32 %v3706, %v3727
      %v3746 = vadd.f32 %v3707, %v3727
      %v3747 = vadd.f32 %v3708, %v3727
      %v3748 = vadd.f32 %v3709, %v3727
      %v3749 = vadd.f32 %v3710, %v3727
      %v3750 = vadd.f32 %v3711, %v3727
      %v3751 = vadd.f32 %v3712, %v3727
      %v3752 = vadd.f32 %v3713, %v3727
      %v3753 = vadd.f32 %v3714, %v3727
      %v3754 = vadd.f32 %v3715, %v3727
      %v3755 = vadd.f32 %v3716, %v3727
      %v3756 = vadd.f32 %v3717, %v3727
      %v3757 = vadd.f32 %v3718, %v3727
      %v3758 = vadd.f32 %v3719, %v3727
      %v3759 = vadd.f32 %v3720, %v3727
      %v3760 = vadd.f32 %v3721, %v3727
      %v3761 = vmax.f32 %v3729, 0.0
      %v3762 = vmax.f32 %v3730, 0.0
      %v3763 = vmax.f32 %v3731, 0.0
      %v3764 = vmax.f32 %v3732, 0.0
      %v3765 = vmax.f32 %v3733, 0.0
      %v3766 = vmax.f32 %v3734, 0.0
      %v3767 = vmax.f32 %v3735, 0.0
      %v3768 = vmax.f32 %v3736, 0.0
      %v3769 = vmax.f32 %v3737, 0.0
      %v3770 = vmax.f32 %v3738, 0.0
      %v3771 = vmax.f32 %v3739, 0.0
      %v3772 = vmax.f32 %v3740, 0.0
      %v3773 = vmax.f32 %v3741, 0.0
      %v3774 = vmax.f32 %v3742, 0.0
      %v3775 = vmax.f32 %v3743, 0.0
      %v3776 = vmax.f32 %v3744, 0.0
      %v3777 = vmax.f32 %v3745, 0.0
      %v3778 = vmax.f32 %v3746, 0.0
      %v3779 = vmax.f32 %v3747, 0.0
      %v3780 = vmax.f32 %v3748, 0.0
      %v3781 = vmax.f32 %v3749, 0.0
      %v3782 = vmax.f32 %v3750, 0.0
      %v3783 = vmax.f32 %v3751, 0.0
      %v3784 = vmax.f32 %v3752, 0.0
      %v3785 = vmax.f32 %v3753, 0.0
      %v3786 = vmax.f32 %v3754, 0.0
      %v3787 = vmax.f32 %v3755, 0.0
      %v3788 = vmax.f32 %v3756, 0.0
      %v3789 = vmax.f32 %v3757, 0.0
      %v3790 = vmax.f32 %v3758, 0.0
      %v3791 = vmax.f32 %v3759, 0.0
      %v3792 = vmax.f32 %v3760, 0.0
      %3793 = vst.msk [vmem:[%s455] sm:$0xff] %vm1190, %v3761
      %3794 = vst.msk [vmem:[%s455 + $0x8] sm:$0xff] %vm1190, %v3762
      %3795 = vst.msk [vmem:[%s455 + $0x10] sm:$0xff] %vm1190, %v3763
      %3796 = vst.msk [vmem:[%s455 + $0x18] sm:$0xff] %vm1190, %v3764
      %3797 = vst.msk [vmem:[%s455 + $0x20] sm:$0xff] %vm1190, %v3765
      %3798 = vst.msk [vmem:[%s455 + $0x28] sm:$0xff] %vm1190, %v3766
      %3799 = vst.msk [vmem:[%s455 + $0x30] sm:$0xff] %vm1190, %v3767
      %3800 = vst.msk [vmem:[%s455 + $0x38] sm:$0xff] %vm1190, %v3768
      %3801 = vst.msk [vmem:[%s455 + $0x40] sm:$0xff] %vm1190, %v3769
      %3802 = vst.msk [vmem:[%s455 + $0x48] sm:$0xff] %vm1190, %v3770
      %3803 = vst.msk [vmem:[%s455 + $0x50] sm:$0xff] %vm1190, %v3771
      %3804 = vst.msk [vmem:[%s455 + $0x58] sm:$0xff] %vm1190, %v3772
      %3805 = vst.msk [vmem:[%s455 + $0x60] sm:$0xff] %vm1190, %v3773
      %3806 = vst.msk [vmem:[%s455 + $0x68] sm:$0xff] %vm1190, %v3774
      %3807 = vst.msk [vmem:[%s455 + $0x70] sm:$0xff] %vm1190, %v3775
      %3808 = vst.msk [vmem:[%s455 + $0x78] sm:$0xff] %vm1190, %v3776
      %3809 = vst.msk [vmem:[%s455 + $0x80] sm:$0xff] %vm1190, %v3777
      %3810 = vst.msk [vmem:[%s455 + $0x88] sm:$0xff] %vm1190, %v3778
      %3811 = vst.msk [vmem:[%s455 + $0x90] sm:$0xff] %vm1190, %v3779
      %3812 = vst.msk [vmem:[%s455 + $0x98] sm:$0xff] %vm1190, %v3780
      %3813 = vst.msk [vmem:[%s455 + $0xa0] sm:$0xff] %vm1190, %v3781
      %3814 = vst.msk [vmem:[%s455 + $0xa8] sm:$0xff] %vm1190, %v3782
      %3815 = vst.msk [vmem:[%s455 + $0xb0] sm:$0xff] %vm1190, %v3783
      %3816 = vst.msk [vmem:[%s455 + $0xb8] sm:$0xff] %vm1190, %v3784
      %3817 = vst.msk [vmem:[%s455 + $0xc0] sm:$0xff] %vm1190, %v3785
      %3818 = vst.msk [vmem:[%s455 + $0xc8] sm:$0xff] %vm1190, %v3786
      %3819 = vst.msk [vmem:[%s455 + $0xd0] sm:$0xff] %vm1190, %v3787
      %3820 = vst.msk [vmem:[%s455 + $0xd8] sm:$0xff] %vm1190, %v3788
      %3821 = vst.msk [vmem:[%s455 + $0xe0] sm:$0xff] %vm1190, %v3789
      %3822 = vst.msk [vmem:[%s455 + $0xe8] sm:$0xff] %vm1190, %v3790
      %3823 = vst.msk [vmem:[%s455 + $0xf0] sm:$0xff] %vm1190, %v3791
      %3824 = vst.msk [vmem:[%s455 + $0xf8] sm:$0xff] %vm1190, %v3792
      %s3825 = smul.u32 16, %s23
      %p3826 = scmp.lt.s32.totalorder %s22, 1
      %s3827 = scalar_select %p3826, %s22, 1
      %p3828 = scmp.lt.s32.totalorder %s3825, 15
      %s3829 = scalar_select %p3828, %s3825, 15
      %s3830 = smul.addr %s3829, 2
      %s3831 = smul.addr %s3827, 32
      %s3832 = sadd.s32 %s3830, %s3831
      %s3833 = smul.addr %s3832, 8
      %s3834 = scalar_lea.vmem %s7, %s3833
      // Predicated region
      $region69: #{tpu_custom_call.1} parent=47 // pred_check
        %p3835 = pneg %p234
      $region70: #{tpu_custom_call.1} parent=47 // pred_check_branch
        %3837 = sbr.rel (%p3835) target = $region72
      $region71: #{tpu_custom_call.1} parent=47 // pred_region
        %s3838 = smul.u32 16, %s23
      $region72: #{tpu_custom_call.1} parent=47 // pred_fallthru
        _
    $region48: #{tpu_custom_call.1} parent=5 // pred_fallthru
      _
    %p3839 = scmp.le.s32.totalorder 2, %s13
    // Predicated region
    $region73: #{tpu_custom_call.1} parent=5 // pred_check
      %p3840 = pneg %p3839
    $region74: #{tpu_custom_call.1} parent=5 // pred_check_branch
      %3842 = sbr.rel (%p3840) target = $region76
    $region75: #{tpu_custom_call.1} parent=5 // pred_region
      %s3843 = ssub.s32 %s13, 2
      // Predicated region
      $region77: #{tpu_custom_call.1} parent=75 // pred_check
        %p3844 = pneg %p240
      $region78: #{tpu_custom_call.1} parent=75 // pred_check_branch
        %3846 = sbr.rel (%p3844) target = $region80
      $region79: #{tpu_custom_call.1} parent=75 // pred_region
        %s3847 = smul.u32 16, %s25
        %p3848 = scmp.lt.s32.totalorder %s24, 1
        %s3849 = scalar_select %p3848, %s24, 1
        %p3850 = scmp.lt.s32.totalorder %s3847, 15
        %s3851 = scalar_select %p3850, %s3847, 15
        %s3852 = smul.addr %s3851, 2
        %s3853 = smul.addr %s3849, 32
        %s3854 = sadd.s32 %s3852, %s3853
        %s3855 = smul.addr %s3854, 8
        %s3856 = scalar_lea.vmem %s7, %s3855
      $region80: #{tpu_custom_call.1} parent=75 // pred_fallthru
        _
    $region76: #{tpu_custom_call.1} parent=5 // pred_fallthru
      _
  $region6: #{tpu_custom_call.1} parent=0 // loop_footer
    %s17 = sadd.s32 1, %s13
  $region7: #{tpu_custom_call.1} parent=0 // loop_footer_branch
    %12 = sbr.rel target = $region3
  $region8: #{tpu_custom_call.1} parent=0 // loop_exit
    _

</llo_original>
